<compile_context>
chip_gen: v7x
topology: tpu7x:2x2x1
jax: 0.10.0
libtpu: 0.0.40
codegen_flags: <defaults>
</compile_context>

<pallas_src>
import functools

import jax
import jax.numpy as jnp
from jax import lax
from jax.experimental import pallas as pl
from jax.experimental.pallas import tpu as pltpu

BN_EPS = 1e-5
LRELU_SLOPE = 0.01          # InPlaceABNSync default activation = leaky_relu(0.01)
NEG_INF = -1e30             # CCNet INF() helper (-inf on the H-diagonal)
TM = 256                    # matmul row tile (v6e sweet spot)
TK_MAX = 512                # matmul reduction tile
TN_MAX = 256                # matmul output-channel tile


def _round_up(x, m):
    return (x + m - 1) // m * m


# -----------------------------------------------------------------------------
# Kernel 1: tiled matmul (bf16 in / f32 acc) + per-channel affine + leaky relu
# -----------------------------------------------------------------------------
def _matmul_affine_kernel(x_ref, w_ref, scale_ref, shift_ref, o_ref, acc_ref, *, leaky):
    @pl.when(pl.program_id(2) == 0)
    def _init():
        acc_ref[...] = jnp.zeros_like(acc_ref)

    acc_ref[...] += jnp.dot(x_ref[...], w_ref[...], preferred_element_type=jnp.float32)

    @pl.when(pl.program_id(2) == pl.num_programs(2) - 1)
    def _finalize():
        y = acc_ref[...] * scale_ref[...] + shift_ref[...]
        if leaky:
            y = jnp.where(y > 0, y, LRELU_SLOPE * y)
        o_ref[...] = y.astype(o_ref.dtype)


def matmul_affine(x, w, scale, shift, *, leaky, keep_cols=False):
    """y = leaky_relu?(x @ w * scale + shift); M/N/K tiled, lane-dense padded N."""
    M, K = x.shape
    N = w.shape[1]
    Mp = _round_up(M, TM)
    Np = _round_up(N, 128)
    TN = min(Np, TN_MAX)
    TK = K if K <= TK_MAX else TK_MAX
    Kp = _round_up(K, TK)

    xp = jnp.pad(x, ((0, Mp - M), (0, Kp - K))).astype(jnp.bfloat16)
    wp = jnp.pad(w, ((0, Kp - K), (0, Np - N))).astype(jnp.bfloat16)
    sp = jnp.pad(scale.reshape(1, -1).astype(jnp.float32), ((0, 0), (0, Np - N)))
    bp = jnp.pad(shift.reshape(1, -1).astype(jnp.float32), ((0, 0), (0, Np - N)))

    out = pl.pallas_call(
        functools.partial(_matmul_affine_kernel, leaky=leaky),
        out_shape=jax.ShapeDtypeStruct((Mp, Np), jnp.float32),
        grid=(Mp // TM, Np // TN, Kp // TK),
        in_specs=[
            pl.BlockSpec((TM, TK), lambda i, j, k: (i, k)),
            pl.BlockSpec((TK, TN), lambda i, j, k: (k, j)),
            pl.BlockSpec((1, TN), lambda i, j, k: (0, j)),
            pl.BlockSpec((1, TN), lambda i, j, k: (0, j)),
        ],
        out_specs=pl.BlockSpec((TM, TN), lambda i, j, k: (i, j)),
        scratch_shapes=[pltpu.VMEM((TM, TN), jnp.float32)],
        compiler_params=pltpu.CompilerParams(
            dimension_semantics=("parallel", "parallel", "arbitrary")),
    )(xp, wp, sp, bp)
    return out[:M] if keep_cols else out[:M, :N]


# -----------------------------------------------------------------------------
# Kernel 2: fused 3x3 conv + BN affine + leaky relu (no HBM im2col)
# The padded image is flattened to rows of length (W+2); each of the 9 taps is
# a contiguous row-shifted slice matmul accumulated in f32.
# -----------------------------------------------------------------------------
def _conv3x3_kernel(x_ref, w_ref, scale_ref, shift_ref, o_ref, *, H, W, leaky):
    L = H * (W + 2)
    tco = o_ref.shape[-1]
    acc = jnp.zeros((L, tco), jnp.float32)
    for ky in range(3):
        for kx in range(3):
            start = ky * (W + 2) + kx
            patch = x_ref[0, start:start + L, :]                     # (L, Cin) bf16
            acc = acc + jnp.dot(patch, w_ref[ky * 3 + kx],
                                preferred_element_type=jnp.float32)
    y = acc * scale_ref[...] + shift_ref[...]
    if leaky:
        y = jnp.where(y > 0, y, LRELU_SLOPE * y)
    o_ref[0] = y


def conv3x3_bn_act(x, w_hwio, scale, shift, *, leaky=True):
    # TODO(synk): for very large H*W*Cin, row-tile the image with a 1-row halo
    # instead of whole-image blocks to fit v7x's 64 MiB VMEM.
    N, H, W, Cin = x.shape
    Cout = w_hwio.shape[-1]
    Coutp = _round_up(Cout, 128)
    TCO = min(Coutp, TN_MAX)
    L = H * (W + 2)

    xp = jnp.pad(x, ((0, 0), (1, 1), (1, 1), (0, 0))).astype(jnp.bfloat16)
    # flatten padded image; +2 tail so the (ky=2, kx=2) shifted slice stays in-bounds
    xf = jnp.pad(xp.reshape(N, (H + 2) * (W + 2), Cin), ((0, 0), (0, 2), (0, 0)))
    wp = jnp.pad(w_hwio, ((0, 0), (0, 0), (0, 0), (0, Coutp - Cout)))
    wf = wp.reshape(9, Cin, Coutp).astype(jnp.bfloat16)
    sp = jnp.pad(scale.astype(jnp.float32), (0, Coutp - Cout)).reshape(1, Coutp)
    bp = jnp.pad(shift.astype(jnp.float32), (0, Coutp - Cout)).reshape(1, Coutp)

    out = pl.pallas_call(
        functools.partial(_conv3x3_kernel, H=H, W=W, leaky=leaky),
        out_shape=jax.ShapeDtypeStruct((N, L, Coutp), jnp.float32),
        grid=(N, Coutp // TCO),
        in_specs=[
            pl.BlockSpec((1, (H + 2) * (W + 2) + 2, Cin), lambda n, c: (n, 0, 0)),
            pl.BlockSpec((9, Cin, TCO), lambda n, c: (0, 0, c)),
            pl.BlockSpec((1, TCO), lambda n, c: (0, c)),
            pl.BlockSpec((1, TCO), lambda n, c: (0, c)),
        ],
        out_specs=pl.BlockSpec((1, L, TCO), lambda n, c: (n, 0, c)),
        compiler_params=pltpu.CompilerParams(
            dimension_semantics=("parallel", "parallel")),
    )(xf, wf, sp, bp)
    # drop the 2 junk padded-width columns per row and the padded channels
    return out.reshape(N, H, W + 2, Coutp)[:, :, :W, :Cout]


# -----------------------------------------------------------------------------
# Kernel 3: criss-cross attention core.
# Grid = (batch, column-tile). k/v full blocks stay resident across column
# tiles (index_map constant), so no HBM-side transposed copies are needed.
# All contractions are MXU dot_generals; joint softmax over H+W is split
# (no lane concat) and normalised with an approx (EUP) reciprocal.
# -----------------------------------------------------------------------------
def _cca_kernel(q_ref, kc_ref, kr_ref, vc_ref, vr_ref, x_ref, gamma_ref, o_ref):
    H = q_ref.shape[1]
    WT = q_ref.shape[2]
    gamma = gamma_ref[0, 0]
    kr = kr_ref[0].astype(jnp.bfloat16)          # (H, W, Cq) full rows of k
    vr = vr_ref[0].astype(jnp.bfloat16)          # (H, W, Cv) full rows of v
    diag = (lax.broadcasted_iota(jnp.int32, (H, H), 0)
            == lax.broadcasted_iota(jnp.int32, (H, H), 1))

    for i in range(WT):                           # static unroll over tile columns
        q2 = q_ref[0, :, i, :].astype(jnp.bfloat16)          # (H, Cq)
        kc = kc_ref[0, :, i, :].astype(jnp.bfloat16)         # (H, Cq) same column
        vc = vc_ref[0, :, i, :].astype(jnp.bfloat16)         # (H, Cv) same column
        xc = x_ref[0, :, i, :]                                # (H, Cv) f32

        # energy_H[h, j] = <q[h, w], k[j, w]>  (same column, -inf on j == h)
        eh = lax.dot_general(q2, kc, (((1,), (1,)), ((), ())),
                             preferred_element_type=jnp.float32)          # (H, H)
        eh = jnp.where(diag, NEG_INF, eh)
        # energy_W[h, j] = <q[h, w], k[h, j]>  (same row)
        q3 = q_ref[0, :, i:i + 1, :].astype(jnp.bfloat16)                 # (H, 1, Cq)
        ew = lax.dot_general(q3, kr, (((2,), (2,)), ((0,), (0,))),
                             preferred_element_type=jnp.float32)[:, 0, :]  # (H, W)

        # joint softmax over the H + W criss-cross positions (split form)
        m = jnp.maximum(jnp.max(eh, axis=-1, keepdims=True),
                        jnp.max(ew, axis=-1, keepdims=True))
        ph = jnp.exp(eh - m)
        pw = jnp.exp(ew - m)
        inv = pl.reciprocal(jnp.sum(ph, axis=-1, keepdims=True)
                            + jnp.sum(pw, axis=-1, keepdims=True), approx=True)
        ah = (ph * inv).astype(jnp.bfloat16)                               # (H, H)
        aw = (pw * inv).astype(jnp.bfloat16)                               # (H, W)

        # out_H[h, c] = sum_j ah[h, j] v[j, w, c];  out_W[h, c] = sum_j aw[h, j] v[h, j, c]
        oh = jnp.dot(ah, vc, preferred_element_type=jnp.float32)           # (H, Cv)
        ow = lax.dot_general(aw[:, None, :], vr, (((2,), (1,)), ((0,), (0,))),
                             preferred_element_type=jnp.float32)[:, 0, :]  # (H, Cv)

        o_ref[0, :, i, :] = gamma * (oh + ow) + xc


def cca_attention(q, k, v, x, gamma):
    # TODO(synk): for very large H the resident full k/v blocks should also be
    # H-tiled and streamed (manual DMA) to respect v7x's 64 MiB VMEM.
    B, H, W, Cq = q.shape
    Cv = v.shape[-1]
    WT = 8 if (W % 8 == 0 and W > 8) else W

    def col(c):
        return pl.BlockSpec((1, H, WT, c), lambda b, wi: (b, 0, wi, 0))

    def full(c):
        return pl.BlockSpec((1, H, W, c), lambda b, wi: (b, 0, 0, 0))

    return pl.pallas_call(
        _cca_kernel,
        out_shape=jax.ShapeDtypeStruct((B, H, W, Cv), jnp.float32),
        grid=(B, W // WT),
        in_specs=[col(Cq), col(Cq), full(Cq),
                  col(Cv), full(Cv), col(Cv),
                  pl.BlockSpec((1, 1), lambda b, wi: (0, 0))],
        out_specs=col(Cv),
        compiler_params=pltpu.CompilerParams(
            dimension_semantics=("parallel", "parallel")),
    )(q, k, k, v, v, x, gamma)


# -----------------------------------------------------------------------------
# Glue: BN folding, conv wrappers
# -----------------------------------------------------------------------------
def bn_affine(bn):
    # InPlaceABN uses |weight|; folded inference-mode batch-norm affine.
    scale = jnp.abs(bn["weight"]) / jnp.sqrt(bn["var"] + BN_EPS)
    shift = bn["bias"] - bn["mean"] * scale
    return scale.astype(jnp.float32), shift.astype(jnp.float32)


def conv3x3_bn_lrelu(x, w_hwio, bn):
    scale, shift = bn_affine(bn)
    return conv3x3_bn_act(x, w_hwio, scale, shift, leaky=True)


def conv1x1_bias(x, w, b, *, keep_padded=False):
    # keep_padded=True returns the lane-dense (128-padded, zero-filled) channels;
    # used for q/k so the attention contraction dim stays lane-dense.
    N, H, W, C = x.shape
    cout = w.shape[-1]
    out = matmul_affine(x.reshape(N * H * W, C), w,
                        jnp.ones((cout,), jnp.float32), b,
                        leaky=False, keep_cols=keep_padded)
    return out.reshape(N, H, W, -1)


# -----------------------------------------------------------------------------
# RCCAModule forward
# -----------------------------------------------------------------------------
def rcca_forward(params, x_nchw, recurrence=1):
    x = jnp.transpose(x_nchw, (0, 2, 3, 1)).astype(jnp.float32)          # NCHW -> NHWC
    out = conv3x3_bn_lrelu(x, params["conva_w"], params["conva_bn"])     # conva
    for _ in range(recurrence):                                          # criss-cross attention
        q = conv1x1_bias(out, params["q_w"], params["q_b"], keep_padded=True)
        k = conv1x1_bias(out, params["k_w"], params["k_b"], keep_padded=True)
        v = conv1x1_bias(out, params["v_w"], params["v_b"])
        out = cca_attention(q, k, v, out, params["gamma"])
    out = conv3x3_bn_lrelu(out, params["convb_w"], params["convb_bn"])   # convb
    cat = jnp.concatenate([x, out], axis=-1)                             # cat([x, output], dim=1)
    out = conv3x3_bn_lrelu(cat, params["bneck_w"], params["bneck_bn"])   # bottleneck conv+ABN
    # nn.Dropout2d(0.1) is identity in inference mode (deterministic forward).
    out = conv1x1_bias(out, params["cls_w"], params["cls_b"])            # Conv2d(512, num_classes, 1)
    return jnp.transpose(out, (0, 3, 1, 2))                              # NHWC -> NCHW


# -----------------------------------------------------------------------------
# Deterministic parameter init (shapes from the module's __init__)
# -----------------------------------------------------------------------------
def init_params(key, in_channels, out_channels, num_classes):
    inter = in_channels // 4
    cq = inter // 8
    ks = jax.random.split(key, 16)

    def w(k, shape):
        return 0.05 * jax.random.normal(k, shape, jnp.float32)

    def bn(k, c):
        k1, k2, k3, k4 = jax.random.split(k, 4)
        return dict(weight=jax.random.uniform(k1, (c,), jnp.float32, 0.5, 1.5),
                    bias=0.1 * jax.random.normal(k2, (c,), jnp.float32),
                    mean=0.1 * jax.random.normal(k3, (c,), jnp.float32),
                    var=jax.random.uniform(k4, (c,), jnp.float32, 0.5, 1.5))

    p = {}
    p["conva_w"] = w(ks[0], (3, 3, in_channels, inter))
    p["conva_bn"] = bn(ks[1], inter)
    p["q_w"] = w(ks[2], (inter, cq)); p["q_b"] = 0.05 * jax.random.normal(ks[3], (cq,), jnp.float32)
    p["k_w"] = w(ks[4], (inter, cq)); p["k_b"] = 0.05 * jax.random.normal(ks[5], (cq,), jnp.float32)
    p["v_w"] = w(ks[6], (inter, inter)); p["v_b"] = 0.05 * jax.random.normal(ks[7], (inter,), jnp.float32)
    # nn.Parameter(torch.zeros(1)) initializes gamma=0; use nonzero to exercise the attention path.
    p["gamma"] = jnp.full((1, 1), 0.5, jnp.float32)
    p["convb_w"] = w(ks[8], (3, 3, inter, inter))
    p["convb_bn"] = bn(ks[9], inter)
    p["bneck_w"] = w(ks[10], (3, 3, in_channels + inter, out_channels))
    p["bneck_bn"] = bn(ks[11], out_channels)
    # PyTorch hardcodes Conv2d(512, num_classes, 1) -> module requires out_channels == 512.
    p["cls_w"] = w(ks[12], (out_channels, num_classes))
    p["cls_b"] = 0.05 * jax.random.normal(ks[13], (num_classes,), jnp.float32)
    return p


# -----------------------------------------------------------------------------
# Pure-JAX reference (same bf16-in / f32-accumulate precision policy as the
# kernels, so the comparison isolates kernel structure / indexing).
# -----------------------------------------------------------------------------
def _conv3x3_ref(x, w_hwio, bn):
    scale, shift = bn_affine(bn)
    y = lax.conv_general_dilated(x.astype(jnp.bfloat16), w_hwio.astype(jnp.bfloat16),
                                 (1, 1), "SAME",
                                 dimension_numbers=("NHWC", "HWIO", "NHWC"),
                                 preferred_element_type=jnp.float32)
    y = y * scale.reshape(1, 1, 1, -1) + shift.reshape(1, 1, 1, -1)
    return jnp.where(y > 0, y, LRELU_SLOPE * y)


def _conv1x1_ref(x, w, b):
    y = jnp.einsum("nhwc,cd->nhwd", x.astype(jnp.bfloat16), w.astype(jnp.bfloat16),
                   preferred_element_type=jnp.float32)
    return y + b


def _cca_ref(q, k, v, feat, gamma):
    qb, kb, vb = q.astype(jnp.bfloat16), k.astype(jnp.bfloat16), v.astype(jnp.bfloat16)
    H = feat.shape[1]
    eh = jnp.einsum("nhwc,njwc->nhwj", qb, kb, preferred_element_type=jnp.float32)
    diag = jnp.eye(H, dtype=bool)[None, :, None, :]
    eh = jnp.where(diag, NEG_INF, eh)
    ew = jnp.einsum("nhwc,nhjc->nhwj", qb, kb, preferred_element_type=jnp.float32)
    att = jax.nn.softmax(jnp.concatenate([eh, ew], axis=-1), axis=-1)
    ah = att[..., :H].astype(jnp.bfloat16)
    aw = att[..., H:].astype(jnp.bfloat16)
    oh = jnp.einsum("nhwj,njwc->nhwc", ah, vb, preferred_element_type=jnp.float32)
    ow = jnp.einsum("nhwj,nhjc->nhwc", aw, vb, preferred_element_type=jnp.float32)
    return gamma * (oh + ow) + feat


def rcca_forward_ref(params, x_nchw, recurrence=1):
    x = jnp.transpose(x_nchw, (0, 2, 3, 1)).astype(jnp.float32)
    out = _conv3x3_ref(x, params["conva_w"], params["conva_bn"])
    for _ in range(recurrence):
        q = _conv1x1_ref(out, params["q_w"], params["q_b"])
        k = _conv1x1_ref(out, params["k_w"], params["k_b"])
        v = _conv1x1_ref(out, params["v_w"], params["v_b"])
        out = _cca_ref(q, k, v, out, params["gamma"][0, 0])
    out = _conv3x3_ref(out, params["convb_w"], params["convb_bn"])
    cat = jnp.concatenate([x, out], axis=-1)
    out = _conv3x3_ref(cat, params["bneck_w"], params["bneck_bn"])
    out = _conv1x1_ref(out, params["cls_w"], params["cls_b"])
    return jnp.transpose(out, (0, 3, 1, 2))


if __name__ == "__main__":
    in_channels, out_channels, num_classes = 32, 512, 5
    N, H, W = 2, 16, 16

    key = jax.random.PRNGKey(0)
    kx, kp = jax.random.split(key)
    x = jax.random.normal(kx, (N, in_channels, H, W), jnp.float32)
    params = init_params(kp, in_channels, out_channels, num_classes)

    out = jax.block_until_ready(rcca_forward(params, x, recurrence=1))
    assert out.shape == (N, num_classes, H, W), out.shape
    assert bool(jnp.all(jnp.isfinite(out)))

    ref = jax.block_until_ready(rcca_forward_ref(params, x, recurrence=1))
    err = float(jnp.max(jnp.abs(out - ref)))
    assert err < 1e-2, f"max abs diff vs reference: {err}"

    print("KERNEL_OK")
</pallas_src>

<mosaic_0001>
module attributes {stable_mosaic.version = 11 : i64} {
  func.func @_conv3x3_kernel(%arg0: i32, %arg1: i32, %arg2: memref<1x326x32xbf16, #tpu.memory_space<vmem>>, %arg3: memref<9x32x128xbf16, #tpu.memory_space<vmem>>, %arg4: memref<1x128xf32, #tpu.memory_space<vmem>>, %arg5: memref<1x128xf32, #tpu.memory_space<vmem>>, %arg6: memref<1x288x128xf32, #tpu.memory_space<vmem>>) attributes {dimension_semantics = [#tpu.dimension_semantics<parallel>, #tpu.dimension_semantics<parallel>], iteration_bounds = array<i64: 2, 1>, scalar_prefetch = 0 : i64, scratch_operands = 0 : i64, tpu.core_type = #tpu.core_type<tc>, window_params = [{transform_indices = @transform_0, window_bounds = array<i64: 1, 326, 32>}, {transform_indices = @transform_1, window_bounds = array<i64: 9, 32, 128>}, {transform_indices = @transform_2, window_bounds = array<i64: 1, 128>}, {transform_indices = @transform_3, window_bounds = array<i64: 1, 128>}, {transform_indices = @transform_4, window_bounds = array<i64: 1, 288, 128>}]} {
    %cst = arith.constant 0.000000e+00 : f32
    %0 = vector.broadcast %cst : f32 to vector<288x128xf32>
    %c0 = arith.constant 0 : index
    %c0_0 = arith.constant 0 : index
    %c0_1 = arith.constant 0 : index
    %1 = vector.load %arg2[%c0, %c0_0, %c0_1] : memref<1x326x32xbf16, #tpu.memory_space<vmem>>, vector<1x288x32xbf16>
    %2 = vector.shape_cast %1 : vector<1x288x32xbf16> to vector<288x32xbf16>
    %c0_2 = arith.constant 0 : index
    %c0_3 = arith.constant 0 : index
    %c0_4 = arith.constant 0 : index
    %3 = vector.load %arg3[%c0_2, %c0_3, %c0_4] : memref<9x32x128xbf16, #tpu.memory_space<vmem>>, vector<1x32x128xbf16>
    %4 = vector.shape_cast %3 : vector<1x32x128xbf16> to vector<32x128xbf16>
    %cst_5 = arith.constant dense<0.000000e+00> : vector<288x128xf32>
    %5 = tpu.matmul %2, %4, %cst_5 {dimension_numbers = #tpu.dot_dimension_numbers<[1], [0], [0], [1], [0, 0, 1, 1], [], []>} : vector<288x32xbf16>, vector<32x128xbf16>, vector<288x128xf32> -> vector<288x128xf32>
    %6 = arith.addf %0, %5 : vector<288x128xf32>
    %c0_6 = arith.constant 0 : index
    %c1 = arith.constant 1 : index
    %c0_7 = arith.constant 0 : index
    %7 = vector.load %arg2[%c0_6, %c1, %c0_7] : memref<1x326x32xbf16, #tpu.memory_space<vmem>>, vector<1x288x32xbf16>
    %8 = vector.shape_cast %7 : vector<1x288x32xbf16> to vector<288x32xbf16>
    %c1_8 = arith.constant 1 : index
    %c0_9 = arith.constant 0 : index
    %c0_10 = arith.constant 0 : index
    %9 = vector.load %arg3[%c1_8, %c0_9, %c0_10] : memref<9x32x128xbf16, #tpu.memory_space<vmem>>, vector<1x32x128xbf16>
    %10 = vector.shape_cast %9 : vector<1x32x128xbf16> to vector<32x128xbf16>
    %cst_11 = arith.constant dense<0.000000e+00> : vector<288x128xf32>
    %11 = tpu.matmul %8, %10, %cst_11 {dimension_numbers = #tpu.dot_dimension_numbers<[1], [0], [0], [1], [0, 0, 1, 1], [], []>} : vector<288x32xbf16>, vector<32x128xbf16>, vector<288x128xf32> -> vector<288x128xf32>
    %12 = arith.addf %6, %11 : vector<288x128xf32>
    %c0_12 = arith.constant 0 : index
    %c2 = arith.constant 2 : index
    %c0_13 = arith.constant 0 : index
    %13 = vector.load %arg2[%c0_12, %c2, %c0_13] : memref<1x326x32xbf16, #tpu.memory_space<vmem>>, vector<1x288x32xbf16>
    %14 = vector.shape_cast %13 : vector<1x288x32xbf16> to vector<288x32xbf16>
    %c2_14 = arith.constant 2 : index
    %c0_15 = arith.constant 0 : index
    %c0_16 = arith.constant 0 : index
    %15 = vector.load %arg3[%c2_14, %c0_15, %c0_16] : memref<9x32x128xbf16, #tpu.memory_space<vmem>>, vector<1x32x128xbf16>
    %16 = vector.shape_cast %15 : vector<1x32x128xbf16> to vector<32x128xbf16>
    %cst_17 = arith.constant dense<0.000000e+00> : vector<288x128xf32>
    %17 = tpu.matmul %14, %16, %cst_17 {dimension_numbers = #tpu.dot_dimension_numbers<[1], [0], [0], [1], [0, 0, 1, 1], [], []>} : vector<288x32xbf16>, vector<32x128xbf16>, vector<288x128xf32> -> vector<288x128xf32>
    %18 = arith.addf %12, %17 : vector<288x128xf32>
    %c0_18 = arith.constant 0 : index
    %c18 = arith.constant 18 : index
    %c0_19 = arith.constant 0 : index
    %19 = vector.load %arg2[%c0_18, %c18, %c0_19] : memref<1x326x32xbf16, #tpu.memory_space<vmem>>, vector<1x288x32xbf16>
    %20 = vector.shape_cast %19 : vector<1x288x32xbf16> to vector<288x32xbf16>
    %c3 = arith.constant 3 : index
    %c0_20 = arith.constant 0 : index
    %c0_21 = arith.constant 0 : index
    %21 = vector.load %arg3[%c3, %c0_20, %c0_21] : memref<9x32x128xbf16, #tpu.memory_space<vmem>>, vector<1x32x128xbf16>
    %22 = vector.shape_cast %21 : vector<1x32x128xbf16> to vector<32x128xbf16>
    %cst_22 = arith.constant dense<0.000000e+00> : vector<288x128xf32>
    %23 = tpu.matmul %20, %22, %cst_22 {dimension_numbers = #tpu.dot_dimension_numbers<[1], [0], [0], [1], [0, 0, 1, 1], [], []>} : vector<288x32xbf16>, vector<32x128xbf16>, vector<288x128xf32> -> vector<288x128xf32>
    %24 = arith.addf %18, %23 : vector<288x128xf32>
    %c0_23 = arith.constant 0 : index
    %c19 = arith.constant 19 : index
    %c0_24 = arith.constant 0 : index
    %25 = vector.load %arg2[%c0_23, %c19, %c0_24] : memref<1x326x32xbf16, #tpu.memory_space<vmem>>, vector<1x288x32xbf16>
    %26 = vector.shape_cast %25 : vector<1x288x32xbf16> to vector<288x32xbf16>
    %c4 = arith.constant 4 : index
    %c0_25 = arith.constant 0 : index
    %c0_26 = arith.constant 0 : index
    %27 = vector.load %arg3[%c4, %c0_25, %c0_26] : memref<9x32x128xbf16, #tpu.memory_space<vmem>>, vector<1x32x128xbf16>
    %28 = vector.shape_cast %27 : vector<1x32x128xbf16> to vector<32x128xbf16>
    %cst_27 = arith.constant dense<0.000000e+00> : vector<288x128xf32>
    %29 = tpu.matmul %26, %28, %cst_27 {dimension_numbers = #tpu.dot_dimension_numbers<[1], [0], [0], [1], [0, 0, 1, 1], [], []>} : vector<288x32xbf16>, vector<32x128xbf16>, vector<288x128xf32> -> vector<288x128xf32>
    %30 = arith.addf %24, %29 : vector<288x128xf32>
    %c0_28 = arith.constant 0 : index
    %c20 = arith.constant 20 : index
    %c0_29 = arith.constant 0 : index
    %31 = vector.load %arg2[%c0_28, %c20, %c0_29] : memref<1x326x32xbf16, #tpu.memory_space<vmem>>, vector<1x288x32xbf16>
    %32 = vector.shape_cast %31 : vector<1x288x32xbf16> to vector<288x32xbf16>
    %c5 = arith.constant 5 : index
    %c0_30 = arith.constant 0 : index
    %c0_31 = arith.constant 0 : index
    %33 = vector.load %arg3[%c5, %c0_30, %c0_31] : memref<9x32x128xbf16, #tpu.memory_space<vmem>>, vector<1x32x128xbf16>
    %34 = vector.shape_cast %33 : vector<1x32x128xbf16> to vector<32x128xbf16>
    %cst_32 = arith.constant dense<0.000000e+00> : vector<288x128xf32>
    %35 = tpu.matmul %32, %34, %cst_32 {dimension_numbers = #tpu.dot_dimension_numbers<[1], [0], [0], [1], [0, 0, 1, 1], [], []>} : vector<288x32xbf16>, vector<32x128xbf16>, vector<288x128xf32> -> vector<288x128xf32>
    %36 = arith.addf %30, %35 : vector<288x128xf32>
    %c0_33 = arith.constant 0 : index
    %c36 = arith.constant 36 : index
    %c0_34 = arith.constant 0 : index
    %37 = vector.load %arg2[%c0_33, %c36, %c0_34] : memref<1x326x32xbf16, #tpu.memory_space<vmem>>, vector<1x288x32xbf16>
    %38 = vector.shape_cast %37 : vector<1x288x32xbf16> to vector<288x32xbf16>
    %c6 = arith.constant 6 : index
    %c0_35 = arith.constant 0 : index
    %c0_36 = arith.constant 0 : index
    %39 = vector.load %arg3[%c6, %c0_35, %c0_36] : memref<9x32x128xbf16, #tpu.memory_space<vmem>>, vector<1x32x128xbf16>
    %40 = vector.shape_cast %39 : vector<1x32x128xbf16> to vector<32x128xbf16>
    %cst_37 = arith.constant dense<0.000000e+00> : vector<288x128xf32>
    %41 = tpu.matmul %38, %40, %cst_37 {dimension_numbers = #tpu.dot_dimension_numbers<[1], [0], [0], [1], [0, 0, 1, 1], [], []>} : vector<288x32xbf16>, vector<32x128xbf16>, vector<288x128xf32> -> vector<288x128xf32>
    %42 = arith.addf %36, %41 : vector<288x128xf32>
    %c0_38 = arith.constant 0 : index
    %c37 = arith.constant 37 : index
    %c0_39 = arith.constant 0 : index
    %43 = vector.load %arg2[%c0_38, %c37, %c0_39] : memref<1x326x32xbf16, #tpu.memory_space<vmem>>, vector<1x288x32xbf16>
    %44 = vector.shape_cast %43 : vector<1x288x32xbf16> to vector<288x32xbf16>
    %c7 = arith.constant 7 : index
    %c0_40 = arith.constant 0 : index
    %c0_41 = arith.constant 0 : index
    %45 = vector.load %arg3[%c7, %c0_40, %c0_41] : memref<9x32x128xbf16, #tpu.memory_space<vmem>>, vector<1x32x128xbf16>
    %46 = vector.shape_cast %45 : vector<1x32x128xbf16> to vector<32x128xbf16>
    %cst_42 = arith.constant dense<0.000000e+00> : vector<288x128xf32>
    %47 = tpu.matmul %44, %46, %cst_42 {dimension_numbers = #tpu.dot_dimension_numbers<[1], [0], [0], [1], [0, 0, 1, 1], [], []>} : vector<288x32xbf16>, vector<32x128xbf16>, vector<288x128xf32> -> vector<288x128xf32>
    %48 = arith.addf %42, %47 : vector<288x128xf32>
    %c0_43 = arith.constant 0 : index
    %c38 = arith.constant 38 : index
    %c0_44 = arith.constant 0 : index
    %49 = vector.load %arg2[%c0_43, %c38, %c0_44] : memref<1x326x32xbf16, #tpu.memory_space<vmem>>, vector<1x288x32xbf16>
    %50 = vector.shape_cast %49 : vector<1x288x32xbf16> to vector<288x32xbf16>
    %c8 = arith.constant 8 : index
    %c0_45 = arith.constant 0 : index
    %c0_46 = arith.constant 0 : index
    %51 = vector.load %arg3[%c8, %c0_45, %c0_46] : memref<9x32x128xbf16, #tpu.memory_space<vmem>>, vector<1x32x128xbf16>
    %52 = vector.shape_cast %51 : vector<1x32x128xbf16> to vector<32x128xbf16>
    %cst_47 = arith.constant dense<0.000000e+00> : vector<288x128xf32>
    %53 = tpu.matmul %50, %52, %cst_47 {dimension_numbers = #tpu.dot_dimension_numbers<[1], [0], [0], [1], [0, 0, 1, 1], [], []>} : vector<288x32xbf16>, vector<32x128xbf16>, vector<288x128xf32> -> vector<288x128xf32>
    %54 = arith.addf %48, %53 : vector<288x128xf32>
    %c0_48 = arith.constant 0 : index
    %c0_49 = arith.constant 0 : index
    %55 = vector.load %arg4[%c0_48, %c0_49] : memref<1x128xf32, #tpu.memory_space<vmem>>, vector<1x128xf32>
    %56 = vector.broadcast %55 : vector<1x128xf32> to vector<288x128xf32>
    %57 = arith.mulf %54, %56 : vector<288x128xf32>
    %c0_50 = arith.constant 0 : index
    %c0_51 = arith.constant 0 : index
    %58 = vector.load %arg5[%c0_50, %c0_51] : memref<1x128xf32, #tpu.memory_space<vmem>>, vector<1x128xf32>
    %59 = vector.broadcast %58 : vector<1x128xf32> to vector<288x128xf32>
    %60 = arith.addf %57, %59 : vector<288x128xf32>
    %cst_52 = arith.constant 0.000000e+00 : f32
    %61 = vector.broadcast %cst_52 : f32 to vector<288x128xf32>
    %62 = arith.cmpf ogt, %60, %61 : vector<288x128xf32>
    %cst_53 = arith.constant 0.00999999977 : f32
    %63 = vector.broadcast %cst_53 : f32 to vector<288x128xf32>
    %64 = arith.mulf %63, %60 : vector<288x128xf32>
    %65 = arith.select %62, %60, %64 : vector<288x128xi1>, vector<288x128xf32>
    %c0_54 = arith.constant 0 : index
    %c0_55 = arith.constant 0 : index
    %c0_56 = arith.constant 0 : index
    %66 = vector.load %arg6[%c0_54, %c0_55, %c0_56] : memref<1x288x128xf32, #tpu.memory_space<vmem>>, vector<1x288x128xf32>
    %67 = vector.shape_cast %66 : vector<1x288x128xf32> to vector<288x128xf32>
    %68 = vector.shape_cast %65 : vector<288x128xf32> to vector<1x288x128xf32>
    tpu.vector_store %arg6[%c0_54, %c0_55, %c0_56], %68 {strides = array<i32>} : memref<1x288x128xf32, #tpu.memory_space<vmem>>, vector<1x288x128xf32>,
    return
  }
  func.func @transform_0(%arg0: i32, %arg1: i32) -> (i32, i32, i32) {
    %c0_i32 = arith.constant 0 : i32
    %c0_i32_0 = arith.constant 0 : i32
    %c0_i32_1 = arith.constant 0 : i32
    return %arg0, %c0_i32, %c0_i32_0 : i32, i32, i32
  }
  func.func @transform_1(%arg0: i32, %arg1: i32) -> (i32, i32, i32) {
    %c0_i32 = arith.constant 0 : i32
    %c0_i32_0 = arith.constant 0 : i32
    %c0_i32_1 = arith.constant 0 : i32
    return %c0_i32, %c0_i32_0, %arg1 : i32, i32, i32
  }
  func.func @transform_2(%arg0: i32, %arg1: i32) -> (i32, i32) {
    %c0_i32 = arith.constant 0 : i32
    %c0_i32_0 = arith.constant 0 : i32
    return %c0_i32, %arg1 : i32, i32
  }
  func.func @transform_3(%arg0: i32, %arg1: i32) -> (i32, i32) {
    %c0_i32 = arith.constant 0 : i32
    %c0_i32_0 = arith.constant 0 : i32
    return %c0_i32, %arg1 : i32, i32
  }
  func.func @transform_4(%arg0: i32, %arg1: i32) -> (i32, i32, i32) {
    %c0_i32 = arith.constant 0 : i32
    %c0_i32_0 = arith.constant 0 : i32
    return %arg0, %c0_i32, %arg1 : i32, i32, i32
  }
}

</mosaic_0001>

<llo_original>
// kernel: tpu_custom_call.1
$region0: #{tpu_custom_call.1}
  #allocation0 [shape = 'u32[]', space=smem, size = 0x4, offset = 0x4, fixed_abs, tag = 'smem constant byte address 0x4 - core index']
  #allocation1 [shape = 'u32[144,128]{1,0:T(1,128)}', space=vmem, size = 0x12000, scoped, tag = 'internal scratch']
  %s0 = inlined_call_operand.vmem [shape: bf16[2,326,32], index: 0, kind: input, shape index: {}]
  %s1 = inlined_call_operand.vmem [shape: bf16[9,32,128], index: 1, kind: input, shape index: {}]
  %s2 = inlined_call_operand.vmem [shape: f32[1,128], index: 2, kind: input, shape index: {}]
  %s3 = inlined_call_operand.vmem [shape: f32[1,128], index: 3, kind: input, shape index: {}]
  %s4 = inlined_call_operand.hbm [shape: f32[2,288,128], index: 4, kind: output, shape index: {}]
  %s5 = sld [smem:[#allocation0]]
  $region49: #{tpu_custom_call.1} parent=0
    _
  %s7 = ssub.s32 1, %s5
  %s8 = scalar_select 0, %s7, %s5
  $region1: #{tpu_custom_call.1} parent=0
    #allocation2 [shape = 'u8[294912]{0}', space=vmem, size = 0x48000, scoped, tag = 'output window, operand 0']
    #allocation3 [shape = 's32[2]{0}', space=sflag, size = 0x8, scoped, tag = 'scoped memory for tpu_custom_call.1']
    %9 = vsyncpa [#allocation3], 0
    %s10 = scalar_lea.sflag [#allocation3], 1
    %11 = vsyncpa %s10, 0
    loop: start=0, step=1, limit=4
    $region2: #{tpu_custom_call.1} parent=1 // loop_pre_header
      _
    $region3: #{tpu_custom_call.1} parent=1 // loop_header
      %s13 = sphi 0, %s17
      %p14 = scmp.ge.s32.totalorder %s13, 4
      %s20 = sphi 0, %s32
      %s21 = sphi 0, %s28
      %s22 = sphi 0, %s20
      %s23 = sphi 0, %s21
      %s24 = sphi 0, %s22
      %s25 = sphi 0, %s23
      %s35 = sphi 0, %s37
      %s38 = sphi 0, %s35
      %s39 = sphi 0, %s38
      %s55 = sphi 0, %s39
      %s61 = sphi 0, %s63
      %s64 = sphi 0, %s61
      %s65 = sphi 0, %s64
      %s81 = sphi 0, %s65
      %s87 = sphi 0, %s89
      %s90 = sphi 0, %s87
      %s91 = sphi 0, %s90
      %s107 = sphi 0, %s91
      %s113 = sphi 0, %s115
      %s116 = sphi 0, %s113
      %s117 = sphi 0, %s116
      %s133 = sphi 0, %s117
      %s141 = sphi 0, %s143
      %s144 = sphi 0, %s141
      %s145 = sphi 0, %s144
      %s161 = sphi 0, %s145
    $region4: #{tpu_custom_call.1} parent=1 // loop_header_branch
      %16 = sbr.rel (%p14) target = $region8
    $region5: #{tpu_custom_call.1} parent=1 // loop_body
      %s18 = ssub.s32 %s13, 1
      %s19 = ssub.s32 %s13, 2
      %s26 = sadd.s32 1, %s21
      %p27 = scmp.ge.s32.totalorder %s26, 1
      %s28 = scalar_select %p27, 0, %s26
      %s29 = sadd.s32 1, %s20
      %s30 = scalar_select %p27, %s29, %s20
      %p31 = scmp.ge.s32.totalorder %s30, 2
      %s32 = scalar_select %p31, 0, %s30
      %s33 = ssub.s32 %s20, %s32
      %p34 = scmp.eq.s32.totalorder %s33, 0
      %s36 = sadd.s32 %s35, 1
      %s37 = scalar_select %p34, %s35, %s36
      %p40 = pneg %p34
      %p41 = scmp.eq.s32.totalorder %s13, 1
      %p42 = por %p40, %p41
      %p43 = scmp.ne.s32.totalorder %s35, %s38
      %p44 = scmp.eq.s32.totalorder %s13, 0
      %p45 = por %p43, %p44
      %p46 = scmp.ne.s32.totalorder %s35, %s38
      %p47 = scmp.eq.s32.totalorder %s18, 1
      %p48 = por %p46, %p47
      %p49 = scmp.ne.s32.totalorder %s38, %s39
      %p50 = scmp.eq.s32.totalorder %s18, 0
      %p51 = por %p49, %p50
      %p52 = scmp.ne.s32.totalorder %s38, %s39
      %p53 = scmp.eq.s32.totalorder %s19, 1
      %p54 = por %p52, %p53
      %p56 = scmp.ne.s32.totalorder %s39, %s55
      %p57 = scmp.eq.s32.totalorder %s19, 0
      %p58 = por %p56, %p57
      %s59 = ssub.s32 %s21, %s28
      %p60 = scmp.eq.s32.totalorder %s59, 0
      %s62 = sadd.s32 %s61, 1
      %s63 = scalar_select %p60, %s61, %s62
      %p66 = pneg %p60
      %p67 = scmp.eq.s32.totalorder %s13, 1
      %p68 = por %p66, %p67
      %p69 = scmp.ne.s32.totalorder %s61, %s64
      %p70 = scmp.eq.s32.totalorder %s13, 0
      %p71 = por %p69, %p70
      %p72 = scmp.ne.s32.totalorder %s61, %s64
      %p73 = scmp.eq.s32.totalorder %s18, 1
      %p74 = por %p72, %p73
      %p75 = scmp.ne.s32.totalorder %s64, %s65
      %p76 = scmp.eq.s32.totalorder %s18, 0
      %p77 = por %p75, %p76
      %p78 = scmp.ne.s32.totalorder %s64, %s65
      %p79 = scmp.eq.s32.totalorder %s19, 1
      %p80 = por %p78, %p79
      %p82 = scmp.ne.s32.totalorder %s65, %s81
      %p83 = scmp.eq.s32.totalorder %s19, 0
      %p84 = por %p82, %p83
      %s85 = ssub.s32 %s21, %s28
      %p86 = scmp.eq.s32.totalorder %s85, 0
      %s88 = sadd.s32 %s87, 1
      %s89 = scalar_select %p86, %s87, %s88
      %p92 = pneg %p86
      %p93 = scmp.eq.s32.totalorder %s13, 1
      %p94 = por %p92, %p93
      %p95 = scmp.ne.s32.totalorder %s87, %s90
      %p96 = scmp.eq.s32.totalorder %s13, 0
      %p97 = por %p95, %p96
      %p98 = scmp.ne.s32.totalorder %s87, %s90
      %p99 = scmp.eq.s32.totalorder %s18, 1
      %p100 = por %p98, %p99
      %p101 = scmp.ne.s32.totalorder %s90, %s91
      %p102 = scmp.eq.s32.totalorder %s18, 0
      %p103 = por %p101, %p102
      %p104 = scmp.ne.s32.totalorder %s90, %s91
      %p105 = scmp.eq.s32.totalorder %s19, 1
      %p106 = por %p104, %p105
      %p108 = scmp.ne.s32.totalorder %s91, %s107
      %p109 = scmp.eq.s32.totalorder %s19, 0
      %p110 = por %p108, %p109
      %s111 = ssub.s32 %s21, %s28
      %p112 = scmp.eq.s32.totalorder %s111, 0
      %s114 = sadd.s32 %s113, 1
      %s115 = scalar_select %p112, %s113, %s114
      %p118 = pneg %p112
      %p119 = scmp.eq.s32.totalorder %s13, 1
      %p120 = por %p118, %p119
      %p121 = scmp.ne.s32.totalorder %s113, %s116
      %p122 = scmp.eq.s32.totalorder %s13, 0
      %p123 = por %p121, %p122
      %p124 = scmp.ne.s32.totalorder %s113, %s116
      %p125 = scmp.eq.s32.totalorder %s18, 1
      %p126 = por %p124, %p125
      %p127 = scmp.ne.s32.totalorder %s116, %s117
      %p128 = scmp.eq.s32.totalorder %s18, 0
      %p129 = por %p127, %p128
      %p130 = scmp.ne.s32.totalorder %s116, %s117
      %p131 = scmp.eq.s32.totalorder %s19, 1
      %p132 = por %p130, %p131
      %p134 = scmp.ne.s32.totalorder %s117, %s133
      %p135 = scmp.eq.s32.totalorder %s19, 0
      %p136 = por %p134, %p135
      %s137 = ssub.s32 %s20, %s32
      %s138 = ssub.s32 %s21, %s28
      %s139 = sor.u32 %s137, %s138
      %p140 = scmp.eq.s32.totalorder %s139, 0
      %s142 = sadd.s32 %s141, 1
      %s143 = scalar_select %p140, %s141, %s142
      %p146 = pneg %p140
      %p147 = scmp.eq.s32.totalorder %s13, 1
      %p148 = por %p146, %p147
      %p149 = scmp.ne.s32.totalorder %s141, %s144
      %p150 = scmp.eq.s32.totalorder %s13, 0
      %p151 = por %p149, %p150
      %p152 = scmp.ne.s32.totalorder %s141, %s144
      %p153 = scmp.eq.s32.totalorder %s18, 1
      %p154 = por %p152, %p153
      %p155 = scmp.ne.s32.totalorder %s144, %s145
      %p156 = scmp.eq.s32.totalorder %s18, 0
      %p157 = por %p155, %p156
      %p158 = scmp.ne.s32.totalorder %s144, %s145
      %p159 = scmp.eq.s32.totalorder %s19, 1
      %p160 = por %p158, %p159
      %p162 = scmp.ne.s32.totalorder %s145, %s161
      %p163 = scmp.eq.s32.totalorder %s19, 0
      %p164 = por %p162, %p163
      %p165 = scmp.le.s32.totalorder 1, %s13
      %p166 = scmp.lt.s32.totalorder %s13, 3
      %p167 = pnand %p165, %p166
      %p168 = pneg %p167
      // Predicated region
      $region9: #{tpu_custom_call.1} parent=5 // pred_check
        _
      $region10: #{tpu_custom_call.1} parent=5 // pred_check_branch
        %170 = sbr.rel (%p167) target = $region12
      $region11: #{tpu_custom_call.1} parent=5 // pred_region
        %s171 = ssub.s32 %s13, 1
        // Predicated region
        $region13: #{tpu_custom_call.1} parent=11 // pred_check
          %p172 = pneg %p77
        $region14: #{tpu_custom_call.1} parent=11 // pred_check_branch
          %174 = sbr.rel (%p172) target = $region16
        $region15: #{tpu_custom_call.1} parent=11 // pred_region
          %p175 = scmp.lt.s32.totalorder %s23, 0
          %s176 = scalar_select %p175, %s23, 0
          %s177 = smul.addr %s176, 4
          %s178 = scalar_lea.vmem %s1, %s177
        $region16: #{tpu_custom_call.1} parent=11 // pred_fallthru
          _
        // Predicated region
        $region17: #{tpu_custom_call.1} parent=11 // pred_check
          %p179 = pneg %p103
        $region18: #{tpu_custom_call.1} parent=11 // pred_check_branch
          %181 = sbr.rel (%p179) target = $region20
        $region19: #{tpu_custom_call.1} parent=11 // pred_region
          %p182 = scmp.lt.s32.totalorder %s23, 0
          %s183 = scalar_select %p182, %s23, 0
          %s184 = scalar_lea.vmem %s2, %s183
        $region20: #{tpu_custom_call.1} parent=11 // pred_fallthru
          _
        // Predicated region
        $region21: #{tpu_custom_call.1} parent=11 // pred_check
          %p185 = pneg %p129
        $region22: #{tpu_custom_call.1} parent=11 // pred_check_branch
          %187 = sbr.rel (%p185) target = $region24
        $region23: #{tpu_custom_call.1} parent=11 // pred_region
          %p188 = scmp.lt.s32.totalorder %s23, 0
          %s189 = scalar_select %p188, %s23, 0
          %s190 = scalar_lea.vmem %s3, %s189
        $region24: #{tpu_custom_call.1} parent=11 // pred_fallthru
          _
      $region12: #{tpu_custom_call.1} parent=5 // pred_fallthru
        _
      %p191 = scmp.lt.s32.totalorder %s13, 2
      // Predicated region
      $region25: #{tpu_custom_call.1} parent=5 // pred_check
        %p192 = pneg %p191
      $region26: #{tpu_custom_call.1} parent=5 // pred_check_branch
        %194 = sbr.rel (%p192) target = $region28
      $region27: #{tpu_custom_call.1} parent=5 // pred_region
        // Predicated region
        $region29: #{tpu_custom_call.1} parent=27 // pred_check
          %p195 = pneg %p45
        $region30: #{tpu_custom_call.1} parent=27 // pred_check_branch
          %197 = sbr.rel (%p195) target = $region32
        $region31: #{tpu_custom_call.1} parent=27 // pred_region
          %p198 = scmp.lt.s32.totalorder %s20, 1
          %s199 = scalar_select %p198, %s20, 1
          %s200 = smul.addr %s199, 41
          %s201 = smul.addr %s200, 4
          %s202 = scalar_lea.vmem %s0, %s201
        $region32: #{tpu_custom_call.1} parent=27 // pred_fallthru
          _
      $region28: #{tpu_custom_call.1} parent=5 // pred_fallthru
        _
      %p203 = scmp.le.s32.totalorder 1, %s13
      %p204 = scmp.lt.s32.totalorder %s13, 3
      %p205 = pnand %p203, %p204
      %p206 = pneg %p205
      // Predicated region
      $region33: #{tpu_custom_call.1} parent=5 // pred_check
        _
      $region34: #{tpu_custom_call.1} parent=5 // pred_check_branch
        %208 = sbr.rel (%p205) target = $region36
      $region35: #{tpu_custom_call.1} parent=5 // pred_region
        %s209 = ssub.s32 %s13, 1
        %p210 = scmp.lt.s32.totalorder %s22, 1
        %s211 = scalar_select %p210, %s22, 1
        %s212 = smul.addr %s211, 41
        %s213 = smul.addr %s212, 4
        %s214 = scalar_lea.vmem %s0, %s213
        %p215 = pneg %p51
        %p216 = pneg %p48
        %p217 = scmp.lt.s32.totalorder %s23, 0
        %s218 = scalar_select %p217, %s23, 0
        %s219 = smul.addr %s218, 4
        %s220 = scalar_lea.vmem %s1, %s219
        %p221 = pneg %p77
        %p222 = pneg %p74
        %p223 = scmp.lt.s32.totalorder %s23, 0
        %s224 = scalar_select %p223, %s23, 0
        %s225 = scalar_lea.vmem %s2, %s224
        %p226 = pneg %p103
        %p227 = pneg %p100
        %p228 = scmp.lt.s32.totalorder %s23, 0
        %s229 = scalar_select %p228, %s23, 0
        %s230 = scalar_lea.vmem %s3, %s229
        %p231 = pneg %p129
        %p232 = pneg %p126
        %p233 = pneg %p157
        %p234 = pneg %p154
        %s235 = sand.u32 %s144, 1
        %s236 = scalar_lea.sflag [#allocation3], %s235
        %s237 = sand.u32 %s144, 1
        %s238 = smul.addr %s237, 288
        %s239 = scalar_lea.vmem [#allocation2], %s238
        %p240 = scmp.lt.s32.totalorder %s22, 1
        %s241 = scalar_select %p240, %s22, 1
        %s242 = smul.addr %s241, 41
        %s243 = smul.addr %s242, 4
        %s244 = scalar_lea.vmem %s0, %s243
        %p245 = scmp.lt.s32.totalorder %s23, 0
        %s246 = scalar_select %p245, %s23, 0
        %s247 = smul.addr %s246, 4
        %s248 = scalar_lea.vmem %s1, %s247
        %p249 = scmp.lt.s32.totalorder %s23, 0
        %s250 = scalar_select %p249, %s23, 0
        %s251 = scalar_lea.vmem %s2, %s250
        %p252 = scmp.lt.s32.totalorder %s23, 0
        %s253 = scalar_select %p252, %s23, 0
        %s254 = scalar_lea.vmem %s3, %s253
        %v256 = vld [vmem:[%s244] sm:$0xf]
        %v257 = vld [vmem:[%s244 + $0x4] sm:$0xf]
        %v258 = vld [vmem:[%s244 + $0x8] sm:$0xf]
        %v259 = vld [vmem:[%s244 + $0xc] sm:$0xf]
        %v260 = vld [vmem:[%s244 + $0x10] sm:$0xf]
        %v261 = vld [vmem:[%s244 + $0x14] sm:$0xf]
        %v262 = vld [vmem:[%s244 + $0x18] sm:$0xf]
        %v263 = vld [vmem:[%s244 + $0x1c] sm:$0xf]
        %v264 = vld [vmem:[%s244 + $0x20] sm:$0xf]
        %v265 = vld [vmem:[%s244 + $0x24] sm:$0xf]
        %v266 = vld [vmem:[%s244 + $0x28] sm:$0xf]
        %v267 = vld [vmem:[%s244 + $0x2c] sm:$0xf]
        %v268 = vld [vmem:[%s244 + $0x30] sm:$0xf]
        %v269 = vld [vmem:[%s244 + $0x34] sm:$0xf]
        %v270 = vld [vmem:[%s244 + $0x38] sm:$0xf]
        %v271 = vld [vmem:[%s244 + $0x3c] sm:$0xf]
        %v272 = vld [vmem:[%s244 + $0x40] sm:$0xf]
        %v273 = vld [vmem:[%s244 + $0x44] sm:$0xf]
        %v274 = vld [vmem:[%s244 + $0x48] sm:$0xf]
        %v275 = vld [vmem:[%s244 + $0x4c] sm:$0xf]
        %v276 = vld [vmem:[%s244 + $0x50] sm:$0xf]
        %v277 = vld [vmem:[%s244 + $0x54] sm:$0xf]
        %v278 = vld [vmem:[%s244 + $0x58] sm:$0xf]
        %v279 = vld [vmem:[%s244 + $0x5c] sm:$0xf]
        %v280 = vld [vmem:[%s244 + $0x60] sm:$0xf]
        %v281 = vld [vmem:[%s244 + $0x64] sm:$0xf]
        %v282 = vld [vmem:[%s244 + $0x68] sm:$0xf]
        %v283 = vld [vmem:[%s244 + $0x6c] sm:$0xf]
        %v284 = vld [vmem:[%s244 + $0x70] sm:$0xf]
        %v285 = vld [vmem:[%s244 + $0x74] sm:$0xf]
        %v286 = vld [vmem:[%s244 + $0x78] sm:$0xf]
        %v287 = vld [vmem:[%s244 + $0x7c] sm:$0xf]
        %v288 = vld [vmem:[%s244 + $0x80] sm:$0xf]
        %v289 = vld [vmem:[%s244 + $0x84] sm:$0xf]
        %v290 = vld [vmem:[%s244 + $0x88] sm:$0xf]
        %v291 = vld [vmem:[%s244 + $0x8c] sm:$0xf]
        %v292 = vld [vmem:[%s248] sm:$0xf]
        %v293 = vld [vmem:[%s248 + $0x4] sm:$0xf]
        %v294 = vld [vmem:[%s248 + $0x8] sm:$0xf]
        %v295 = vld [vmem:[%s248 + $0xc] sm:$0xf]
        %v296 = vld [vmem:[%s244 + $0x90] sm:$0x1]
        %s297 = scalar_lea.vmem %s248, 16
        %v298 = vld [vmem:[%s297] sm:$0xf]
        %v299 = vld [vmem:[%s297 + $0x4] sm:$0xf]
        %v300 = vld [vmem:[%s297 + $0x8] sm:$0xf]
        %v301 = vld [vmem:[%s297 + $0xc] sm:$0xf]
        %v339 = vunpack.c.l.b16 %v256
        %v340 = vunpack.c.l.b16 %v257
        %v341 = vunpack.c.l.b16 %v258
        %v342 = vunpack.c.l.b16 %v259
        %v343 = vunpack.c.l.b16 %v260
        %v344 = vunpack.c.l.b16 %v261
        %v345 = vunpack.c.l.b16 %v262
        %v346 = vunpack.c.l.b16 %v263
        %v347 = vunpack.c.l.b16 %v264
        %v348 = vunpack.c.l.b16 %v265
        %v349 = vunpack.c.l.b16 %v266
        %v350 = vunpack.c.l.b16 %v267
        %v351 = vunpack.c.l.b16 %v268
        %v352 = vunpack.c.l.b16 %v269
        %v353 = vunpack.c.l.b16 %v270
        %v354 = vunpack.c.l.b16 %v271
        %v355 = vunpack.c.l.b16 %v272
        %v356 = vunpack.c.l.b16 %v273
        %v357 = vunpack.c.l.b16 %v274
        %v358 = vunpack.c.l.b16 %v275
        %v359 = vunpack.c.l.b16 %v276
        %v360 = vunpack.c.l.b16 %v277
        %v361 = vunpack.c.l.b16 %v278
        %v362 = vunpack.c.l.b16 %v279
        %v363 = vunpack.c.l.b16 %v280
        %v364 = vunpack.c.l.b16 %v281
        %v365 = vunpack.c.l.b16 %v282
        %v366 = vunpack.c.l.b16 %v283
        %v367 = vunpack.c.l.b16 %v284
        %v368 = vunpack.c.l.b16 %v285
        %v369 = vunpack.c.l.b16 %v286
        %v370 = vunpack.c.l.b16 %v287
        %v371 = vunpack.c.l.b16 %v288
        %v372 = vunpack.c.l.b16 %v289
        %v373 = vunpack.c.l.b16 %v290
        %v374 = vunpack.c.l.b16 %v291
        %v375 = vunpack.c.l.b16 %v296
        %v376 = vpack.c.b16 %v340, %v339
        %v377 = vpack.c.b16 %v342, %v341
        %v378 = vpack.c.b16 %v344, %v343
        %v379 = vpack.c.b16 %v346, %v345
        %v380 = vpack.c.b16 %v348, %v347
        %v381 = vpack.c.b16 %v350, %v349
        %v382 = vpack.c.b16 %v352, %v351
        %v383 = vpack.c.b16 %v354, %v353
        %v384 = vpack.c.b16 %v356, %v355
        %v385 = vpack.c.b16 %v358, %v357
        %v386 = vpack.c.b16 %v360, %v359
        %v387 = vpack.c.b16 %v362, %v361
        %v388 = vpack.c.b16 %v364, %v363
        %v389 = vpack.c.b16 %v366, %v365
        %v390 = vpack.c.b16 %v368, %v367
        %v391 = vpack.c.b16 %v370, %v369
        %v392 = vpack.c.b16 %v372, %v371
        %v393 = vpack.c.b16 %v374, %v373
        %v394 = vpack.c.b16 %v375, %v375
        %vm395 = vsmask.f32 7424
        %v397 = vshrl.u32 %v376, 16
        %v399 = vshll.u32 %v376, 16
        %v401 = vrot.slane %v399, 1
        %v402 = vor.u32 %v397, %v401
        %v404 = vshll.u32 %v377, 16
        %v406 = vrot.slane %v404, 1
        %v407 = vsel %vm395, %v402, %v406
        %v408 = vshrl.u32 %v377, 16
        %v410 = vor.u32 %v408, %v406
        %v412 = vshll.u32 %v378, 16
        %v414 = vrot.slane %v412, 1
        %v415 = vsel %vm395, %v410, %v414
        %v416 = vshrl.u32 %v378, 16
        %v418 = vor.u32 %v416, %v414
        %v420 = vshll.u32 %v379, 16
        %v422 = vrot.slane %v420, 1
        %v423 = vsel %vm395, %v418, %v422
        %v424 = vshrl.u32 %v379, 16
        %v426 = vor.u32 %v424, %v422
        %v428 = vshll.u32 %v380, 16
        %v430 = vrot.slane %v428, 1
        %v431 = vsel %vm395, %v426, %v430
        %v432 = vshrl.u32 %v380, 16
        %v434 = vor.u32 %v432, %v430
        %v436 = vshll.u32 %v381, 16
        %v438 = vrot.slane %v436, 1
        %v439 = vsel %vm395, %v434, %v438
        %v440 = vshrl.u32 %v381, 16
        %v442 = vor.u32 %v440, %v438
        %v444 = vshll.u32 %v382, 16
        %v446 = vrot.slane %v444, 1
        %v447 = vsel %vm395, %v442, %v446
        %v448 = vshrl.u32 %v382, 16
        %v450 = vor.u32 %v448, %v446
        %v452 = vshll.u32 %v383, 16
        %v454 = vrot.slane %v452, 1
        %v455 = vsel %vm395, %v450, %v454
        %v456 = vshrl.u32 %v383, 16
        %v458 = vor.u32 %v456, %v454
        %v460 = vshll.u32 %v384, 16
        %v462 = vrot.slane %v460, 1
        %v463 = vsel %vm395, %v458, %v462
        %v464 = vshrl.u32 %v384, 16
        %v466 = vor.u32 %v464, %v462
        %v468 = vshll.u32 %v385, 16
        %v470 = vrot.slane %v468, 1
        %v471 = vsel %vm395, %v466, %v470
        %v472 = vshrl.u32 %v385, 16
        %v474 = vor.u32 %v472, %v470
        %v476 = vshll.u32 %v386, 16
        %v478 = vrot.slane %v476, 1
        %v479 = vsel %vm395, %v474, %v478
        %v480 = vshrl.u32 %v386, 16
        %v482 = vor.u32 %v480, %v478
        %v484 = vshll.u32 %v387, 16
        %v486 = vrot.slane %v484, 1
        %v487 = vsel %vm395, %v482, %v486
        %v488 = vshrl.u32 %v387, 16
        %v490 = vor.u32 %v488, %v486
        %v492 = vshll.u32 %v388, 16
        %v494 = vrot.slane %v492, 1
        %v495 = vsel %vm395, %v490, %v494
        %v496 = vshrl.u32 %v388, 16
        %v498 = vor.u32 %v496, %v494
        %v500 = vshll.u32 %v389, 16
        %v502 = vrot.slane %v500, 1
        %v503 = vsel %vm395, %v498, %v502
        %v504 = vshrl.u32 %v389, 16
        %v506 = vor.u32 %v504, %v502
        %v508 = vshll.u32 %v390, 16
        %v510 = vrot.slane %v508, 1
        %v511 = vsel %vm395, %v506, %v510
        %v512 = vshrl.u32 %v390, 16
        %v514 = vor.u32 %v512, %v510
        %v516 = vshll.u32 %v391, 16
        %v518 = vrot.slane %v516, 1
        %v519 = vsel %vm395, %v514, %v518
        %v520 = vshrl.u32 %v391, 16
        %v522 = vor.u32 %v520, %v518
        %v524 = vshll.u32 %v392, 16
        %v526 = vrot.slane %v524, 1
        %v527 = vsel %vm395, %v522, %v526
        %v528 = vshrl.u32 %v392, 16
        %v530 = vor.u32 %v528, %v526
        %v532 = vshll.u32 %v393, 16
        %v534 = vrot.slane %v532, 1
        %v535 = vsel %vm395, %v530, %v534
        %v536 = vshrl.u32 %v393, 16
        %v538 = vor.u32 %v536, %v534
        %v540 = vshll.u32 %v394, 16
        %v542 = vrot.slane %v540, 1
        %v543 = vsel %vm395, %v538, %v542
        %v548 = vunpack.c.l.b16 %v298
        %v549 = vunpack.c.l.b16 %v299
        %v550 = vunpack.c.l.b16 %v300
        %v551 = vunpack.c.l.b16 %v301
        %v552 = vpack.c.b16 %v549, %v548
        %v553 = vpack.c.b16 %v551, %v550
        %vm556 = vcmask 261120
        %v558 = vsel %vm556, %v407, 0
        %v561 = vsel %vm556, %v415, 0
        %v564 = vsel %vm556, %v423, 0
        %v567 = vsel %vm556, %v431, 0
        %v570 = vsel %vm556, %v439, 0
        %v573 = vsel %vm556, %v447, 0
        %v576 = vsel %vm556, %v455, 0
        %v579 = vsel %vm556, %v463, 0
        %v582 = vsel %vm556, %v471, 0
        %v585 = vsel %vm556, %v479, 0
        %v588 = vsel %vm556, %v487, 0
        %v591 = vsel %vm556, %v495, 0
        %v594 = vsel %vm556, %v503, 0
        %v597 = vsel %vm556, %v511, 0
        %v600 = vsel %vm556, %v519, 0
        %v603 = vsel %vm556, %v527, 0
        %v606 = vsel %vm556, %v535, 0
        %v609 = vsel %vm556, %v543, 0
        %611 = vmatprep.subr.bf16.mxu0 0
        %612 = vmatpush1.bf16.msra.mxu0 %v552
        %613 = vmatprep.subr.bf16.mxu0 0
        %614 = vmatpush1.bf16.msra.mxu0 %v553
        %615 = vmatprep.subr.bf16.mxu0 0
        %616 = vmatpush1.bf16.msra.mxu0 0
        %617 = vmatprep.subr.bf16.mxu0 0
        %618 = vmatpush1.bf16.msra.mxu0 0
        %619 = vmatprep.subr.bf16.mxu0 0
        %620 = vmatpush1.bf16.msra.mxu0 0
        %621 = vmatprep.subr.bf16.mxu0 0
        %622 = vmatpush1.bf16.msra.mxu0 0
        %623 = vmatprep.subr.bf16.mxu0 0
        %624 = vmatpush1.bf16.msra.mxu0 0
        %625 = vmatprep.subr.bf16.mxu0 0
        %626 = vmatpush1.bf16.msra.mxu0 0
        %627 = vmatprep.subr.bf16.mxu0 0
        %628 = vmatpush1.bf16.msra.mxu0 0
        %629 = vmatprep.subr.bf16.mxu0 0
        %630 = vmatpush1.bf16.msra.mxu0 0
        %631 = vmatprep.subr.bf16.mxu0 0
        %632 = vmatpush1.bf16.msra.mxu0 0
        %633 = vmatprep.subr.bf16.mxu0 0
        %634 = vmatpush1.bf16.msra.mxu0 0
        %635 = vmatprep.subr.bf16.mxu0 0
        %636 = vmatpush1.bf16.msra.mxu0 0
        %637 = vmatprep.subr.bf16.mxu0 0
        %638 = vmatpush1.bf16.msra.mxu0 0
        %639 = vmatprep.subr.bf16.mxu0 0
        %640 = vmatpush1.bf16.msra.mxu0 0
        %641 = vmatprep.subr.bf16.mxu0 0
        %642 = vmatpush1.bf16.msra.mxu0 0
        %643 = vmatprep.mubr.bf16.mxu0 0
        %644 = vmatmul.mubr.bf16.gmra.mrb[0].mxu0 %v558
        %v645 = vpop.f32.mrb[0].mxu0
        %v646 = vadd.f32 0.0, %v645
        %v647 = vpop.f32.mrb[0].mxu0
        %v648 = vpop.f32.mrb[0].mxu0
        %v649 = vadd.f32 0.0, %v648
        %v650 = vpop.f32.mrb[0].mxu0
        %651 = vmatprep.mubr.bf16.mxu0 0
        %652 = vmatmul.mubr.bf16.gmra.mrb[0].mxu0 %v561
        %v653 = vpop.f32.mrb[0].mxu0
        %v654 = vadd.f32 0.0, %v653
        %v655 = vpop.f32.mrb[0].mxu0
        %v656 = vpop.f32.mrb[0].mxu0
        %v657 = vadd.f32 0.0, %v656
        %v658 = vpop.f32.mrb[0].mxu0
        %659 = vmatprep.mubr.bf16.mxu0 0
        %660 = vmatmul.mubr.bf16.gmra.mrb[0].mxu0 %v564
        %v661 = vpop.f32.mrb[0].mxu0
        %v662 = vadd.f32 0.0, %v661
        %v663 = vpop.f32.mrb[0].mxu0
        %v664 = vpop.f32.mrb[0].mxu0
        %v665 = vadd.f32 0.0, %v664
        %v666 = vpop.f32.mrb[0].mxu0
        %667 = vmatprep.mubr.bf16.mxu0 0
        %668 = vmatmul.mubr.bf16.gmra.mrb[0].mxu0 %v567
        %v669 = vpop.f32.mrb[0].mxu0
        %v670 = vadd.f32 0.0, %v669
        %v671 = vpop.f32.mrb[0].mxu0
        %v672 = vpop.f32.mrb[0].mxu0
        %v673 = vadd.f32 0.0, %v672
        %v674 = vpop.f32.mrb[0].mxu0
        %675 = vmatprep.mubr.bf16.mxu0 0
        %676 = vmatmul.mubr.bf16.gmra.mrb[0].mxu0 %v570
        %v677 = vpop.f32.mrb[0].mxu0
        %v678 = vadd.f32 0.0, %v677
        %v679 = vpop.f32.mrb[0].mxu0
        %v680 = vpop.f32.mrb[0].mxu0
        %v681 = vadd.f32 0.0, %v680
        %v682 = vpop.f32.mrb[0].mxu0
        %683 = vmatprep.mubr.bf16.mxu0 0
        %684 = vmatmul.mubr.bf16.gmra.mrb[0].mxu0 %v573
        %v685 = vpop.f32.mrb[0].mxu0
        %v686 = vadd.f32 0.0, %v685
        %v687 = vpop.f32.mrb[0].mxu0
        %v688 = vpop.f32.mrb[0].mxu0
        %v689 = vadd.f32 0.0, %v688
        %v690 = vpop.f32.mrb[0].mxu0
        %691 = vmatprep.mubr.bf16.mxu0 0
        %692 = vmatmul.mubr.bf16.gmra.mrb[0].mxu0 %v576
        %v693 = vpop.f32.mrb[0].mxu0
        %v694 = vadd.f32 0.0, %v693
        %v695 = vpop.f32.mrb[0].mxu0
        %v696 = vpop.f32.mrb[0].mxu0
        %v697 = vadd.f32 0.0, %v696
        %v698 = vpop.f32.mrb[0].mxu0
        %699 = vmatprep.mubr.bf16.mxu0 0
        %700 = vmatmul.mubr.bf16.gmra.mrb[0].mxu0 %v579
        %v701 = vpop.f32.mrb[0].mxu0
        %v702 = vadd.f32 0.0, %v701
        %v703 = vpop.f32.mrb[0].mxu0
        %v704 = vpop.f32.mrb[0].mxu0
        %v705 = vadd.f32 0.0, %v704
        %v706 = vpop.f32.mrb[0].mxu0
        %707 = vmatprep.mubr.bf16.mxu0 0
        %708 = vmatmul.mubr.bf16.gmra.mrb[0].mxu0 %v582
        %v709 = vpop.f32.mrb[0].mxu0
        %v710 = vadd.f32 0.0, %v709
        %v711 = vpop.f32.mrb[0].mxu0
        %v712 = vpop.f32.mrb[0].mxu0
        %v713 = vadd.f32 0.0, %v712
        %v714 = vpop.f32.mrb[0].mxu0
        %715 = vmatprep.mubr.bf16.mxu0 0
        %716 = vmatmul.mubr.bf16.gmra.mrb[0].mxu0 %v585
        %v717 = vpop.f32.mrb[0].mxu0
        %v718 = vadd.f32 0.0, %v717
        %v719 = vpop.f32.mrb[0].mxu0
        %v720 = vpop.f32.mrb[0].mxu0
        %v721 = vadd.f32 0.0, %v720
        %v722 = vpop.f32.mrb[0].mxu0
        %723 = vmatprep.mubr.bf16.mxu0 0
        %724 = vmatmul.mubr.bf16.gmra.mrb[0].mxu0 %v588
        %v725 = vpop.f32.mrb[0].mxu0
        %v726 = vadd.f32 0.0, %v725
        %v727 = vpop.f32.mrb[0].mxu0
        %v728 = vpop.f32.mrb[0].mxu0
        %v729 = vadd.f32 0.0, %v728
        %v730 = vpop.f32.mrb[0].mxu0
        %731 = vmatprep.mubr.bf16.mxu0 0
        %732 = vmatmul.mubr.bf16.gmra.mrb[0].mxu0 %v591
        %v733 = vpop.f32.mrb[0].mxu0
        %v734 = vadd.f32 0.0, %v733
        %v735 = vpop.f32.mrb[0].mxu0
        %v736 = vpop.f32.mrb[0].mxu0
        %v737 = vadd.f32 0.0, %v736
        %v738 = vpop.f32.mrb[0].mxu0
        %739 = vmatprep.mubr.bf16.mxu0 0
        %740 = vmatmul.mubr.bf16.gmra.mrb[0].mxu0 %v594
        %v741 = vpop.f32.mrb[0].mxu0
        %v742 = vadd.f32 0.0, %v741
        %v743 = vpop.f32.mrb[0].mxu0
        %v744 = vpop.f32.mrb[0].mxu0
        %v745 = vadd.f32 0.0, %v744
        %v746 = vpop.f32.mrb[0].mxu0
        %747 = vmatprep.mubr.bf16.mxu0 0
        %748 = vmatmul.mubr.bf16.gmra.mrb[0].mxu0 %v597
        %v749 = vpop.f32.mrb[0].mxu0
        %v750 = vadd.f32 0.0, %v749
        %v751 = vpop.f32.mrb[0].mxu0
        %v752 = vpop.f32.mrb[0].mxu0
        %v753 = vadd.f32 0.0, %v752
        %v754 = vpop.f32.mrb[0].mxu0
        %755 = vmatprep.mubr.bf16.mxu0 0
        %756 = vmatmul.mubr.bf16.gmra.mrb[0].mxu0 %v600
        %v757 = vpop.f32.mrb[0].mxu0
        %v758 = vadd.f32 0.0, %v757
        %v759 = vpop.f32.mrb[0].mxu0
        %v760 = vpop.f32.mrb[0].mxu0
        %v761 = vadd.f32 0.0, %v760
        %v762 = vpop.f32.mrb[0].mxu0
        %763 = vmatprep.mubr.bf16.mxu0 0
        %764 = vmatmul.mubr.bf16.gmra.mrb[0].mxu0 %v603
        %v765 = vpop.f32.mrb[0].mxu0
        %v766 = vadd.f32 0.0, %v765
        %v767 = vpop.f32.mrb[0].mxu0
        %v768 = vpop.f32.mrb[0].mxu0
        %v769 = vadd.f32 0.0, %v768
        %v770 = vpop.f32.mrb[0].mxu0
        %771 = vmatprep.mubr.bf16.mxu0 0
        %772 = vmatmul.mubr.bf16.gmra.mrb[0].mxu0 %v606
        %v773 = vpop.f32.mrb[0].mxu0
        %v774 = vadd.f32 0.0, %v773
        %v775 = vpop.f32.mrb[0].mxu0
        %v776 = vpop.f32.mrb[0].mxu0
        %v777 = vadd.f32 0.0, %v776
        %v778 = vpop.f32.mrb[0].mxu0
        %779 = vmatprep.mubr.bf16.mxu0 0
        %780 = vmatmul.mubr.bf16.gmra.mrb[0].mxu0 %v609
        %v781 = vpop.f32.mrb[0].mxu0
        %v782 = vadd.f32 0.0, %v781
        %v783 = vpop.f32.mrb[0].mxu0
        %v784 = vpop.f32.mrb[0].mxu0
        %v785 = vadd.f32 0.0, %v784
        %v786 = vpop.f32.mrb[0].mxu0
        %787 = vdwg.mxu0
        %v792 = vunpack.c.l.b16 %v292
        %v793 = vunpack.c.l.b16 %v293
        %v794 = vunpack.c.l.b16 %v294
        %v795 = vunpack.c.l.b16 %v295
        %v796 = vpack.c.b16 %v793, %v792
        %v797 = vpack.c.b16 %v795, %v794
        %v800 = vsel %vm556, %v376, 0
        %v802 = vsel %vm556, %v377, 0
        %v804 = vsel %vm556, %v378, 0
        %v806 = vsel %vm556, %v379, 0
        %v808 = vsel %vm556, %v380, 0
        %v810 = vsel %vm556, %v381, 0
        %v812 = vsel %vm556, %v382, 0
        %v814 = vsel %vm556, %v383, 0
        %v816 = vsel %vm556, %v384, 0
        %v818 = vsel %vm556, %v385, 0
        %v820 = vsel %vm556, %v386, 0
        %v822 = vsel %vm556, %v387, 0
        %v824 = vsel %vm556, %v388, 0
        %v826 = vsel %vm556, %v389, 0
        %v828 = vsel %vm556, %v390, 0
        %v830 = vsel %vm556, %v391, 0
        %v832 = vsel %vm556, %v392, 0
        %v834 = vsel %vm556, %v393, 0
        %836 = vmatprep.subr.bf16.mxu0 0
        %837 = vmatpush1.bf16.msra.mxu0 %v796
        %838 = vmatprep.subr.bf16.mxu0 0
        %839 = vmatpush1.bf16.msra.mxu0 %v797
        %840 = vmatprep.subr.bf16.mxu0 0
        %841 = vmatpush1.bf16.msra.mxu0 0
        %842 = vmatprep.subr.bf16.mxu0 0
        %843 = vmatpush1.bf16.msra.mxu0 0
        %844 = vmatprep.subr.bf16.mxu0 0
        %845 = vmatpush1.bf16.msra.mxu0 0
        %846 = vmatprep.subr.bf16.mxu0 0
        %847 = vmatpush1.bf16.msra.mxu0 0
        %848 = vmatprep.subr.bf16.mxu0 0
        %849 = vmatpush1.bf16.msra.mxu0 0
        %850 = vmatprep.subr.bf16.mxu0 0
        %851 = vmatpush1.bf16.msra.mxu0 0
        %852 = vmatprep.subr.bf16.mxu0 0
        %853 = vmatpush1.bf16.msra.mxu0 0
        %854 = vmatprep.subr.bf16.mxu0 0
        %855 = vmatpush1.bf16.msra.mxu0 0
        %856 = vmatprep.subr.bf16.mxu0 0
        %857 = vmatpush1.bf16.msra.mxu0 0
        %858 = vmatprep.subr.bf16.mxu0 0
        %859 = vmatpush1.bf16.msra.mxu0 0
        %860 = vmatprep.subr.bf16.mxu0 0
        %861 = vmatpush1.bf16.msra.mxu0 0
        %862 = vmatprep.subr.bf16.mxu0 0
        %863 = vmatpush1.bf16.msra.mxu0 0
        %864 = vmatprep.subr.bf16.mxu0 0
        %865 = vmatpush1.bf16.msra.mxu0 0
        %866 = vmatprep.subr.bf16.mxu0 0
        %867 = vmatpush1.bf16.msra.mxu0 0
        %868 = vmatprep.mubr.bf16.mxu0 0
        %869 = vmatmul.mubr.bf16.gmra.mrb[0].mxu0 %v800
        %v870 = vpop.f32.mrb[0].mxu0
        %v871 = vadd.f32 %v646, %v870
        %v872 = vpop.f32.mrb[0].mxu0
        %v873 = vpop.f32.mrb[0].mxu0
        %v874 = vadd.f32 %v649, %v873
        %v875 = vpop.f32.mrb[0].mxu0
        %876 = vmatprep.mubr.bf16.mxu0 0
        %877 = vmatmul.mubr.bf16.gmra.mrb[0].mxu0 %v802
        %v878 = vpop.f32.mrb[0].mxu0
        %v879 = vadd.f32 %v654, %v878
        %v880 = vpop.f32.mrb[0].mxu0
        %v881 = vpop.f32.mrb[0].mxu0
        %v882 = vadd.f32 %v657, %v881
        %v883 = vpop.f32.mrb[0].mxu0
        %884 = vmatprep.mubr.bf16.mxu0 0
        %885 = vmatmul.mubr.bf16.gmra.mrb[0].mxu0 %v804
        %v886 = vpop.f32.mrb[0].mxu0
        %v887 = vadd.f32 %v662, %v886
        %v888 = vpop.f32.mrb[0].mxu0
        %v889 = vpop.f32.mrb[0].mxu0
        %v890 = vadd.f32 %v665, %v889
        %v891 = vpop.f32.mrb[0].mxu0
        %892 = vmatprep.mubr.bf16.mxu0 0
        %893 = vmatmul.mubr.bf16.gmra.mrb[0].mxu0 %v806
        %v894 = vpop.f32.mrb[0].mxu0
        %v895 = vadd.f32 %v670, %v894
        %v896 = vpop.f32.mrb[0].mxu0
        %v897 = vpop.f32.mrb[0].mxu0
        %v898 = vadd.f32 %v673, %v897
        %v899 = vpop.f32.mrb[0].mxu0
        %900 = vmatprep.mubr.bf16.mxu0 0
        %901 = vmatmul.mubr.bf16.gmra.mrb[0].mxu0 %v808
        %v902 = vpop.f32.mrb[0].mxu0
        %v903 = vadd.f32 %v678, %v902
        %v904 = vpop.f32.mrb[0].mxu0
        %v905 = vpop.f32.mrb[0].mxu0
        %v906 = vadd.f32 %v681, %v905
        %v907 = vpop.f32.mrb[0].mxu0
        %908 = vmatprep.mubr.bf16.mxu0 0
        %909 = vmatmul.mubr.bf16.gmra.mrb[0].mxu0 %v810
        %v910 = vpop.f32.mrb[0].mxu0
        %v911 = vadd.f32 %v686, %v910
        %v912 = vpop.f32.mrb[0].mxu0
        %v913 = vpop.f32.mrb[0].mxu0
        %v914 = vadd.f32 %v689, %v913
        %v915 = vpop.f32.mrb[0].mxu0
        %916 = vmatprep.mubr.bf16.mxu0 0
        %917 = vmatmul.mubr.bf16.gmra.mrb[0].mxu0 %v812
        %v918 = vpop.f32.mrb[0].mxu0
        %v919 = vadd.f32 %v694, %v918
        %v920 = vpop.f32.mrb[0].mxu0
        %v921 = vpop.f32.mrb[0].mxu0
        %v922 = vadd.f32 %v697, %v921
        %v923 = vpop.f32.mrb[0].mxu0
        %924 = vmatprep.mubr.bf16.mxu0 0
        %925 = vmatmul.mubr.bf16.gmra.mrb[0].mxu0 %v814
        %v926 = vpop.f32.mrb[0].mxu0
        %v927 = vadd.f32 %v702, %v926
        %v928 = vpop.f32.mrb[0].mxu0
        %v929 = vpop.f32.mrb[0].mxu0
        %v930 = vadd.f32 %v705, %v929
        %v931 = vpop.f32.mrb[0].mxu0
        %932 = vmatprep.mubr.bf16.mxu0 0
        %933 = vmatmul.mubr.bf16.gmra.mrb[0].mxu0 %v816
        %v934 = vpop.f32.mrb[0].mxu0
        %v935 = vadd.f32 %v710, %v934
        %v936 = vpop.f32.mrb[0].mxu0
        %v937 = vpop.f32.mrb[0].mxu0
        %v938 = vadd.f32 %v713, %v937
        %v939 = vpop.f32.mrb[0].mxu0
        %940 = vmatprep.mubr.bf16.mxu0 0
        %941 = vmatmul.mubr.bf16.gmra.mrb[0].mxu0 %v818
        %v942 = vpop.f32.mrb[0].mxu0
        %v943 = vadd.f32 %v718, %v942
        %v944 = vpop.f32.mrb[0].mxu0
        %v945 = vpop.f32.mrb[0].mxu0
        %v946 = vadd.f32 %v721, %v945
        %v947 = vpop.f32.mrb[0].mxu0
        %948 = vmatprep.mubr.bf16.mxu0 0
        %949 = vmatmul.mubr.bf16.gmra.mrb[0].mxu0 %v820
        %v950 = vpop.f32.mrb[0].mxu0
        %v951 = vadd.f32 %v726, %v950
        %v952 = vpop.f32.mrb[0].mxu0
        %v953 = vpop.f32.mrb[0].mxu0
        %v954 = vadd.f32 %v729, %v953
        %v955 = vpop.f32.mrb[0].mxu0
        %956 = vmatprep.mubr.bf16.mxu0 0
        %957 = vmatmul.mubr.bf16.gmra.mrb[0].mxu0 %v822
        %v958 = vpop.f32.mrb[0].mxu0
        %v959 = vadd.f32 %v734, %v958
        %v960 = vpop.f32.mrb[0].mxu0
        %v961 = vpop.f32.mrb[0].mxu0
        %v962 = vadd.f32 %v737, %v961
        %v963 = vpop.f32.mrb[0].mxu0
        %964 = vmatprep.mubr.bf16.mxu0 0
        %965 = vmatmul.mubr.bf16.gmra.mrb[0].mxu0 %v824
        %v966 = vpop.f32.mrb[0].mxu0
        %v967 = vadd.f32 %v742, %v966
        %v968 = vpop.f32.mrb[0].mxu0
        %v969 = vpop.f32.mrb[0].mxu0
        %v970 = vadd.f32 %v745, %v969
        %v971 = vpop.f32.mrb[0].mxu0
        %972 = vmatprep.mubr.bf16.mxu0 0
        %973 = vmatmul.mubr.bf16.gmra.mrb[0].mxu0 %v826
        %v974 = vpop.f32.mrb[0].mxu0
        %v975 = vadd.f32 %v750, %v974
        %v976 = vpop.f32.mrb[0].mxu0
        %v977 = vpop.f32.mrb[0].mxu0
        %v978 = vadd.f32 %v753, %v977
        %v979 = vpop.f32.mrb[0].mxu0
        %980 = vmatprep.mubr.bf16.mxu0 0
        %981 = vmatmul.mubr.bf16.gmra.mrb[0].mxu0 %v828
        %v982 = vpop.f32.mrb[0].mxu0
        %v983 = vadd.f32 %v758, %v982
        %v984 = vpop.f32.mrb[0].mxu0
        %v985 = vpop.f32.mrb[0].mxu0
        %v986 = vadd.f32 %v761, %v985
        %v987 = vpop.f32.mrb[0].mxu0
        %988 = vmatprep.mubr.bf16.mxu0 0
        %989 = vmatmul.mubr.bf16.gmra.mrb[0].mxu0 %v830
        %v990 = vpop.f32.mrb[0].mxu0
        %v991 = vadd.f32 %v766, %v990
        %v992 = vpop.f32.mrb[0].mxu0
        %v993 = vpop.f32.mrb[0].mxu0
        %v994 = vadd.f32 %v769, %v993
        %v995 = vpop.f32.mrb[0].mxu0
        %996 = vmatprep.mubr.bf16.mxu0 0
        %997 = vmatmul.mubr.bf16.gmra.mrb[0].mxu0 %v832
        %v998 = vpop.f32.mrb[0].mxu0
        %v999 = vadd.f32 %v774, %v998
        %v1000 = vpop.f32.mrb[0].mxu0
        %v1001 = vpop.f32.mrb[0].mxu0
        %v1002 = vadd.f32 %v777, %v1001
        %v1003 = vpop.f32.mrb[0].mxu0
        %1004 = vmatprep.mubr.bf16.mxu0 0
        %1005 = vmatmul.mubr.bf16.gmra.mrb[0].mxu0 %v834
        %v1006 = vpop.f32.mrb[0].mxu0
        %v1007 = vadd.f32 %v782, %v1006
        %v1008 = vpop.f32.mrb[0].mxu0
        %v1009 = vpop.f32.mrb[0].mxu0
        %v1010 = vadd.f32 %v785, %v1009
        %v1011 = vpop.f32.mrb[0].mxu0
        %1012 = vdwg.mxu0
        %v1013 = vld [vmem:[%s244] sm:$0xe]
        %s1014 = scalar_lea.vmem %s248, 32
        %v1015 = vld [vmem:[%s1014] sm:$0xf]
        %v1016 = vld [vmem:[%s1014 + $0x4] sm:$0xf]
        %v1017 = vld [vmem:[%s1014 + $0x8] sm:$0xf]
        %v1018 = vld [vmem:[%s1014 + $0xc] sm:$0xf]
        %v1020 = vunpack.c.l.b16 %v1013
        %v1021 = vpack.c.b16 %v340, %v1020
        %vm1022 = vcmask 1046528
        %v1023 = vrot.slane %v1021, 1
        %v1024 = vrot.slane %v377, 1
        %v1025 = vsel %vm1022, %v1023, %v1024
        %v1026 = vrot.slane %v378, 1
        %v1027 = vsel %vm1022, %v1024, %v1026
        %v1028 = vrot.slane %v379, 1
        %v1029 = vsel %vm1022, %v1026, %v1028
        %v1030 = vrot.slane %v380, 1
        %v1031 = vsel %vm1022, %v1028, %v1030
        %v1032 = vrot.slane %v381, 1
        %v1033 = vsel %vm1022, %v1030, %v1032
        %v1034 = vrot.slane %v382, 1
        %v1035 = vsel %vm1022, %v1032, %v1034
        %v1036 = vrot.slane %v383, 1
        %v1037 = vsel %vm1022, %v1034, %v1036
        %v1038 = vrot.slane %v384, 1
        %v1039 = vsel %vm1022, %v1036, %v1038
        %v1040 = vrot.slane %v385, 1
        %v1041 = vsel %vm1022, %v1038, %v1040
        %v1042 = vrot.slane %v386, 1
        %v1043 = vsel %vm1022, %v1040, %v1042
        %v1044 = vrot.slane %v387, 1
        %v1045 = vsel %vm1022, %v1042, %v1044
        %v1046 = vrot.slane %v388, 1
        %v1047 = vsel %vm1022, %v1044, %v1046
        %v1048 = vrot.slane %v389, 1
        %v1049 = vsel %vm1022, %v1046, %v1048
        %v1050 = vrot.slane %v390, 1
        %v1051 = vsel %vm1022, %v1048, %v1050
        %v1052 = vrot.slane %v391, 1
        %v1053 = vsel %vm1022, %v1050, %v1052
        %v1054 = vrot.slane %v392, 1
        %v1055 = vsel %vm1022, %v1052, %v1054
        %v1056 = vrot.slane %v393, 1
        %v1057 = vsel %vm1022, %v1054, %v1056
        %v1058 = vrot.slane %v394, 1
        %v1059 = vsel %vm1022, %v1056, %v1058
        %v1064 = vunpack.c.l.b16 %v1015
        %v1065 = vunpack.c.l.b16 %v1016
        %v1066 = vunpack.c.l.b16 %v1017
        %v1067 = vunpack.c.l.b16 %v1018
        %v1068 = vpack.c.b16 %v1065, %v1064
        %v1069 = vpack.c.b16 %v1067, %v1066
        %v1073 = vsel %vm556, %v1025, 0
        %v1076 = vsel %vm556, %v1027, 0
        %v1079 = vsel %vm556, %v1029, 0
        %v1082 = vsel %vm556, %v1031, 0
        %v1085 = vsel %vm556, %v1033, 0
        %v1088 = vsel %vm556, %v1035, 0
        %v1091 = vsel %vm556, %v1037, 0
        %v1094 = vsel %vm556, %v1039, 0
        %v1097 = vsel %vm556, %v1041, 0
        %v1100 = vsel %vm556, %v1043, 0
        %v1103 = vsel %vm556, %v1045, 0
        %v1106 = vsel %vm556, %v1047, 0
        %v1109 = vsel %vm556, %v1049, 0
        %v1112 = vsel %vm556, %v1051, 0
        %v1115 = vsel %vm556, %v1053, 0
        %v1118 = vsel %vm556, %v1055, 0
        %v1121 = vsel %vm556, %v1057, 0
        %v1124 = vsel %vm556, %v1059, 0
        %1126 = vmatprep.subr.bf16.mxu0 0
        %1127 = vmatpush1.bf16.msra.mxu0 %v1068
        %1128 = vmatprep.subr.bf16.mxu0 0
        %1129 = vmatpush1.bf16.msra.mxu0 %v1069
        %1130 = vmatprep.subr.bf16.mxu0 0
        %1131 = vmatpush1.bf16.msra.mxu0 0
        %1132 = vmatprep.subr.bf16.mxu0 0
        %1133 = vmatpush1.bf16.msra.mxu0 0
        %1134 = vmatprep.subr.bf16.mxu0 0
        %1135 = vmatpush1.bf16.msra.mxu0 0
        %1136 = vmatprep.subr.bf16.mxu0 0
        %1137 = vmatpush1.bf16.msra.mxu0 0
        %1138 = vmatprep.subr.bf16.mxu0 0
        %1139 = vmatpush1.bf16.msra.mxu0 0
        %1140 = vmatprep.subr.bf16.mxu0 0
        %1141 = vmatpush1.bf16.msra.mxu0 0
        %1142 = vmatprep.subr.bf16.mxu0 0
        %1143 = vmatpush1.bf16.msra.mxu0 0
        %1144 = vmatprep.subr.bf16.mxu0 0
        %1145 = vmatpush1.bf16.msra.mxu0 0
        %1146 = vmatprep.subr.bf16.mxu0 0
        %1147 = vmatpush1.bf16.msra.mxu0 0
        %1148 = vmatprep.subr.bf16.mxu0 0
        %1149 = vmatpush1.bf16.msra.mxu0 0
        %1150 = vmatprep.subr.bf16.mxu0 0
        %1151 = vmatpush1.bf16.msra.mxu0 0
        %1152 = vmatprep.subr.bf16.mxu0 0
        %1153 = vmatpush1.bf16.msra.mxu0 0
        %1154 = vmatprep.subr.bf16.mxu0 0
        %1155 = vmatpush1.bf16.msra.mxu0 0
        %1156 = vmatprep.subr.bf16.mxu0 0
        %1157 = vmatpush1.bf16.msra.mxu0 0
        %1158 = vmatprep.mubr.bf16.mxu0 0
        %1159 = vmatmul.mubr.bf16.gmra.mrb[0].mxu0 %v1073
        %v1160 = vpop.f32.mrb[0].mxu0
        %v1161 = vadd.f32 0.0, %v1160
        %v1162 = vpop.f32.mrb[0].mxu0
        %v1163 = vpop.f32.mrb[0].mxu0
        %v1164 = vadd.f32 0.0, %v1163
        %v1165 = vpop.f32.mrb[0].mxu0
        %1166 = vmatprep.mubr.bf16.mxu0 0
        %1167 = vmatmul.mubr.bf16.gmra.mrb[0].mxu0 %v1076
        %v1168 = vpop.f32.mrb[0].mxu0
        %v1169 = vadd.f32 0.0, %v1168
        %v1170 = vpop.f32.mrb[0].mxu0
        %v1171 = vpop.f32.mrb[0].mxu0
        %v1172 = vadd.f32 0.0, %v1171
        %v1173 = vpop.f32.mrb[0].mxu0
        %1174 = vmatprep.mubr.bf16.mxu0 0
        %1175 = vmatmul.mubr.bf16.gmra.mrb[0].mxu0 %v1079
        %v1176 = vpop.f32.mrb[0].mxu0
        %v1177 = vadd.f32 0.0, %v1176
        %v1178 = vpop.f32.mrb[0].mxu0
        %v1179 = vpop.f32.mrb[0].mxu0
        %v1180 = vadd.f32 0.0, %v1179
        %v1181 = vpop.f32.mrb[0].mxu0
        %1182 = vmatprep.mubr.bf16.mxu0 0
        %1183 = vmatmul.mubr.bf16.gmra.mrb[0].mxu0 %v1082
        %v1184 = vpop.f32.mrb[0].mxu0
        %v1185 = vadd.f32 0.0, %v1184
        %v1186 = vpop.f32.mrb[0].mxu0
        %v1187 = vpop.f32.mrb[0].mxu0
        %v1188 = vadd.f32 0.0, %v1187
        %v1189 = vpop.f32.mrb[0].mxu0
        %1190 = vmatprep.mubr.bf16.mxu0 0
        %1191 = vmatmul.mubr.bf16.gmra.mrb[0].mxu0 %v1085
        %v1192 = vpop.f32.mrb[0].mxu0
        %v1193 = vadd.f32 0.0, %v1192
        %v1194 = vpop.f32.mrb[0].mxu0
        %v1195 = vpop.f32.mrb[0].mxu0
        %v1196 = vadd.f32 0.0, %v1195
        %v1197 = vpop.f32.mrb[0].mxu0
        %1198 = vmatprep.mubr.bf16.mxu0 0
        %1199 = vmatmul.mubr.bf16.gmra.mrb[0].mxu0 %v1088
        %v1200 = vpop.f32.mrb[0].mxu0
        %v1201 = vadd.f32 0.0, %v1200
        %v1202 = vpop.f32.mrb[0].mxu0
        %v1203 = vpop.f32.mrb[0].mxu0
        %v1204 = vadd.f32 0.0, %v1203
        %v1205 = vpop.f32.mrb[0].mxu0
        %1206 = vmatprep.mubr.bf16.mxu0 0
        %1207 = vmatmul.mubr.bf16.gmra.mrb[0].mxu0 %v1091
        %v1208 = vpop.f32.mrb[0].mxu0
        %v1209 = vadd.f32 0.0, %v1208
        %v1210 = vpop.f32.mrb[0].mxu0
        %v1211 = vpop.f32.mrb[0].mxu0
        %v1212 = vadd.f32 0.0, %v1211
        %v1213 = vpop.f32.mrb[0].mxu0
        %1214 = vmatprep.mubr.bf16.mxu0 0
        %1215 = vmatmul.mubr.bf16.gmra.mrb[0].mxu0 %v1094
        %v1216 = vpop.f32.mrb[0].mxu0
        %v1217 = vadd.f32 0.0, %v1216
        %v1218 = vpop.f32.mrb[0].mxu0
        %v1219 = vpop.f32.mrb[0].mxu0
        %v1220 = vadd.f32 0.0, %v1219
        %v1221 = vpop.f32.mrb[0].mxu0
        %1222 = vmatprep.mubr.bf16.mxu0 0
        %1223 = vmatmul.mubr.bf16.gmra.mrb[0].mxu0 %v1097
        %v1224 = vpop.f32.mrb[0].mxu0
        %v1225 = vadd.f32 0.0, %v1224
        %v1226 = vpop.f32.mrb[0].mxu0
        %v1227 = vpop.f32.mrb[0].mxu0
        %v1228 = vadd.f32 0.0, %v1227
        %v1229 = vpop.f32.mrb[0].mxu0
        %1230 = vmatprep.mubr.bf16.mxu0 0
        %1231 = vmatmul.mubr.bf16.gmra.mrb[0].mxu0 %v1100
        %v1232 = vpop.f32.mrb[0].mxu0
        %v1233 = vadd.f32 0.0, %v1232
        %v1234 = vpop.f32.mrb[0].mxu0
        %v1235 = vpop.f32.mrb[0].mxu0
        %v1236 = vadd.f32 0.0, %v1235
        %v1237 = vpop.f32.mrb[0].mxu0
        %1238 = vmatprep.mubr.bf16.mxu0 0
        %1239 = vmatmul.mubr.bf16.gmra.mrb[0].mxu0 %v1103
        %v1240 = vpop.f32.mrb[0].mxu0
        %v1241 = vadd.f32 0.0, %v1240
        %v1242 = vpop.f32.mrb[0].mxu0
        %v1243 = vpop.f32.mrb[0].mxu0
        %v1244 = vadd.f32 0.0, %v1243
        %v1245 = vpop.f32.mrb[0].mxu0
        %1246 = vmatprep.mubr.bf16.mxu0 0
        %1247 = vmatmul.mubr.bf16.gmra.mrb[0].mxu0 %v1106
        %v1248 = vpop.f32.mrb[0].mxu0
        %v1249 = vadd.f32 0.0, %v1248
        %v1250 = vpop.f32.mrb[0].mxu0
        %v1251 = vpop.f32.mrb[0].mxu0
        %v1252 = vadd.f32 0.0, %v1251
        %v1253 = vpop.f32.mrb[0].mxu0
        %1254 = vmatprep.mubr.bf16.mxu0 0
        %1255 = vmatmul.mubr.bf16.gmra.mrb[0].mxu0 %v1109
        %v1256 = vpop.f32.mrb[0].mxu0
        %v1257 = vadd.f32 0.0, %v1256
        %v1258 = vpop.f32.mrb[0].mxu0
        %v1259 = vpop.f32.mrb[0].mxu0
        %v1260 = vadd.f32 0.0, %v1259
        %v1261 = vpop.f32.mrb[0].mxu0
        %1262 = vmatprep.mubr.bf16.mxu0 0
        %1263 = vmatmul.mubr.bf16.gmra.mrb[0].mxu0 %v1112
        %v1264 = vpop.f32.mrb[0].mxu0
        %v1265 = vadd.f32 0.0, %v1264
        %v1266 = vpop.f32.mrb[0].mxu0
        %v1267 = vpop.f32.mrb[0].mxu0
        %v1268 = vadd.f32 0.0, %v1267
        %v1269 = vpop.f32.mrb[0].mxu0
        %1270 = vmatprep.mubr.bf16.mxu0 0
        %1271 = vmatmul.mubr.bf16.gmra.mrb[0].mxu0 %v1115
        %v1272 = vpop.f32.mrb[0].mxu0
        %v1273 = vadd.f32 0.0, %v1272
        %v1274 = vpop.f32.mrb[0].mxu0
        %v1275 = vpop.f32.mrb[0].mxu0
        %v1276 = vadd.f32 0.0, %v1275
        %v1277 = vpop.f32.mrb[0].mxu0
        %1278 = vmatprep.mubr.bf16.mxu0 0
        %1279 = vmatmul.mubr.bf16.gmra.mrb[0].mxu0 %v1118
        %v1280 = vpop.f32.mrb[0].mxu0
        %v1281 = vadd.f32 0.0, %v1280
        %v1282 = vpop.f32.mrb[0].mxu0
        %v1283 = vpop.f32.mrb[0].mxu0
        %v1284 = vadd.f32 0.0, %v1283
        %v1285 = vpop.f32.mrb[0].mxu0
        %1286 = vmatprep.mubr.bf16.mxu0 0
        %1287 = vmatmul.mubr.bf16.gmra.mrb[0].mxu0 %v1121
        %v1288 = vpop.f32.mrb[0].mxu0
        %v1289 = vadd.f32 0.0, %v1288
        %v1290 = vpop.f32.mrb[0].mxu0
        %v1291 = vpop.f32.mrb[0].mxu0
        %v1292 = vadd.f32 0.0, %v1291
        %v1293 = vpop.f32.mrb[0].mxu0
        %1294 = vmatprep.mubr.bf16.mxu0 0
        %1295 = vmatmul.mubr.bf16.gmra.mrb[0].mxu0 %v1124
        %v1296 = vpop.f32.mrb[0].mxu0
        %v1297 = vadd.f32 0.0, %v1296
        %v1298 = vpop.f32.mrb[0].mxu0
        %v1299 = vpop.f32.mrb[0].mxu0
        %v1300 = vadd.f32 0.0, %v1299
        %v1301 = vpop.f32.mrb[0].mxu0
        %1302 = vdwg.mxu0
        %v1303 = vadd.f32 %v871, %v1161
        %v1304 = vadd.f32 %v874, %v1164
        %v1305 = vadd.f32 %v879, %v1169
        %v1306 = vadd.f32 %v882, %v1172
        %v1307 = vadd.f32 %v887, %v1177
        %v1308 = vadd.f32 %v890, %v1180
        %v1309 = vadd.f32 %v895, %v1185
        %v1310 = vadd.f32 %v898, %v1188
        %v1311 = vadd.f32 %v903, %v1193
        %v1312 = vadd.f32 %v906, %v1196
        %v1313 = vadd.f32 %v911, %v1201
        %v1314 = vadd.f32 %v914, %v1204
        %v1315 = vadd.f32 %v919, %v1209
        %v1316 = vadd.f32 %v922, %v1212
        %v1317 = vadd.f32 %v927, %v1217
        %v1318 = vadd.f32 %v930, %v1220
        %v1319 = vadd.f32 %v935, %v1225
        %v1320 = vadd.f32 %v938, %v1228
        %v1321 = vadd.f32 %v943, %v1233
        %v1322 = vadd.f32 %v946, %v1236
        %v1323 = vadd.f32 %v951, %v1241
        %v1324 = vadd.f32 %v954, %v1244
        %v1325 = vadd.f32 %v959, %v1249
        %v1326 = vadd.f32 %v962, %v1252
        %v1327 = vadd.f32 %v967, %v1257
        %v1328 = vadd.f32 %v970, %v1260
        %v1329 = vadd.f32 %v975, %v1265
        %v1330 = vadd.f32 %v978, %v1268
        %v1331 = vadd.f32 %v983, %v1273
        %v1332 = vadd.f32 %v986, %v1276
        %v1333 = vadd.f32 %v991, %v1281
        %v1334 = vadd.f32 %v994, %v1284
        %v1335 = vadd.f32 %v999, %v1289
        %v1336 = vadd.f32 %v1002, %v1292
        %v1337 = vadd.f32 %v1007, %v1297
        %v1338 = vadd.f32 %v1010, %v1300
        %v1339 = vld [vmem:[%s244 + $0x8] sm:$0xe]
        %v1340 = vld [vmem:[%s244 + $0xc] sm:$0xf]
        %v1341 = vld [vmem:[%s244 + $0x10] sm:$0xf]
        %v1342 = vld [vmem:[%s244 + $0x14] sm:$0xf]
        %v1343 = vld [vmem:[%s244 + $0x18] sm:$0xf]
        %v1344 = vld [vmem:[%s244 + $0x1c] sm:$0xf]
        %v1345 = vld [vmem:[%s244 + $0x20] sm:$0xf]
        %v1346 = vld [vmem:[%s244 + $0x24] sm:$0xf]
        %v1347 = vld [vmem:[%s244 + $0x28] sm:$0xf]
        %v1348 = vld [vmem:[%s244 + $0x2c] sm:$0xf]
        %v1349 = vld [vmem:[%s244 + $0x30] sm:$0xf]
        %v1350 = vld [vmem:[%s244 + $0x34] sm:$0xf]
        %v1351 = vld [vmem:[%s244 + $0x38] sm:$0xf]
        %v1352 = vld [vmem:[%s244 + $0x3c] sm:$0xf]
        %v1353 = vld [vmem:[%s244 + $0x40] sm:$0xf]
        %v1354 = vld [vmem:[%s244 + $0x44] sm:$0xf]
        %v1355 = vld [vmem:[%s244 + $0x48] sm:$0xf]
        %v1356 = vld [vmem:[%s244 + $0x4c] sm:$0xf]
        %v1357 = vld [vmem:[%s244 + $0x50] sm:$0xf]
        %v1358 = vld [vmem:[%s244 + $0x54] sm:$0xf]
        %v1359 = vld [vmem:[%s244 + $0x58] sm:$0xf]
        %v1360 = vld [vmem:[%s244 + $0x5c] sm:$0xf]
        %v1361 = vld [vmem:[%s244 + $0x60] sm:$0xf]
        %v1362 = vld [vmem:[%s244 + $0x64] sm:$0xf]
        %v1363 = vld [vmem:[%s244 + $0x68] sm:$0xf]
        %v1364 = vld [vmem:[%s244 + $0x6c] sm:$0xf]
        %v1365 = vld [vmem:[%s244 + $0x70] sm:$0xf]
        %v1366 = vld [vmem:[%s244 + $0x74] sm:$0xf]
        %v1367 = vld [vmem:[%s244 + $0x78] sm:$0xf]
        %v1368 = vld [vmem:[%s244 + $0x7c] sm:$0xf]
        %v1369 = vld [vmem:[%s244 + $0x80] sm:$0xf]
        %v1370 = vld [vmem:[%s244 + $0x84] sm:$0xf]
        %v1371 = vld [vmem:[%s244 + $0x88] sm:$0xf]
        %v1372 = vld [vmem:[%s244 + $0x8c] sm:$0xf]
        %v1373 = vld [vmem:[%s244 + $0x90] sm:$0xf]
        %v1374 = vld [vmem:[%s244 + $0x94] sm:$0xf]
        %v1375 = vld [vmem:[%s244 + $0x98] sm:$0x1]
        %s1376 = scalar_lea.vmem %s248, 48
        %v1377 = vld [vmem:[%s1376] sm:$0xf]
        %v1378 = vld [vmem:[%s1376 + $0x4] sm:$0xf]
        %v1379 = vld [vmem:[%s1376 + $0x8] sm:$0xf]
        %v1380 = vld [vmem:[%s1376 + $0xc] sm:$0xf]
        %v1418 = vunpack.c.l.b16 %v1339
        %v1419 = vunpack.c.l.b16 %v1340
        %v1420 = vunpack.c.l.b16 %v1341
        %v1421 = vunpack.c.l.b16 %v1342
        %v1422 = vunpack.c.l.b16 %v1343
        %v1423 = vunpack.c.l.b16 %v1344
        %v1424 = vunpack.c.l.b16 %v1345
        %v1425 = vunpack.c.l.b16 %v1346
        %v1426 = vunpack.c.l.b16 %v1347
        %v1427 = vunpack.c.l.b16 %v1348
        %v1428 = vunpack.c.l.b16 %v1349
        %v1429 = vunpack.c.l.b16 %v1350
        %v1430 = vunpack.c.l.b16 %v1351
        %v1431 = vunpack.c.l.b16 %v1352
        %v1432 = vunpack.c.l.b16 %v1353
        %v1433 = vunpack.c.l.b16 %v1354
        %v1434 = vunpack.c.l.b16 %v1355
        %v1435 = vunpack.c.l.b16 %v1356
        %v1436 = vunpack.c.l.b16 %v1357
        %v1437 = vunpack.c.l.b16 %v1358
        %v1438 = vunpack.c.l.b16 %v1359
        %v1439 = vunpack.c.l.b16 %v1360
        %v1440 = vunpack.c.l.b16 %v1361
        %v1441 = vunpack.c.l.b16 %v1362
        %v1442 = vunpack.c.l.b16 %v1363
        %v1443 = vunpack.c.l.b16 %v1364
        %v1444 = vunpack.c.l.b16 %v1365
        %v1445 = vunpack.c.l.b16 %v1366
        %v1446 = vunpack.c.l.b16 %v1367
        %v1447 = vunpack.c.l.b16 %v1368
        %v1448 = vunpack.c.l.b16 %v1369
        %v1449 = vunpack.c.l.b16 %v1370
        %v1450 = vunpack.c.l.b16 %v1371
        %v1451 = vunpack.c.l.b16 %v1372
        %v1452 = vunpack.c.l.b16 %v1373
        %v1453 = vunpack.c.l.b16 %v1374
        %v1454 = vunpack.c.l.b16 %v1375
        %v1455 = vpack.c.b16 %v1419, %v1418
        %v1456 = vpack.c.b16 %v1421, %v1420
        %v1457 = vpack.c.b16 %v1423, %v1422
        %v1458 = vpack.c.b16 %v1425, %v1424
        %v1459 = vpack.c.b16 %v1427, %v1426
        %v1460 = vpack.c.b16 %v1429, %v1428
        %v1461 = vpack.c.b16 %v1431, %v1430
        %v1462 = vpack.c.b16 %v1433, %v1432
        %v1463 = vpack.c.b16 %v1435, %v1434
        %v1464 = vpack.c.b16 %v1437, %v1436
        %v1465 = vpack.c.b16 %v1439, %v1438
        %v1466 = vpack.c.b16 %v1441, %v1440
        %v1467 = vpack.c.b16 %v1443, %v1442
        %v1468 = vpack.c.b16 %v1445, %v1444
        %v1469 = vpack.c.b16 %v1447, %v1446
        %v1470 = vpack.c.b16 %v1449, %v1448
        %v1471 = vpack.c.b16 %v1451, %v1450
        %v1472 = vpack.c.b16 %v1453, %v1452
        %v1473 = vpack.c.b16 %v1454, %v1454
        %v1474 = vrot.slane %v1455, 1
        %v1475 = vrot.slane %v1456, 1
        %v1476 = vsel %vm1022, %v1474, %v1475
        %v1477 = vrot.slane %v1457, 1
        %v1478 = vsel %vm1022, %v1475, %v1477
        %v1479 = vrot.slane %v1458, 1
        %v1480 = vsel %vm1022, %v1477, %v1479
        %v1481 = vrot.slane %v1459, 1
        %v1482 = vsel %vm1022, %v1479, %v1481
        %v1483 = vrot.slane %v1460, 1
        %v1484 = vsel %vm1022, %v1481, %v1483
        %v1485 = vrot.slane %v1461, 1
        %v1486 = vsel %vm1022, %v1483, %v1485
        %v1487 = vrot.slane %v1462, 1
        %v1488 = vsel %vm1022, %v1485, %v1487
        %v1489 = vrot.slane %v1463, 1
        %v1490 = vsel %vm1022, %v1487, %v1489
        %v1491 = vrot.slane %v1464, 1
        %v1492 = vsel %vm1022, %v1489, %v1491
        %v1493 = vrot.slane %v1465, 1
        %v1494 = vsel %vm1022, %v1491, %v1493
        %v1495 = vrot.slane %v1466, 1
        %v1496 = vsel %vm1022, %v1493, %v1495
        %v1497 = vrot.slane %v1467, 1
        %v1498 = vsel %vm1022, %v1495, %v1497
        %v1499 = vrot.slane %v1468, 1
        %v1500 = vsel %vm1022, %v1497, %v1499
        %v1501 = vrot.slane %v1469, 1
        %v1502 = vsel %vm1022, %v1499, %v1501
        %v1503 = vrot.slane %v1470, 1
        %v1504 = vsel %vm1022, %v1501, %v1503
        %v1505 = vrot.slane %v1471, 1
        %v1506 = vsel %vm1022, %v1503, %v1505
        %v1507 = vrot.slane %v1472, 1
        %v1508 = vsel %vm1022, %v1505, %v1507
        %v1509 = vrot.slane %v1473, 1
        %v1510 = vsel %vm1022, %v1507, %v1509
        %v1515 = vunpack.c.l.b16 %v1377
        %v1516 = vunpack.c.l.b16 %v1378
        %v1517 = vunpack.c.l.b16 %v1379
        %v1518 = vunpack.c.l.b16 %v1380
        %v1519 = vpack.c.b16 %v1516, %v1515
        %v1520 = vpack.c.b16 %v1518, %v1517
        %v1524 = vsel %vm556, %v1476, 0
        %v1527 = vsel %vm556, %v1478, 0
        %v1530 = vsel %vm556, %v1480, 0
        %v1533 = vsel %vm556, %v1482, 0
        %v1536 = vsel %vm556, %v1484, 0
        %v1539 = vsel %vm556, %v1486, 0
        %v1542 = vsel %vm556, %v1488, 0
        %v1545 = vsel %vm556, %v1490, 0
        %v1548 = vsel %vm556, %v1492, 0
        %v1551 = vsel %vm556, %v1494, 0
        %v1554 = vsel %vm556, %v1496, 0
        %v1557 = vsel %vm556, %v1498, 0
        %v1560 = vsel %vm556, %v1500, 0
        %v1563 = vsel %vm556, %v1502, 0
        %v1566 = vsel %vm556, %v1504, 0
        %v1569 = vsel %vm556, %v1506, 0
        %v1572 = vsel %vm556, %v1508, 0
        %v1575 = vsel %vm556, %v1510, 0
        %1577 = vmatprep.subr.bf16.mxu0 0
        %1578 = vmatpush1.bf16.msra.mxu0 %v1519
        %1579 = vmatprep.subr.bf16.mxu0 0
        %1580 = vmatpush1.bf16.msra.mxu0 %v1520
        %1581 = vmatprep.subr.bf16.mxu0 0
        %1582 = vmatpush1.bf16.msra.mxu0 0
        %1583 = vmatprep.subr.bf16.mxu0 0
        %1584 = vmatpush1.bf16.msra.mxu0 0
        %1585 = vmatprep.subr.bf16.mxu0 0
        %1586 = vmatpush1.bf16.msra.mxu0 0
        %1587 = vmatprep.subr.bf16.mxu0 0
        %1588 = vmatpush1.bf16.msra.mxu0 0
        %1589 = vmatprep.subr.bf16.mxu0 0
        %1590 = vmatpush1.bf16.msra.mxu0 0
        %1591 = vmatprep.subr.bf16.mxu0 0
        %1592 = vmatpush1.bf16.msra.mxu0 0
        %1593 = vmatprep.subr.bf16.mxu0 0
        %1594 = vmatpush1.bf16.msra.mxu0 0
        %1595 = vmatprep.subr.bf16.mxu0 0
        %1596 = vmatpush1.bf16.msra.mxu0 0
        %1597 = vmatprep.subr.bf16.mxu0 0
        %1598 = vmatpush1.bf16.msra.mxu0 0
        %1599 = vmatprep.subr.bf16.mxu0 0
        %1600 = vmatpush1.bf16.msra.mxu0 0
        %1601 = vmatprep.subr.bf16.mxu0 0
        %1602 = vmatpush1.bf16.msra.mxu0 0
        %1603 = vmatprep.subr.bf16.mxu0 0
        %1604 = vmatpush1.bf16.msra.mxu0 0
        %1605 = vmatprep.subr.bf16.mxu0 0
        %1606 = vmatpush1.bf16.msra.mxu0 0
        %1607 = vmatprep.subr.bf16.mxu0 0
        %1608 = vmatpush1.bf16.msra.mxu0 0
        %1609 = vmatprep.mubr.bf16.mxu0 0
        %1610 = vmatmul.mubr.bf16.gmra.mrb[0].mxu0 %v1524
        %v1611 = vpop.f32.mrb[0].mxu0
        %v1612 = vadd.f32 0.0, %v1611
        %v1613 = vpop.f32.mrb[0].mxu0
        %v1614 = vpop.f32.mrb[0].mxu0
        %v1615 = vadd.f32 0.0, %v1614
        %v1616 = vpop.f32.mrb[0].mxu0
        %1617 = vmatprep.mubr.bf16.mxu0 0
        %1618 = vmatmul.mubr.bf16.gmra.mrb[0].mxu0 %v1527
        %v1619 = vpop.f32.mrb[0].mxu0
        %v1620 = vadd.f32 0.0, %v1619
        %v1621 = vpop.f32.mrb[0].mxu0
        %v1622 = vpop.f32.mrb[0].mxu0
        %v1623 = vadd.f32 0.0, %v1622
        %v1624 = vpop.f32.mrb[0].mxu0
        %1625 = vmatprep.mubr.bf16.mxu0 0
        %1626 = vmatmul.mubr.bf16.gmra.mrb[0].mxu0 %v1530
        %v1627 = vpop.f32.mrb[0].mxu0
        %v1628 = vadd.f32 0.0, %v1627
        %v1629 = vpop.f32.mrb[0].mxu0
        %v1630 = vpop.f32.mrb[0].mxu0
        %v1631 = vadd.f32 0.0, %v1630
        %v1632 = vpop.f32.mrb[0].mxu0
        %1633 = vmatprep.mubr.bf16.mxu0 0
        %1634 = vmatmul.mubr.bf16.gmra.mrb[0].mxu0 %v1533
        %v1635 = vpop.f32.mrb[0].mxu0
        %v1636 = vadd.f32 0.0, %v1635
        %v1637 = vpop.f32.mrb[0].mxu0
        %v1638 = vpop.f32.mrb[0].mxu0
        %v1639 = vadd.f32 0.0, %v1638
        %v1640 = vpop.f32.mrb[0].mxu0
        %1641 = vmatprep.mubr.bf16.mxu0 0
        %1642 = vmatmul.mubr.bf16.gmra.mrb[0].mxu0 %v1536
        %v1643 = vpop.f32.mrb[0].mxu0
        %v1644 = vadd.f32 0.0, %v1643
        %v1645 = vpop.f32.mrb[0].mxu0
        %v1646 = vpop.f32.mrb[0].mxu0
        %v1647 = vadd.f32 0.0, %v1646
        %v1648 = vpop.f32.mrb[0].mxu0
        %1649 = vmatprep.mubr.bf16.mxu0 0
        %1650 = vmatmul.mubr.bf16.gmra.mrb[0].mxu0 %v1539
        %v1651 = vpop.f32.mrb[0].mxu0
        %v1652 = vadd.f32 0.0, %v1651
        %v1653 = vpop.f32.mrb[0].mxu0
        %v1654 = vpop.f32.mrb[0].mxu0
        %v1655 = vadd.f32 0.0, %v1654
        %v1656 = vpop.f32.mrb[0].mxu0
        %1657 = vmatprep.mubr.bf16.mxu0 0
        %1658 = vmatmul.mubr.bf16.gmra.mrb[0].mxu0 %v1542
        %v1659 = vpop.f32.mrb[0].mxu0
        %v1660 = vadd.f32 0.0, %v1659
        %v1661 = vpop.f32.mrb[0].mxu0
        %v1662 = vpop.f32.mrb[0].mxu0
        %v1663 = vadd.f32 0.0, %v1662
        %v1664 = vpop.f32.mrb[0].mxu0
        %1665 = vmatprep.mubr.bf16.mxu0 0
        %1666 = vmatmul.mubr.bf16.gmra.mrb[0].mxu0 %v1545
        %v1667 = vpop.f32.mrb[0].mxu0
        %v1668 = vadd.f32 0.0, %v1667
        %v1669 = vpop.f32.mrb[0].mxu0
        %v1670 = vpop.f32.mrb[0].mxu0
        %v1671 = vadd.f32 0.0, %v1670
        %v1672 = vpop.f32.mrb[0].mxu0
        %1673 = vmatprep.mubr.bf16.mxu0 0
        %1674 = vmatmul.mubr.bf16.gmra.mrb[0].mxu0 %v1548
        %v1675 = vpop.f32.mrb[0].mxu0
        %v1676 = vadd.f32 0.0, %v1675
        %v1677 = vpop.f32.mrb[0].mxu0
        %v1678 = vpop.f32.mrb[0].mxu0
        %v1679 = vadd.f32 0.0, %v1678
        %v1680 = vpop.f32.mrb[0].mxu0
        %1681 = vmatprep.mubr.bf16.mxu0 0
        %1682 = vmatmul.mubr.bf16.gmra.mrb[0].mxu0 %v1551
        %v1683 = vpop.f32.mrb[0].mxu0
        %v1684 = vadd.f32 0.0, %v1683
        %v1685 = vpop.f32.mrb[0].mxu0
        %v1686 = vpop.f32.mrb[0].mxu0
        %v1687 = vadd.f32 0.0, %v1686
        %v1688 = vpop.f32.mrb[0].mxu0
        %1689 = vmatprep.mubr.bf16.mxu0 0
        %1690 = vmatmul.mubr.bf16.gmra.mrb[0].mxu0 %v1554
        %v1691 = vpop.f32.mrb[0].mxu0
        %v1692 = vadd.f32 0.0, %v1691
        %v1693 = vpop.f32.mrb[0].mxu0
        %v1694 = vpop.f32.mrb[0].mxu0
        %v1695 = vadd.f32 0.0, %v1694
        %v1696 = vpop.f32.mrb[0].mxu0
        %1697 = vmatprep.mubr.bf16.mxu0 0
        %1698 = vmatmul.mubr.bf16.gmra.mrb[0].mxu0 %v1557
        %v1699 = vpop.f32.mrb[0].mxu0
        %v1700 = vadd.f32 0.0, %v1699
        %v1701 = vpop.f32.mrb[0].mxu0
        %v1702 = vpop.f32.mrb[0].mxu0
        %v1703 = vadd.f32 0.0, %v1702
        %v1704 = vpop.f32.mrb[0].mxu0
        %1705 = vmatprep.mubr.bf16.mxu0 0
        %1706 = vmatmul.mubr.bf16.gmra.mrb[0].mxu0 %v1560
        %v1707 = vpop.f32.mrb[0].mxu0
        %v1708 = vadd.f32 0.0, %v1707
        %v1709 = vpop.f32.mrb[0].mxu0
        %v1710 = vpop.f32.mrb[0].mxu0
        %v1711 = vadd.f32 0.0, %v1710
        %v1712 = vpop.f32.mrb[0].mxu0
        %1713 = vmatprep.mubr.bf16.mxu0 0
        %1714 = vmatmul.mubr.bf16.gmra.mrb[0].mxu0 %v1563
        %v1715 = vpop.f32.mrb[0].mxu0
        %v1716 = vadd.f32 0.0, %v1715
        %v1717 = vpop.f32.mrb[0].mxu0
        %v1718 = vpop.f32.mrb[0].mxu0
        %v1719 = vadd.f32 0.0, %v1718
        %v1720 = vpop.f32.mrb[0].mxu0
        %1721 = vmatprep.mubr.bf16.mxu0 0
        %1722 = vmatmul.mubr.bf16.gmra.mrb[0].mxu0 %v1566
        %v1723 = vpop.f32.mrb[0].mxu0
        %v1724 = vadd.f32 0.0, %v1723
        %v1725 = vpop.f32.mrb[0].mxu0
        %v1726 = vpop.f32.mrb[0].mxu0
        %v1727 = vadd.f32 0.0, %v1726
        %v1728 = vpop.f32.mrb[0].mxu0
        %1729 = vmatprep.mubr.bf16.mxu0 0
        %1730 = vmatmul.mubr.bf16.gmra.mrb[0].mxu0 %v1569
        %v1731 = vpop.f32.mrb[0].mxu0
        %v1732 = vadd.f32 0.0, %v1731
        %v1733 = vpop.f32.mrb[0].mxu0
        %v1734 = vpop.f32.mrb[0].mxu0
        %v1735 = vadd.f32 0.0, %v1734
        %v1736 = vpop.f32.mrb[0].mxu0
        %1737 = vmatprep.mubr.bf16.mxu0 0
        %1738 = vmatmul.mubr.bf16.gmra.mrb[0].mxu0 %v1572
        %v1739 = vpop.f32.mrb[0].mxu0
        %v1740 = vadd.f32 0.0, %v1739
        %v1741 = vpop.f32.mrb[0].mxu0
        %v1742 = vpop.f32.mrb[0].mxu0
        %v1743 = vadd.f32 0.0, %v1742
        %v1744 = vpop.f32.mrb[0].mxu0
        %1745 = vmatprep.mubr.bf16.mxu0 0
        %1746 = vmatmul.mubr.bf16.gmra.mrb[0].mxu0 %v1575
        %v1747 = vpop.f32.mrb[0].mxu0
        %v1748 = vadd.f32 0.0, %v1747
        %v1749 = vpop.f32.mrb[0].mxu0
        %v1750 = vpop.f32.mrb[0].mxu0
        %v1751 = vadd.f32 0.0, %v1750
        %v1752 = vpop.f32.mrb[0].mxu0
        %1753 = vdwg.mxu0
        %v1754 = vadd.f32 %v1303, %v1612
        %v1755 = vadd.f32 %v1304, %v1615
        %v1756 = vadd.f32 %v1305, %v1620
        %v1757 = vadd.f32 %v1306, %v1623
        %v1758 = vadd.f32 %v1307, %v1628
        %v1759 = vadd.f32 %v1308, %v1631
        %v1760 = vadd.f32 %v1309, %v1636
        %v1761 = vadd.f32 %v1310, %v1639
        %v1762 = vadd.f32 %v1311, %v1644
        %v1763 = vadd.f32 %v1312, %v1647
        %v1764 = vadd.f32 %v1313, %v1652
        %v1765 = vadd.f32 %v1314, %v1655
        %v1766 = vadd.f32 %v1315, %v1660
        %v1767 = vadd.f32 %v1316, %v1663
        %v1768 = vadd.f32 %v1317, %v1668
        %v1769 = vadd.f32 %v1318, %v1671
        %v1770 = vadd.f32 %v1319, %v1676
        %v1771 = vadd.f32 %v1320, %v1679
        %v1772 = vadd.f32 %v1321, %v1684
        %v1773 = vadd.f32 %v1322, %v1687
        %v1774 = vadd.f32 %v1323, %v1692
        %v1775 = vadd.f32 %v1324, %v1695
        %v1776 = vadd.f32 %v1325, %v1700
        %v1777 = vadd.f32 %v1326, %v1703
        %v1778 = vadd.f32 %v1327, %v1708
        %v1779 = vadd.f32 %v1328, %v1711
        %v1780 = vadd.f32 %v1329, %v1716
        %v1781 = vadd.f32 %v1330, %v1719
        %v1782 = vadd.f32 %v1331, %v1724
        %v1783 = vadd.f32 %v1332, %v1727
        %v1784 = vadd.f32 %v1333, %v1732
        %v1785 = vadd.f32 %v1334, %v1735
        %v1786 = vadd.f32 %v1335, %v1740
        %v1787 = vadd.f32 %v1336, %v1743
        %v1788 = vadd.f32 %v1337, %v1748
        %v1789 = vadd.f32 %v1338, %v1751
        %v1790 = vld [vmem:[%s244 + $0x98] sm:$0x3]
        %s1791 = scalar_lea.vmem %s248, 64
        %v1792 = vld [vmem:[%s1791] sm:$0xf]
        %v1793 = vld [vmem:[%s1791 + $0x4] sm:$0xf]
        %v1794 = vld [vmem:[%s1791 + $0x8] sm:$0xf]
        %v1795 = vld [vmem:[%s1791 + $0xc] sm:$0xf]
        %v1797 = vunpack.c.l.b16 %v1790
        %v1798 = vpack.c.b16 %v1797, %v1797
        %vm1799 = vsmask.f32 6400
        %v1801 = vshrl.u32 %v1455, 16
        %v1803 = vrot.slane %v1801, 1
        %v1804 = vshll.u32 %v1455, 16
        %v1806 = vrot.slane %v1804, 2
        %v1807 = vor.u32 %v1803, %v1806
        %v1809 = vshrl.u32 %v1456, 16
        %v1811 = vrot.slane %v1809, 1
        %v1812 = vshll.u32 %v1456, 16
        %v1814 = vrot.slane %v1812, 2
        %v1815 = vor.u32 %v1811, %v1814
        %v1816 = vsel %vm1799, %v1807, %v1815
        %v1818 = vshrl.u32 %v1457, 16
        %v1820 = vrot.slane %v1818, 1
        %v1821 = vshll.u32 %v1457, 16
        %v1823 = vrot.slane %v1821, 2
        %v1824 = vor.u32 %v1820, %v1823
        %v1825 = vsel %vm1799, %v1815, %v1824
        %v1827 = vshrl.u32 %v1458, 16
        %v1829 = vrot.slane %v1827, 1
        %v1830 = vshll.u32 %v1458, 16
        %v1832 = vrot.slane %v1830, 2
        %v1833 = vor.u32 %v1829, %v1832
        %v1834 = vsel %vm1799, %v1824, %v1833
        %v1836 = vshrl.u32 %v1459, 16
        %v1838 = vrot.slane %v1836, 1
        %v1839 = vshll.u32 %v1459, 16
        %v1841 = vrot.slane %v1839, 2
        %v1842 = vor.u32 %v1838, %v1841
        %v1843 = vsel %vm1799, %v1833, %v1842
        %v1845 = vshrl.u32 %v1460, 16
        %v1847 = vrot.slane %v1845, 1
        %v1848 = vshll.u32 %v1460, 16
        %v1850 = vrot.slane %v1848, 2
        %v1851 = vor.u32 %v1847, %v1850
        %v1852 = vsel %vm1799, %v1842, %v1851
        %v1854 = vshrl.u32 %v1461, 16
        %v1856 = vrot.slane %v1854, 1
        %v1857 = vshll.u32 %v1461, 16
        %v1859 = vrot.slane %v1857, 2
        %v1860 = vor.u32 %v1856, %v1859
        %v1861 = vsel %vm1799, %v1851, %v1860
        %v1863 = vshrl.u32 %v1462, 16
        %v1865 = vrot.slane %v1863, 1
        %v1866 = vshll.u32 %v1462, 16
        %v1868 = vrot.slane %v1866, 2
        %v1869 = vor.u32 %v1865, %v1868
        %v1870 = vsel %vm1799, %v1860, %v1869
        %v1872 = vshrl.u32 %v1463, 16
        %v1874 = vrot.slane %v1872, 1
        %v1875 = vshll.u32 %v1463, 16
        %v1877 = vrot.slane %v1875, 2
        %v1878 = vor.u32 %v1874, %v1877
        %v1879 = vsel %vm1799, %v1869, %v1878
        %v1881 = vshrl.u32 %v1464, 16
        %v1883 = vrot.slane %v1881, 1
        %v1884 = vshll.u32 %v1464, 16
        %v1886 = vrot.slane %v1884, 2
        %v1887 = vor.u32 %v1883, %v1886
        %v1888 = vsel %vm1799, %v1878, %v1887
        %v1890 = vshrl.u32 %v1465, 16
        %v1892 = vrot.slane %v1890, 1
        %v1893 = vshll.u32 %v1465, 16
        %v1895 = vrot.slane %v1893, 2
        %v1896 = vor.u32 %v1892, %v1895
        %v1897 = vsel %vm1799, %v1887, %v1896
        %v1899 = vshrl.u32 %v1466, 16
        %v1901 = vrot.slane %v1899, 1
        %v1902 = vshll.u32 %v1466, 16
        %v1904 = vrot.slane %v1902, 2
        %v1905 = vor.u32 %v1901, %v1904
        %v1906 = vsel %vm1799, %v1896, %v1905
        %v1908 = vshrl.u32 %v1467, 16
        %v1910 = vrot.slane %v1908, 1
        %v1911 = vshll.u32 %v1467, 16
        %v1913 = vrot.slane %v1911, 2
        %v1914 = vor.u32 %v1910, %v1913
        %v1915 = vsel %vm1799, %v1905, %v1914
        %v1917 = vshrl.u32 %v1468, 16
        %v1919 = vrot.slane %v1917, 1
        %v1920 = vshll.u32 %v1468, 16
        %v1922 = vrot.slane %v1920, 2
        %v1923 = vor.u32 %v1919, %v1922
        %v1924 = vsel %vm1799, %v1914, %v1923
        %v1926 = vshrl.u32 %v1469, 16
        %v1928 = vrot.slane %v1926, 1
        %v1929 = vshll.u32 %v1469, 16
        %v1931 = vrot.slane %v1929, 2
        %v1932 = vor.u32 %v1928, %v1931
        %v1933 = vsel %vm1799, %v1923, %v1932
        %v1935 = vshrl.u32 %v1470, 16
        %v1937 = vrot.slane %v1935, 1
        %v1938 = vshll.u32 %v1470, 16
        %v1940 = vrot.slane %v1938, 2
        %v1941 = vor.u32 %v1937, %v1940
        %v1942 = vsel %vm1799, %v1932, %v1941
        %v1944 = vshrl.u32 %v1471, 16
        %v1946 = vrot.slane %v1944, 1
        %v1947 = vshll.u32 %v1471, 16
        %v1949 = vrot.slane %v1947, 2
        %v1950 = vor.u32 %v1946, %v1949
        %v1951 = vsel %vm1799, %v1941, %v1950
        %v1953 = vshrl.u32 %v1472, 16
        %v1955 = vrot.slane %v1953, 1
        %v1956 = vshll.u32 %v1472, 16
        %v1958 = vrot.slane %v1956, 2
        %v1959 = vor.u32 %v1955, %v1958
        %v1960 = vsel %vm1799, %v1950, %v1959
        %v1962 = vshrl.u32 %v1798, 16
        %v1964 = vrot.slane %v1962, 1
        %v1965 = vshll.u32 %v1798, 16
        %v1967 = vrot.slane %v1965, 2
        %v1968 = vor.u32 %v1964, %v1967
        %v1969 = vsel %vm1799, %v1959, %v1968
        %v1974 = vunpack.c.l.b16 %v1792
        %v1975 = vunpack.c.l.b16 %v1793
        %v1976 = vunpack.c.l.b16 %v1794
        %v1977 = vunpack.c.l.b16 %v1795
        %v1978 = vpack.c.b16 %v1975, %v1974
        %v1979 = vpack.c.b16 %v1977, %v1976
        %v1983 = vsel %vm556, %v1816, 0
        %v1986 = vsel %vm556, %v1825, 0
        %v1989 = vsel %vm556, %v1834, 0
        %v1992 = vsel %vm556, %v1843, 0
        %v1995 = vsel %vm556, %v1852, 0
        %v1998 = vsel %vm556, %v1861, 0
        %v2001 = vsel %vm556, %v1870, 0
        %v2004 = vsel %vm556, %v1879, 0
        %v2007 = vsel %vm556, %v1888, 0
        %v2010 = vsel %vm556, %v1897, 0
        %v2013 = vsel %vm556, %v1906, 0
        %v2016 = vsel %vm556, %v1915, 0
        %v2019 = vsel %vm556, %v1924, 0
        %v2022 = vsel %vm556, %v1933, 0
        %v2025 = vsel %vm556, %v1942, 0
        %v2028 = vsel %vm556, %v1951, 0
        %v2031 = vsel %vm556, %v1960, 0
        %v2034 = vsel %vm556, %v1969, 0
        %2036 = vmatprep.subr.bf16.mxu0 0
        %2037 = vmatpush1.bf16.msra.mxu0 %v1978
        %2038 = vmatprep.subr.bf16.mxu0 0
        %2039 = vmatpush1.bf16.msra.mxu0 %v1979
        %2040 = vmatprep.subr.bf16.mxu0 0
        %2041 = vmatpush1.bf16.msra.mxu0 0
        %2042 = vmatprep.subr.bf16.mxu0 0
        %2043 = vmatpush1.bf16.msra.mxu0 0
        %2044 = vmatprep.subr.bf16.mxu0 0
        %2045 = vmatpush1.bf16.msra.mxu0 0
        %2046 = vmatprep.subr.bf16.mxu0 0
        %2047 = vmatpush1.bf16.msra.mxu0 0
        %2048 = vmatprep.subr.bf16.mxu0 0
        %2049 = vmatpush1.bf16.msra.mxu0 0
        %2050 = vmatprep.subr.bf16.mxu0 0
        %2051 = vmatpush1.bf16.msra.mxu0 0
        %2052 = vmatprep.subr.bf16.mxu0 0
        %2053 = vmatpush1.bf16.msra.mxu0 0
        %2054 = vmatprep.subr.bf16.mxu0 0
        %2055 = vmatpush1.bf16.msra.mxu0 0
        %2056 = vmatprep.subr.bf16.mxu0 0
        %2057 = vmatpush1.bf16.msra.mxu0 0
        %2058 = vmatprep.subr.bf16.mxu0 0
        %2059 = vmatpush1.bf16.msra.mxu0 0
        %2060 = vmatprep.subr.bf16.mxu0 0
        %2061 = vmatpush1.bf16.msra.mxu0 0
        %2062 = vmatprep.subr.bf16.mxu0 0
        %2063 = vmatpush1.bf16.msra.mxu0 0
        %2064 = vmatprep.subr.bf16.mxu0 0
        %2065 = vmatpush1.bf16.msra.mxu0 0
        %2066 = vmatprep.subr.bf16.mxu0 0
        %2067 = vmatpush1.bf16.msra.mxu0 0
        %2068 = vmatprep.mubr.bf16.mxu0 0
        %2069 = vmatmul.mubr.bf16.gmra.mrb[0].mxu0 %v1983
        %v2070 = vpop.f32.mrb[0].mxu0
        %v2071 = vadd.f32 0.0, %v2070
        %v2072 = vpop.f32.mrb[0].mxu0
        %v2073 = vpop.f32.mrb[0].mxu0
        %v2074 = vadd.f32 0.0, %v2073
        %v2075 = vpop.f32.mrb[0].mxu0
        %2076 = vmatprep.mubr.bf16.mxu0 0
        %2077 = vmatmul.mubr.bf16.gmra.mrb[0].mxu0 %v1986
        %v2078 = vpop.f32.mrb[0].mxu0
        %v2079 = vadd.f32 0.0, %v2078
        %v2080 = vpop.f32.mrb[0].mxu0
        %v2081 = vpop.f32.mrb[0].mxu0
        %v2082 = vadd.f32 0.0, %v2081
        %v2083 = vpop.f32.mrb[0].mxu0
        %2084 = vmatprep.mubr.bf16.mxu0 0
        %2085 = vmatmul.mubr.bf16.gmra.mrb[0].mxu0 %v1989
        %v2086 = vpop.f32.mrb[0].mxu0
        %v2087 = vadd.f32 0.0, %v2086
        %v2088 = vpop.f32.mrb[0].mxu0
        %v2089 = vpop.f32.mrb[0].mxu0
        %v2090 = vadd.f32 0.0, %v2089
        %v2091 = vpop.f32.mrb[0].mxu0
        %2092 = vmatprep.mubr.bf16.mxu0 0
        %2093 = vmatmul.mubr.bf16.gmra.mrb[0].mxu0 %v1992
        %v2094 = vpop.f32.mrb[0].mxu0
        %v2095 = vadd.f32 0.0, %v2094
        %v2096 = vpop.f32.mrb[0].mxu0
        %v2097 = vpop.f32.mrb[0].mxu0
        %v2098 = vadd.f32 0.0, %v2097
        %v2099 = vpop.f32.mrb[0].mxu0
        %2100 = vmatprep.mubr.bf16.mxu0 0
        %2101 = vmatmul.mubr.bf16.gmra.mrb[0].mxu0 %v1995
        %v2102 = vpop.f32.mrb[0].mxu0
        %v2103 = vadd.f32 0.0, %v2102
        %v2104 = vpop.f32.mrb[0].mxu0
        %v2105 = vpop.f32.mrb[0].mxu0
        %v2106 = vadd.f32 0.0, %v2105
        %v2107 = vpop.f32.mrb[0].mxu0
        %2108 = vmatprep.mubr.bf16.mxu0 0
        %2109 = vmatmul.mubr.bf16.gmra.mrb[0].mxu0 %v1998
        %v2110 = vpop.f32.mrb[0].mxu0
        %v2111 = vadd.f32 0.0, %v2110
        %v2112 = vpop.f32.mrb[0].mxu0
        %v2113 = vpop.f32.mrb[0].mxu0
        %v2114 = vadd.f32 0.0, %v2113
        %v2115 = vpop.f32.mrb[0].mxu0
        %2116 = vmatprep.mubr.bf16.mxu0 0
        %2117 = vmatmul.mubr.bf16.gmra.mrb[0].mxu0 %v2001
        %v2118 = vpop.f32.mrb[0].mxu0
        %v2119 = vadd.f32 0.0, %v2118
        %v2120 = vpop.f32.mrb[0].mxu0
        %v2121 = vpop.f32.mrb[0].mxu0
        %v2122 = vadd.f32 0.0, %v2121
        %v2123 = vpop.f32.mrb[0].mxu0
        %2124 = vmatprep.mubr.bf16.mxu0 0
        %2125 = vmatmul.mubr.bf16.gmra.mrb[0].mxu0 %v2004
        %v2126 = vpop.f32.mrb[0].mxu0
        %v2127 = vadd.f32 0.0, %v2126
        %v2128 = vpop.f32.mrb[0].mxu0
        %v2129 = vpop.f32.mrb[0].mxu0
        %v2130 = vadd.f32 0.0, %v2129
        %v2131 = vpop.f32.mrb[0].mxu0
        %2132 = vmatprep.mubr.bf16.mxu0 0
        %2133 = vmatmul.mubr.bf16.gmra.mrb[0].mxu0 %v2007
        %v2134 = vpop.f32.mrb[0].mxu0
        %v2135 = vadd.f32 0.0, %v2134
        %v2136 = vpop.f32.mrb[0].mxu0
        %v2137 = vpop.f32.mrb[0].mxu0
        %v2138 = vadd.f32 0.0, %v2137
        %v2139 = vpop.f32.mrb[0].mxu0
        %2140 = vmatprep.mubr.bf16.mxu0 0
        %2141 = vmatmul.mubr.bf16.gmra.mrb[0].mxu0 %v2010
        %v2142 = vpop.f32.mrb[0].mxu0
        %v2143 = vadd.f32 0.0, %v2142
        %v2144 = vpop.f32.mrb[0].mxu0
        %v2145 = vpop.f32.mrb[0].mxu0
        %v2146 = vadd.f32 0.0, %v2145
        %v2147 = vpop.f32.mrb[0].mxu0
        %2148 = vmatprep.mubr.bf16.mxu0 0
        %2149 = vmatmul.mubr.bf16.gmra.mrb[0].mxu0 %v2013
        %v2150 = vpop.f32.mrb[0].mxu0
        %v2151 = vadd.f32 0.0, %v2150
        %v2152 = vpop.f32.mrb[0].mxu0
        %v2153 = vpop.f32.mrb[0].mxu0
        %v2154 = vadd.f32 0.0, %v2153
        %v2155 = vpop.f32.mrb[0].mxu0
        %2156 = vmatprep.mubr.bf16.mxu0 0
        %2157 = vmatmul.mubr.bf16.gmra.mrb[0].mxu0 %v2016
        %v2158 = vpop.f32.mrb[0].mxu0
        %v2159 = vadd.f32 0.0, %v2158
        %v2160 = vpop.f32.mrb[0].mxu0
        %v2161 = vpop.f32.mrb[0].mxu0
        %v2162 = vadd.f32 0.0, %v2161
        %v2163 = vpop.f32.mrb[0].mxu0
        %2164 = vmatprep.mubr.bf16.mxu0 0
        %2165 = vmatmul.mubr.bf16.gmra.mrb[0].mxu0 %v2019
        %v2166 = vpop.f32.mrb[0].mxu0
        %v2167 = vadd.f32 0.0, %v2166
        %v2168 = vpop.f32.mrb[0].mxu0
        %v2169 = vpop.f32.mrb[0].mxu0
        %v2170 = vadd.f32 0.0, %v2169
        %v2171 = vpop.f32.mrb[0].mxu0
        %2172 = vmatprep.mubr.bf16.mxu0 0
        %2173 = vmatmul.mubr.bf16.gmra.mrb[0].mxu0 %v2022
        %v2174 = vpop.f32.mrb[0].mxu0
        %v2175 = vadd.f32 0.0, %v2174
        %v2176 = vpop.f32.mrb[0].mxu0
        %v2177 = vpop.f32.mrb[0].mxu0
        %v2178 = vadd.f32 0.0, %v2177
        %v2179 = vpop.f32.mrb[0].mxu0
        %2180 = vmatprep.mubr.bf16.mxu0 0
        %2181 = vmatmul.mubr.bf16.gmra.mrb[0].mxu0 %v2025
        %v2182 = vpop.f32.mrb[0].mxu0
        %v2183 = vadd.f32 0.0, %v2182
        %v2184 = vpop.f32.mrb[0].mxu0
        %v2185 = vpop.f32.mrb[0].mxu0
        %v2186 = vadd.f32 0.0, %v2185
        %v2187 = vpop.f32.mrb[0].mxu0
        %2188 = vmatprep.mubr.bf16.mxu0 0
        %2189 = vmatmul.mubr.bf16.gmra.mrb[0].mxu0 %v2028
        %v2190 = vpop.f32.mrb[0].mxu0
        %v2191 = vadd.f32 0.0, %v2190
        %v2192 = vpop.f32.mrb[0].mxu0
        %v2193 = vpop.f32.mrb[0].mxu0
        %v2194 = vadd.f32 0.0, %v2193
        %v2195 = vpop.f32.mrb[0].mxu0
        %2196 = vmatprep.mubr.bf16.mxu0 0
        %2197 = vmatmul.mubr.bf16.gmra.mrb[0].mxu0 %v2031
        %v2198 = vpop.f32.mrb[0].mxu0
        %v2199 = vadd.f32 0.0, %v2198
        %v2200 = vpop.f32.mrb[0].mxu0
        %v2201 = vpop.f32.mrb[0].mxu0
        %v2202 = vadd.f32 0.0, %v2201
        %v2203 = vpop.f32.mrb[0].mxu0
        %2204 = vmatprep.mubr.bf16.mxu0 0
        %2205 = vmatmul.mubr.bf16.gmra.mrb[0].mxu0 %v2034
        %v2206 = vpop.f32.mrb[0].mxu0
        %v2207 = vadd.f32 0.0, %v2206
        %v2208 = vpop.f32.mrb[0].mxu0
        %v2209 = vpop.f32.mrb[0].mxu0
        %v2210 = vadd.f32 0.0, %v2209
        %v2211 = vpop.f32.mrb[0].mxu0
        %2212 = vdwg.mxu0
        %v2213 = vadd.f32 %v1754, %v2071
        %v2214 = vadd.f32 %v1755, %v2074
        %v2215 = vadd.f32 %v1756, %v2079
        %v2216 = vadd.f32 %v1757, %v2082
        %v2217 = vadd.f32 %v1758, %v2087
        %v2218 = vadd.f32 %v1759, %v2090
        %v2219 = vadd.f32 %v1760, %v2095
        %v2220 = vadd.f32 %v1761, %v2098
        %v2221 = vadd.f32 %v1762, %v2103
        %v2222 = vadd.f32 %v1763, %v2106
        %v2223 = vadd.f32 %v1764, %v2111
        %v2224 = vadd.f32 %v1765, %v2114
        %v2225 = vadd.f32 %v1766, %v2119
        %v2226 = vadd.f32 %v1767, %v2122
        %v2227 = vadd.f32 %v1768, %v2127
        %v2228 = vadd.f32 %v1769, %v2130
        %v2229 = vadd.f32 %v1770, %v2135
        %v2230 = vadd.f32 %v1771, %v2138
        %v2231 = vadd.f32 %v1772, %v2143
        %v2232 = vadd.f32 %v1773, %v2146
        %v2233 = vadd.f32 %v1774, %v2151
        %v2234 = vadd.f32 %v1775, %v2154
        %v2235 = vadd.f32 %v1776, %v2159
        %v2236 = vadd.f32 %v1777, %v2162
        %v2237 = vadd.f32 %v1778, %v2167
        %v2238 = vadd.f32 %v1779, %v2170
        %v2239 = vadd.f32 %v1780, %v2175
        %v2240 = vadd.f32 %v1781, %v2178
        %v2241 = vadd.f32 %v1782, %v2183
        %v2242 = vadd.f32 %v1783, %v2186
        %v2243 = vadd.f32 %v1784, %v2191
        %v2244 = vadd.f32 %v1785, %v2194
        %v2245 = vadd.f32 %v1786, %v2199
        %v2246 = vadd.f32 %v1787, %v2202
        %v2247 = vadd.f32 %v1788, %v2207
        %v2248 = vadd.f32 %v1789, %v2210
        %v2249 = vld [vmem:[%s244 + $0x8] sm:$0xc]
        %s2250 = scalar_lea.vmem %s248, 80
        %v2251 = vld [vmem:[%s2250] sm:$0xf]
        %v2252 = vld [vmem:[%s2250 + $0x4] sm:$0xf]
        %v2253 = vld [vmem:[%s2250 + $0x8] sm:$0xf]
        %v2254 = vld [vmem:[%s2250 + $0xc] sm:$0xf]
        %v2256 = vunpack.c.l.b16 %v2249
        %v2257 = vpack.c.b16 %v1419, %v2256
        %vm2258 = vcmask 1045504
        %v2259 = vrot.slane %v2257, 2
        %v2260 = vrot.slane %v1456, 2
        %v2261 = vsel %vm2258, %v2259, %v2260
        %v2262 = vrot.slane %v1457, 2
        %v2263 = vsel %vm2258, %v2260, %v2262
        %v2264 = vrot.slane %v1458, 2
        %v2265 = vsel %vm2258, %v2262, %v2264
        %v2266 = vrot.slane %v1459, 2
        %v2267 = vsel %vm2258, %v2264, %v2266
        %v2268 = vrot.slane %v1460, 2
        %v2269 = vsel %vm2258, %v2266, %v2268
        %v2270 = vrot.slane %v1461, 2
        %v2271 = vsel %vm2258, %v2268, %v2270
        %v2272 = vrot.slane %v1462, 2
        %v2273 = vsel %vm2258, %v2270, %v2272
        %v2274 = vrot.slane %v1463, 2
        %v2275 = vsel %vm2258, %v2272, %v2274
        %v2276 = vrot.slane %v1464, 2
        %v2277 = vsel %vm2258, %v2274, %v2276
        %v2278 = vrot.slane %v1465, 2
        %v2279 = vsel %vm2258, %v2276, %v2278
        %v2280 = vrot.slane %v1466, 2
        %v2281 = vsel %vm2258, %v2278, %v2280
        %v2282 = vrot.slane %v1467, 2
        %v2283 = vsel %vm2258, %v2280, %v2282
        %v2284 = vrot.slane %v1468, 2
        %v2285 = vsel %vm2258, %v2282, %v2284
        %v2286 = vrot.slane %v1469, 2
        %v2287 = vsel %vm2258, %v2284, %v2286
        %v2288 = vrot.slane %v1470, 2
        %v2289 = vsel %vm2258, %v2286, %v2288
        %v2290 = vrot.slane %v1471, 2
        %v2291 = vsel %vm2258, %v2288, %v2290
        %v2292 = vrot.slane %v1472, 2
        %v2293 = vsel %vm2258, %v2290, %v2292
        %v2294 = vrot.slane %v1798, 2
        %v2295 = vsel %vm2258, %v2292, %v2294
        %v2300 = vunpack.c.l.b16 %v2251
        %v2301 = vunpack.c.l.b16 %v2252
        %v2302 = vunpack.c.l.b16 %v2253
        %v2303 = vunpack.c.l.b16 %v2254
        %v2304 = vpack.c.b16 %v2301, %v2300
        %v2305 = vpack.c.b16 %v2303, %v2302
        %v2309 = vsel %vm556, %v2261, 0
        %v2312 = vsel %vm556, %v2263, 0
        %v2315 = vsel %vm556, %v2265, 0
        %v2318 = vsel %vm556, %v2267, 0
        %v2321 = vsel %vm556, %v2269, 0
        %v2324 = vsel %vm556, %v2271, 0
        %v2327 = vsel %vm556, %v2273, 0
        %v2330 = vsel %vm556, %v2275, 0
        %v2333 = vsel %vm556, %v2277, 0
        %v2336 = vsel %vm556, %v2279, 0
        %v2339 = vsel %vm556, %v2281, 0
        %v2342 = vsel %vm556, %v2283, 0
        %v2345 = vsel %vm556, %v2285, 0
        %v2348 = vsel %vm556, %v2287, 0
        %v2351 = vsel %vm556, %v2289, 0
        %v2354 = vsel %vm556, %v2291, 0
        %v2357 = vsel %vm556, %v2293, 0
        %v2360 = vsel %vm556, %v2295, 0
        %2362 = vmatprep.subr.bf16.mxu0 0
        %2363 = vmatpush1.bf16.msra.mxu0 %v2304
        %2364 = vmatprep.subr.bf16.mxu0 0
        %2365 = vmatpush1.bf16.msra.mxu0 %v2305
        %2366 = vmatprep.subr.bf16.mxu0 0
        %2367 = vmatpush1.bf16.msra.mxu0 0
        %2368 = vmatprep.subr.bf16.mxu0 0
        %2369 = vmatpush1.bf16.msra.mxu0 0
        %2370 = vmatprep.subr.bf16.mxu0 0
        %2371 = vmatpush1.bf16.msra.mxu0 0
        %2372 = vmatprep.subr.bf16.mxu0 0
        %2373 = vmatpush1.bf16.msra.mxu0 0
        %2374 = vmatprep.subr.bf16.mxu0 0
        %2375 = vmatpush1.bf16.msra.mxu0 0
        %2376 = vmatprep.subr.bf16.mxu0 0
        %2377 = vmatpush1.bf16.msra.mxu0 0
        %2378 = vmatprep.subr.bf16.mxu0 0
        %2379 = vmatpush1.bf16.msra.mxu0 0
        %2380 = vmatprep.subr.bf16.mxu0 0
        %2381 = vmatpush1.bf16.msra.mxu0 0
        %2382 = vmatprep.subr.bf16.mxu0 0
        %2383 = vmatpush1.bf16.msra.mxu0 0
        %2384 = vmatprep.subr.bf16.mxu0 0
        %2385 = vmatpush1.bf16.msra.mxu0 0
        %2386 = vmatprep.subr.bf16.mxu0 0
        %2387 = vmatpush1.bf16.msra.mxu0 0
        %2388 = vmatprep.subr.bf16.mxu0 0
        %2389 = vmatpush1.bf16.msra.mxu0 0
        %2390 = vmatprep.subr.bf16.mxu0 0
        %2391 = vmatpush1.bf16.msra.mxu0 0
        %2392 = vmatprep.subr.bf16.mxu0 0
        %2393 = vmatpush1.bf16.msra.mxu0 0
        %2394 = vmatprep.mubr.bf16.mxu0 0
        %2395 = vmatmul.mubr.bf16.gmra.mrb[0].mxu0 %v2309
        %v2396 = vpop.f32.mrb[0].mxu0
        %v2397 = vadd.f32 0.0, %v2396
        %v2398 = vpop.f32.mrb[0].mxu0
        %v2399 = vpop.f32.mrb[0].mxu0
        %v2400 = vadd.f32 0.0, %v2399
        %v2401 = vpop.f32.mrb[0].mxu0
        %2402 = vmatprep.mubr.bf16.mxu0 0
        %2403 = vmatmul.mubr.bf16.gmra.mrb[0].mxu0 %v2312
        %v2404 = vpop.f32.mrb[0].mxu0
        %v2405 = vadd.f32 0.0, %v2404
        %v2406 = vpop.f32.mrb[0].mxu0
        %v2407 = vpop.f32.mrb[0].mxu0
        %v2408 = vadd.f32 0.0, %v2407
        %v2409 = vpop.f32.mrb[0].mxu0
        %2410 = vmatprep.mubr.bf16.mxu0 0
        %2411 = vmatmul.mubr.bf16.gmra.mrb[0].mxu0 %v2315
        %v2412 = vpop.f32.mrb[0].mxu0
        %v2413 = vadd.f32 0.0, %v2412
        %v2414 = vpop.f32.mrb[0].mxu0
        %v2415 = vpop.f32.mrb[0].mxu0
        %v2416 = vadd.f32 0.0, %v2415
        %v2417 = vpop.f32.mrb[0].mxu0
        %2418 = vmatprep.mubr.bf16.mxu0 0
        %2419 = vmatmul.mubr.bf16.gmra.mrb[0].mxu0 %v2318
        %v2420 = vpop.f32.mrb[0].mxu0
        %v2421 = vadd.f32 0.0, %v2420
        %v2422 = vpop.f32.mrb[0].mxu0
        %v2423 = vpop.f32.mrb[0].mxu0
        %v2424 = vadd.f32 0.0, %v2423
        %v2425 = vpop.f32.mrb[0].mxu0
        %2426 = vmatprep.mubr.bf16.mxu0 0
        %2427 = vmatmul.mubr.bf16.gmra.mrb[0].mxu0 %v2321
        %v2428 = vpop.f32.mrb[0].mxu0
        %v2429 = vadd.f32 0.0, %v2428
        %v2430 = vpop.f32.mrb[0].mxu0
        %v2431 = vpop.f32.mrb[0].mxu0
        %v2432 = vadd.f32 0.0, %v2431
        %v2433 = vpop.f32.mrb[0].mxu0
        %2434 = vmatprep.mubr.bf16.mxu0 0
        %2435 = vmatmul.mubr.bf16.gmra.mrb[0].mxu0 %v2324
        %v2436 = vpop.f32.mrb[0].mxu0
        %v2437 = vadd.f32 0.0, %v2436
        %v2438 = vpop.f32.mrb[0].mxu0
        %v2439 = vpop.f32.mrb[0].mxu0
        %v2440 = vadd.f32 0.0, %v2439
        %v2441 = vpop.f32.mrb[0].mxu0
        %2442 = vmatprep.mubr.bf16.mxu0 0
        %2443 = vmatmul.mubr.bf16.gmra.mrb[0].mxu0 %v2327
        %v2444 = vpop.f32.mrb[0].mxu0
        %v2445 = vadd.f32 0.0, %v2444
        %v2446 = vpop.f32.mrb[0].mxu0
        %v2447 = vpop.f32.mrb[0].mxu0
        %v2448 = vadd.f32 0.0, %v2447
        %v2449 = vpop.f32.mrb[0].mxu0
        %2450 = vmatprep.mubr.bf16.mxu0 0
        %2451 = vmatmul.mubr.bf16.gmra.mrb[0].mxu0 %v2330
        %v2452 = vpop.f32.mrb[0].mxu0
        %v2453 = vadd.f32 0.0, %v2452
        %v2454 = vpop.f32.mrb[0].mxu0
        %v2455 = vpop.f32.mrb[0].mxu0
        %v2456 = vadd.f32 0.0, %v2455
        %v2457 = vpop.f32.mrb[0].mxu0
        %2458 = vmatprep.mubr.bf16.mxu0 0
        %2459 = vmatmul.mubr.bf16.gmra.mrb[0].mxu0 %v2333
        %v2460 = vpop.f32.mrb[0].mxu0
        %v2461 = vadd.f32 0.0, %v2460
        %v2462 = vpop.f32.mrb[0].mxu0
        %v2463 = vpop.f32.mrb[0].mxu0
        %v2464 = vadd.f32 0.0, %v2463
        %v2465 = vpop.f32.mrb[0].mxu0
        %2466 = vmatprep.mubr.bf16.mxu0 0
        %2467 = vmatmul.mubr.bf16.gmra.mrb[0].mxu0 %v2336
        %v2468 = vpop.f32.mrb[0].mxu0
        %v2469 = vadd.f32 0.0, %v2468
        %v2470 = vpop.f32.mrb[0].mxu0
        %v2471 = vpop.f32.mrb[0].mxu0
        %v2472 = vadd.f32 0.0, %v2471
        %v2473 = vpop.f32.mrb[0].mxu0
        %2474 = vmatprep.mubr.bf16.mxu0 0
        %2475 = vmatmul.mubr.bf16.gmra.mrb[0].mxu0 %v2339
        %v2476 = vpop.f32.mrb[0].mxu0
        %v2477 = vadd.f32 0.0, %v2476
        %v2478 = vpop.f32.mrb[0].mxu0
        %v2479 = vpop.f32.mrb[0].mxu0
        %v2480 = vadd.f32 0.0, %v2479
        %v2481 = vpop.f32.mrb[0].mxu0
        %2482 = vmatprep.mubr.bf16.mxu0 0
        %2483 = vmatmul.mubr.bf16.gmra.mrb[0].mxu0 %v2342
        %v2484 = vpop.f32.mrb[0].mxu0
        %v2485 = vadd.f32 0.0, %v2484
        %v2486 = vpop.f32.mrb[0].mxu0
        %v2487 = vpop.f32.mrb[0].mxu0
        %v2488 = vadd.f32 0.0, %v2487
        %v2489 = vpop.f32.mrb[0].mxu0
        %2490 = vmatprep.mubr.bf16.mxu0 0
        %2491 = vmatmul.mubr.bf16.gmra.mrb[0].mxu0 %v2345
        %v2492 = vpop.f32.mrb[0].mxu0
        %v2493 = vadd.f32 0.0, %v2492
        %v2494 = vpop.f32.mrb[0].mxu0
        %v2495 = vpop.f32.mrb[0].mxu0
        %v2496 = vadd.f32 0.0, %v2495
        %v2497 = vpop.f32.mrb[0].mxu0
        %2498 = vmatprep.mubr.bf16.mxu0 0
        %2499 = vmatmul.mubr.bf16.gmra.mrb[0].mxu0 %v2348
        %v2500 = vpop.f32.mrb[0].mxu0
        %v2501 = vadd.f32 0.0, %v2500
        %v2502 = vpop.f32.mrb[0].mxu0
        %v2503 = vpop.f32.mrb[0].mxu0
        %v2504 = vadd.f32 0.0, %v2503
        %v2505 = vpop.f32.mrb[0].mxu0
        %2506 = vmatprep.mubr.bf16.mxu0 0
        %2507 = vmatmul.mubr.bf16.gmra.mrb[0].mxu0 %v2351
        %v2508 = vpop.f32.mrb[0].mxu0
        %v2509 = vadd.f32 0.0, %v2508
        %v2510 = vpop.f32.mrb[0].mxu0
        %v2511 = vpop.f32.mrb[0].mxu0
        %v2512 = vadd.f32 0.0, %v2511
        %v2513 = vpop.f32.mrb[0].mxu0
        %2514 = vmatprep.mubr.bf16.mxu0 0
        %2515 = vmatmul.mubr.bf16.gmra.mrb[0].mxu0 %v2354
        %v2516 = vpop.f32.mrb[0].mxu0
        %v2517 = vadd.f32 0.0, %v2516
        %v2518 = vpop.f32.mrb[0].mxu0
        %v2519 = vpop.f32.mrb[0].mxu0
        %v2520 = vadd.f32 0.0, %v2519
        %v2521 = vpop.f32.mrb[0].mxu0
        %2522 = vmatprep.mubr.bf16.mxu0 0
        %2523 = vmatmul.mubr.bf16.gmra.mrb[0].mxu0 %v2357
        %v2524 = vpop.f32.mrb[0].mxu0
        %v2525 = vadd.f32 0.0, %v2524
        %v2526 = vpop.f32.mrb[0].mxu0
        %v2527 = vpop.f32.mrb[0].mxu0
        %v2528 = vadd.f32 0.0, %v2527
        %v2529 = vpop.f32.mrb[0].mxu0
        %2530 = vmatprep.mubr.bf16.mxu0 0
        %2531 = vmatmul.mubr.bf16.gmra.mrb[0].mxu0 %v2360
        %v2532 = vpop.f32.mrb[0].mxu0
        %v2533 = vadd.f32 0.0, %v2532
        %v2534 = vpop.f32.mrb[0].mxu0
        %v2535 = vpop.f32.mrb[0].mxu0
        %v2536 = vadd.f32 0.0, %v2535
        %v2537 = vpop.f32.mrb[0].mxu0
        %2538 = vdwg.mxu0
        %v2539 = vadd.f32 %v2213, %v2397
        %v2540 = vadd.f32 %v2214, %v2400
        %v2541 = vadd.f32 %v2215, %v2405
        %v2542 = vadd.f32 %v2216, %v2408
        %v2543 = vadd.f32 %v2217, %v2413
        %v2544 = vadd.f32 %v2218, %v2416
        %v2545 = vadd.f32 %v2219, %v2421
        %v2546 = vadd.f32 %v2220, %v2424
        %v2547 = vadd.f32 %v2221, %v2429
        %v2548 = vadd.f32 %v2222, %v2432
        %v2549 = vadd.f32 %v2223, %v2437
        %v2550 = vadd.f32 %v2224, %v2440
        %v2551 = vadd.f32 %v2225, %v2445
        %v2552 = vadd.f32 %v2226, %v2448
        %v2553 = vadd.f32 %v2227, %v2453
        %v2554 = vadd.f32 %v2228, %v2456
        %v2555 = vadd.f32 %v2229, %v2461
        %v2556 = vadd.f32 %v2230, %v2464
        %v2557 = vadd.f32 %v2231, %v2469
        %v2558 = vadd.f32 %v2232, %v2472
        %v2559 = vadd.f32 %v2233, %v2477
        %v2560 = vadd.f32 %v2234, %v2480
        %v2561 = vadd.f32 %v2235, %v2485
        %v2562 = vadd.f32 %v2236, %v2488
        %v2563 = vadd.f32 %v2237, %v2493
        %v2564 = vadd.f32 %v2238, %v2496
        %v2565 = vadd.f32 %v2239, %v2501
        %v2566 = vadd.f32 %v2240, %v2504
        %v2567 = vadd.f32 %v2241, %v2509
        %v2568 = vadd.f32 %v2242, %v2512
        %v2569 = vadd.f32 %v2243, %v2517
        %v2570 = vadd.f32 %v2244, %v2520
        %v2571 = vadd.f32 %v2245, %v2525
        %v2572 = vadd.f32 %v2246, %v2528
        %v2573 = vadd.f32 %v2247, %v2533
        %v2574 = vadd.f32 %v2248, %v2536
        %v2575 = vld [vmem:[%s244 + $0x10] sm:$0xc]
        %v2576 = vld [vmem:[%s244 + $0x14] sm:$0xf]
        %v2577 = vld [vmem:[%s244 + $0x18] sm:$0xf]
        %v2578 = vld [vmem:[%s244 + $0x1c] sm:$0xf]
        %v2579 = vld [vmem:[%s244 + $0x20] sm:$0xf]
        %v2580 = vld [vmem:[%s244 + $0x24] sm:$0xf]
        %v2581 = vld [vmem:[%s244 + $0x28] sm:$0xf]
        %v2582 = vld [vmem:[%s244 + $0x2c] sm:$0xf]
        %v2583 = vld [vmem:[%s244 + $0x30] sm:$0xf]
        %v2584 = vld [vmem:[%s244 + $0x34] sm:$0xf]
        %v2585 = vld [vmem:[%s244 + $0x38] sm:$0xf]
        %v2586 = vld [vmem:[%s244 + $0x3c] sm:$0xf]
        %v2587 = vld [vmem:[%s244 + $0x40] sm:$0xf]
        %v2588 = vld [vmem:[%s244 + $0x44] sm:$0xf]
        %v2589 = vld [vmem:[%s244 + $0x48] sm:$0xf]
        %v2590 = vld [vmem:[%s244 + $0x4c] sm:$0xf]
        %v2591 = vld [vmem:[%s244 + $0x50] sm:$0xf]
        %v2592 = vld [vmem:[%s244 + $0x54] sm:$0xf]
        %v2593 = vld [vmem:[%s244 + $0x58] sm:$0xf]
        %v2594 = vld [vmem:[%s244 + $0x5c] sm:$0xf]
        %v2595 = vld [vmem:[%s244 + $0x60] sm:$0xf]
        %v2596 = vld [vmem:[%s244 + $0x64] sm:$0xf]
        %v2597 = vld [vmem:[%s244 + $0x68] sm:$0xf]
        %v2598 = vld [vmem:[%s244 + $0x6c] sm:$0xf]
        %v2599 = vld [vmem:[%s244 + $0x70] sm:$0xf]
        %v2600 = vld [vmem:[%s244 + $0x74] sm:$0xf]
        %v2601 = vld [vmem:[%s244 + $0x78] sm:$0xf]
        %v2602 = vld [vmem:[%s244 + $0x7c] sm:$0xf]
        %v2603 = vld [vmem:[%s244 + $0x80] sm:$0xf]
        %v2604 = vld [vmem:[%s244 + $0x84] sm:$0xf]
        %v2605 = vld [vmem:[%s244 + $0x88] sm:$0xf]
        %v2606 = vld [vmem:[%s244 + $0x8c] sm:$0xf]
        %v2607 = vld [vmem:[%s244 + $0x90] sm:$0xf]
        %v2608 = vld [vmem:[%s244 + $0x94] sm:$0xf]
        %v2609 = vld [vmem:[%s244 + $0x98] sm:$0xf]
        %v2610 = vld [vmem:[%s244 + $0x9c] sm:$0xf]
        %v2611 = vld [vmem:[%s244 + $0xa0] sm:$0x3]
        %s2612 = scalar_lea.vmem %s248, 96
        %v2613 = vld [vmem:[%s2612] sm:$0xf]
        %v2614 = vld [vmem:[%s2612 + $0x4] sm:$0xf]
        %v2615 = vld [vmem:[%s2612 + $0x8] sm:$0xf]
        %v2616 = vld [vmem:[%s2612 + $0xc] sm:$0xf]
        %v2654 = vunpack.c.l.b16 %v2575
        %v2655 = vunpack.c.l.b16 %v2576
        %v2656 = vunpack.c.l.b16 %v2577
        %v2657 = vunpack.c.l.b16 %v2578
        %v2658 = vunpack.c.l.b16 %v2579
        %v2659 = vunpack.c.l.b16 %v2580
        %v2660 = vunpack.c.l.b16 %v2581
        %v2661 = vunpack.c.l.b16 %v2582
        %v2662 = vunpack.c.l.b16 %v2583
        %v2663 = vunpack.c.l.b16 %v2584
        %v2664 = vunpack.c.l.b16 %v2585
        %v2665 = vunpack.c.l.b16 %v2586
        %v2666 = vunpack.c.l.b16 %v2587
        %v2667 = vunpack.c.l.b16 %v2588
        %v2668 = vunpack.c.l.b16 %v2589
        %v2669 = vunpack.c.l.b16 %v2590
        %v2670 = vunpack.c.l.b16 %v2591
        %v2671 = vunpack.c.l.b16 %v2592
        %v2672 = vunpack.c.l.b16 %v2593
        %v2673 = vunpack.c.l.b16 %v2594
        %v2674 = vunpack.c.l.b16 %v2595
        %v2675 = vunpack.c.l.b16 %v2596
        %v2676 = vunpack.c.l.b16 %v2597
        %v2677 = vunpack.c.l.b16 %v2598
        %v2678 = vunpack.c.l.b16 %v2599
        %v2679 = vunpack.c.l.b16 %v2600
        %v2680 = vunpack.c.l.b16 %v2601
        %v2681 = vunpack.c.l.b16 %v2602
        %v2682 = vunpack.c.l.b16 %v2603
        %v2683 = vunpack.c.l.b16 %v2604
        %v2684 = vunpack.c.l.b16 %v2605
        %v2685 = vunpack.c.l.b16 %v2606
        %v2686 = vunpack.c.l.b16 %v2607
        %v2687 = vunpack.c.l.b16 %v2608
        %v2688 = vunpack.c.l.b16 %v2609
        %v2689 = vunpack.c.l.b16 %v2610
        %v2690 = vunpack.c.l.b16 %v2611
        %v2691 = vpack.c.b16 %v2655, %v2654
        %v2692 = vpack.c.b16 %v2657, %v2656
        %v2693 = vpack.c.b16 %v2659, %v2658
        %v2694 = vpack.c.b16 %v2661, %v2660
        %v2695 = vpack.c.b16 %v2663, %v2662
        %v2696 = vpack.c.b16 %v2665, %v2664
        %v2697 = vpack.c.b16 %v2667, %v2666
        %v2698 = vpack.c.b16 %v2669, %v2668
        %v2699 = vpack.c.b16 %v2671, %v2670
        %v2700 = vpack.c.b16 %v2673, %v2672
        %v2701 = vpack.c.b16 %v2675, %v2674
        %v2702 = vpack.c.b16 %v2677, %v2676
        %v2703 = vpack.c.b16 %v2679, %v2678
        %v2704 = vpack.c.b16 %v2681, %v2680
        %v2705 = vpack.c.b16 %v2683, %v2682
        %v2706 = vpack.c.b16 %v2685, %v2684
        %v2707 = vpack.c.b16 %v2687, %v2686
        %v2708 = vpack.c.b16 %v2689, %v2688
        %v2709 = vpack.c.b16 %v2690, %v2690
        %v2710 = vrot.slane %v2691, 2
        %v2711 = vrot.slane %v2692, 2
        %v2712 = vsel %vm2258, %v2710, %v2711
        %v2713 = vrot.slane %v2693, 2
        %v2714 = vsel %vm2258, %v2711, %v2713
        %v2715 = vrot.slane %v2694, 2
        %v2716 = vsel %vm2258, %v2713, %v2715
        %v2717 = vrot.slane %v2695, 2
        %v2718 = vsel %vm2258, %v2715, %v2717
        %v2719 = vrot.slane %v2696, 2
        %v2720 = vsel %vm2258, %v2717, %v2719
        %v2721 = vrot.slane %v2697, 2
        %v2722 = vsel %vm2258, %v2719, %v2721
        %v2723 = vrot.slane %v2698, 2
        %v2724 = vsel %vm2258, %v2721, %v2723
        %v2725 = vrot.slane %v2699, 2
        %v2726 = vsel %vm2258, %v2723, %v2725
        %v2727 = vrot.slane %v2700, 2
        %v2728 = vsel %vm2258, %v2725, %v2727
        %v2729 = vrot.slane %v2701, 2
        %v2730 = vsel %vm2258, %v2727, %v2729
        %v2731 = vrot.slane %v2702, 2
        %v2732 = vsel %vm2258, %v2729, %v2731
        %v2733 = vrot.slane %v2703, 2
        %v2734 = vsel %vm2258, %v2731, %v2733
        %v2735 = vrot.slane %v2704, 2
        %v2736 = vsel %vm2258, %v2733, %v2735
        %v2737 = vrot.slane %v2705, 2
        %v2738 = vsel %vm2258, %v2735, %v2737
        %v2739 = vrot.slane %v2706, 2
        %v2740 = vsel %vm2258, %v2737, %v2739
        %v2741 = vrot.slane %v2707, 2
        %v2742 = vsel %vm2258, %v2739, %v2741
        %v2743 = vrot.slane %v2708, 2
        %v2744 = vsel %vm2258, %v2741, %v2743
        %v2745 = vrot.slane %v2709, 2
        %v2746 = vsel %vm2258, %v2743, %v2745
        %v2751 = vunpack.c.l.b16 %v2613
        %v2752 = vunpack.c.l.b16 %v2614
        %v2753 = vunpack.c.l.b16 %v2615
        %v2754 = vunpack.c.l.b16 %v2616
        %v2755 = vpack.c.b16 %v2752, %v2751
        %v2756 = vpack.c.b16 %v2754, %v2753
        %v2760 = vsel %vm556, %v2712, 0
        %v2763 = vsel %vm556, %v2714, 0
        %v2766 = vsel %vm556, %v2716, 0
        %v2769 = vsel %vm556, %v2718, 0
        %v2772 = vsel %vm556, %v2720, 0
        %v2775 = vsel %vm556, %v2722, 0
        %v2778 = vsel %vm556, %v2724, 0
        %v2781 = vsel %vm556, %v2726, 0
        %v2784 = vsel %vm556, %v2728, 0
        %v2787 = vsel %vm556, %v2730, 0
        %v2790 = vsel %vm556, %v2732, 0
        %v2793 = vsel %vm556, %v2734, 0
        %v2796 = vsel %vm556, %v2736, 0
        %v2799 = vsel %vm556, %v2738, 0
        %v2802 = vsel %vm556, %v2740, 0
        %v2805 = vsel %vm556, %v2742, 0
        %v2808 = vsel %vm556, %v2744, 0
        %v2811 = vsel %vm556, %v2746, 0
        %2813 = vmatprep.subr.bf16.mxu0 0
        %2814 = vmatpush1.bf16.msra.mxu0 %v2755
        %2815 = vmatprep.subr.bf16.mxu0 0
        %2816 = vmatpush1.bf16.msra.mxu0 %v2756
        %2817 = vmatprep.subr.bf16.mxu0 0
        %2818 = vmatpush1.bf16.msra.mxu0 0
        %2819 = vmatprep.subr.bf16.mxu0 0
        %2820 = vmatpush1.bf16.msra.mxu0 0
        %2821 = vmatprep.subr.bf16.mxu0 0
        %2822 = vmatpush1.bf16.msra.mxu0 0
        %2823 = vmatprep.subr.bf16.mxu0 0
        %2824 = vmatpush1.bf16.msra.mxu0 0
        %2825 = vmatprep.subr.bf16.mxu0 0
        %2826 = vmatpush1.bf16.msra.mxu0 0
        %2827 = vmatprep.subr.bf16.mxu0 0
        %2828 = vmatpush1.bf16.msra.mxu0 0
        %2829 = vmatprep.subr.bf16.mxu0 0
        %2830 = vmatpush1.bf16.msra.mxu0 0
        %2831 = vmatprep.subr.bf16.mxu0 0
        %2832 = vmatpush1.bf16.msra.mxu0 0
        %2833 = vmatprep.subr.bf16.mxu0 0
        %2834 = vmatpush1.bf16.msra.mxu0 0
        %2835 = vmatprep.subr.bf16.mxu0 0
        %2836 = vmatpush1.bf16.msra.mxu0 0
        %2837 = vmatprep.subr.bf16.mxu0 0
        %2838 = vmatpush1.bf16.msra.mxu0 0
        %2839 = vmatprep.subr.bf16.mxu0 0
        %2840 = vmatpush1.bf16.msra.mxu0 0
        %2841 = vmatprep.subr.bf16.mxu0 0
        %2842 = vmatpush1.bf16.msra.mxu0 0
        %2843 = vmatprep.subr.bf16.mxu0 0
        %2844 = vmatpush1.bf16.msra.mxu0 0
        %2845 = vmatprep.mubr.bf16.mxu0 0
        %2846 = vmatmul.mubr.bf16.gmra.mrb[0].mxu0 %v2760
        %v2847 = vpop.f32.mrb[0].mxu0
        %v2848 = vadd.f32 0.0, %v2847
        %v2849 = vpop.f32.mrb[0].mxu0
        %v2850 = vpop.f32.mrb[0].mxu0
        %v2851 = vadd.f32 0.0, %v2850
        %v2852 = vpop.f32.mrb[0].mxu0
        %2853 = vmatprep.mubr.bf16.mxu0 0
        %2854 = vmatmul.mubr.bf16.gmra.mrb[0].mxu0 %v2763
        %v2855 = vpop.f32.mrb[0].mxu0
        %v2856 = vadd.f32 0.0, %v2855
        %v2857 = vpop.f32.mrb[0].mxu0
        %v2858 = vpop.f32.mrb[0].mxu0
        %v2859 = vadd.f32 0.0, %v2858
        %v2860 = vpop.f32.mrb[0].mxu0
        %2861 = vmatprep.mubr.bf16.mxu0 0
        %2862 = vmatmul.mubr.bf16.gmra.mrb[0].mxu0 %v2766
        %v2863 = vpop.f32.mrb[0].mxu0
        %v2864 = vadd.f32 0.0, %v2863
        %v2865 = vpop.f32.mrb[0].mxu0
        %v2866 = vpop.f32.mrb[0].mxu0
        %v2867 = vadd.f32 0.0, %v2866
        %v2868 = vpop.f32.mrb[0].mxu0
        %2869 = vmatprep.mubr.bf16.mxu0 0
        %2870 = vmatmul.mubr.bf16.gmra.mrb[0].mxu0 %v2769
        %v2871 = vpop.f32.mrb[0].mxu0
        %v2872 = vadd.f32 0.0, %v2871
        %v2873 = vpop.f32.mrb[0].mxu0
        %v2874 = vpop.f32.mrb[0].mxu0
        %v2875 = vadd.f32 0.0, %v2874
        %v2876 = vpop.f32.mrb[0].mxu0
        %2877 = vmatprep.mubr.bf16.mxu0 0
        %2878 = vmatmul.mubr.bf16.gmra.mrb[0].mxu0 %v2772
        %v2879 = vpop.f32.mrb[0].mxu0
        %v2880 = vadd.f32 0.0, %v2879
        %v2881 = vpop.f32.mrb[0].mxu0
        %v2882 = vpop.f32.mrb[0].mxu0
        %v2883 = vadd.f32 0.0, %v2882
        %v2884 = vpop.f32.mrb[0].mxu0
        %2885 = vmatprep.mubr.bf16.mxu0 0
        %2886 = vmatmul.mubr.bf16.gmra.mrb[0].mxu0 %v2775
        %v2887 = vpop.f32.mrb[0].mxu0
        %v2888 = vadd.f32 0.0, %v2887
        %v2889 = vpop.f32.mrb[0].mxu0
        %v2890 = vpop.f32.mrb[0].mxu0
        %v2891 = vadd.f32 0.0, %v2890
        %v2892 = vpop.f32.mrb[0].mxu0
        %2893 = vmatprep.mubr.bf16.mxu0 0
        %2894 = vmatmul.mubr.bf16.gmra.mrb[0].mxu0 %v2778
        %v2895 = vpop.f32.mrb[0].mxu0
        %v2896 = vadd.f32 0.0, %v2895
        %v2897 = vpop.f32.mrb[0].mxu0
        %v2898 = vpop.f32.mrb[0].mxu0
        %v2899 = vadd.f32 0.0, %v2898
        %v2900 = vpop.f32.mrb[0].mxu0
        %2901 = vmatprep.mubr.bf16.mxu0 0
        %2902 = vmatmul.mubr.bf16.gmra.mrb[0].mxu0 %v2781
        %v2903 = vpop.f32.mrb[0].mxu0
        %v2904 = vadd.f32 0.0, %v2903
        %v2905 = vpop.f32.mrb[0].mxu0
        %v2906 = vpop.f32.mrb[0].mxu0
        %v2907 = vadd.f32 0.0, %v2906
        %v2908 = vpop.f32.mrb[0].mxu0
        %2909 = vmatprep.mubr.bf16.mxu0 0
        %2910 = vmatmul.mubr.bf16.gmra.mrb[0].mxu0 %v2784
        %v2911 = vpop.f32.mrb[0].mxu0
        %v2912 = vadd.f32 0.0, %v2911
        %v2913 = vpop.f32.mrb[0].mxu0
        %v2914 = vpop.f32.mrb[0].mxu0
        %v2915 = vadd.f32 0.0, %v2914
        %v2916 = vpop.f32.mrb[0].mxu0
        %2917 = vmatprep.mubr.bf16.mxu0 0
        %2918 = vmatmul.mubr.bf16.gmra.mrb[0].mxu0 %v2787
        %v2919 = vpop.f32.mrb[0].mxu0
        %v2920 = vadd.f32 0.0, %v2919
        %v2921 = vpop.f32.mrb[0].mxu0
        %v2922 = vpop.f32.mrb[0].mxu0
        %v2923 = vadd.f32 0.0, %v2922
        %v2924 = vpop.f32.mrb[0].mxu0
        %2925 = vmatprep.mubr.bf16.mxu0 0
        %2926 = vmatmul.mubr.bf16.gmra.mrb[0].mxu0 %v2790
        %v2927 = vpop.f32.mrb[0].mxu0
        %v2928 = vadd.f32 0.0, %v2927
        %v2929 = vpop.f32.mrb[0].mxu0
        %v2930 = vpop.f32.mrb[0].mxu0
        %v2931 = vadd.f32 0.0, %v2930
        %v2932 = vpop.f32.mrb[0].mxu0
        %2933 = vmatprep.mubr.bf16.mxu0 0
        %2934 = vmatmul.mubr.bf16.gmra.mrb[0].mxu0 %v2793
        %v2935 = vpop.f32.mrb[0].mxu0
        %v2936 = vadd.f32 0.0, %v2935
        %v2937 = vpop.f32.mrb[0].mxu0
        %v2938 = vpop.f32.mrb[0].mxu0
        %v2939 = vadd.f32 0.0, %v2938
        %v2940 = vpop.f32.mrb[0].mxu0
        %2941 = vmatprep.mubr.bf16.mxu0 0
        %2942 = vmatmul.mubr.bf16.gmra.mrb[0].mxu0 %v2796
        %v2943 = vpop.f32.mrb[0].mxu0
        %v2944 = vadd.f32 0.0, %v2943
        %v2945 = vpop.f32.mrb[0].mxu0
        %v2946 = vpop.f32.mrb[0].mxu0
        %v2947 = vadd.f32 0.0, %v2946
        %v2948 = vpop.f32.mrb[0].mxu0
        %2949 = vmatprep.mubr.bf16.mxu0 0
        %2950 = vmatmul.mubr.bf16.gmra.mrb[0].mxu0 %v2799
        %v2951 = vpop.f32.mrb[0].mxu0
        %v2952 = vadd.f32 0.0, %v2951
        %v2953 = vpop.f32.mrb[0].mxu0
        %v2954 = vpop.f32.mrb[0].mxu0
        %v2955 = vadd.f32 0.0, %v2954
        %v2956 = vpop.f32.mrb[0].mxu0
        %2957 = vmatprep.mubr.bf16.mxu0 0
        %2958 = vmatmul.mubr.bf16.gmra.mrb[0].mxu0 %v2802
        %v2959 = vpop.f32.mrb[0].mxu0
        %v2960 = vadd.f32 0.0, %v2959
        %v2961 = vpop.f32.mrb[0].mxu0
        %v2962 = vpop.f32.mrb[0].mxu0
        %v2963 = vadd.f32 0.0, %v2962
        %v2964 = vpop.f32.mrb[0].mxu0
        %2965 = vmatprep.mubr.bf16.mxu0 0
        %2966 = vmatmul.mubr.bf16.gmra.mrb[0].mxu0 %v2805
        %v2967 = vpop.f32.mrb[0].mxu0
        %v2968 = vadd.f32 0.0, %v2967
        %v2969 = vpop.f32.mrb[0].mxu0
        %v2970 = vpop.f32.mrb[0].mxu0
        %v2971 = vadd.f32 0.0, %v2970
        %v2972 = vpop.f32.mrb[0].mxu0
        %2973 = vmatprep.mubr.bf16.mxu0 0
        %2974 = vmatmul.mubr.bf16.gmra.mrb[0].mxu0 %v2808
        %v2975 = vpop.f32.mrb[0].mxu0
        %v2976 = vadd.f32 0.0, %v2975
        %v2977 = vpop.f32.mrb[0].mxu0
        %v2978 = vpop.f32.mrb[0].mxu0
        %v2979 = vadd.f32 0.0, %v2978
        %v2980 = vpop.f32.mrb[0].mxu0
        %2981 = vmatprep.mubr.bf16.mxu0 0
        %2982 = vmatmul.mubr.bf16.gmra.mrb[0].mxu0 %v2811
        %v2983 = vpop.f32.mrb[0].mxu0
        %v2984 = vadd.f32 0.0, %v2983
        %v2985 = vpop.f32.mrb[0].mxu0
        %v2986 = vpop.f32.mrb[0].mxu0
        %v2987 = vadd.f32 0.0, %v2986
        %v2988 = vpop.f32.mrb[0].mxu0
        %2989 = vdwg.mxu0
        %v2990 = vadd.f32 %v2539, %v2848
        %v2991 = vadd.f32 %v2540, %v2851
        %v2992 = vadd.f32 %v2541, %v2856
        %v2993 = vadd.f32 %v2542, %v2859
        %v2994 = vadd.f32 %v2543, %v2864
        %v2995 = vadd.f32 %v2544, %v2867
        %v2996 = vadd.f32 %v2545, %v2872
        %v2997 = vadd.f32 %v2546, %v2875
        %v2998 = vadd.f32 %v2547, %v2880
        %v2999 = vadd.f32 %v2548, %v2883
        %v3000 = vadd.f32 %v2549, %v2888
        %v3001 = vadd.f32 %v2550, %v2891
        %v3002 = vadd.f32 %v2551, %v2896
        %v3003 = vadd.f32 %v2552, %v2899
        %v3004 = vadd.f32 %v2553, %v2904
        %v3005 = vadd.f32 %v2554, %v2907
        %v3006 = vadd.f32 %v2555, %v2912
        %v3007 = vadd.f32 %v2556, %v2915
        %v3008 = vadd.f32 %v2557, %v2920
        %v3009 = vadd.f32 %v2558, %v2923
        %v3010 = vadd.f32 %v2559, %v2928
        %v3011 = vadd.f32 %v2560, %v2931
        %v3012 = vadd.f32 %v2561, %v2936
        %v3013 = vadd.f32 %v2562, %v2939
        %v3014 = vadd.f32 %v2563, %v2944
        %v3015 = vadd.f32 %v2564, %v2947
        %v3016 = vadd.f32 %v2565, %v2952
        %v3017 = vadd.f32 %v2566, %v2955
        %v3018 = vadd.f32 %v2567, %v2960
        %v3019 = vadd.f32 %v2568, %v2963
        %v3020 = vadd.f32 %v2569, %v2968
        %v3021 = vadd.f32 %v2570, %v2971
        %v3022 = vadd.f32 %v2571, %v2976
        %v3023 = vadd.f32 %v2572, %v2979
        %v3024 = vadd.f32 %v2573, %v2984
        %v3025 = vadd.f32 %v2574, %v2987
        %v3026 = vld [vmem:[%s244 + $0xa0] sm:$0x7]
        %s3027 = scalar_lea.vmem %s248, 112
        %v3028 = vld [vmem:[%s3027] sm:$0xf]
        %v3029 = vld [vmem:[%s3027 + $0x4] sm:$0xf]
        %v3030 = vld [vmem:[%s3027 + $0x8] sm:$0xf]
        %v3031 = vld [vmem:[%s3027 + $0xc] sm:$0xf]
        %v3033 = vunpack.c.l.b16 %v3026
        %v3034 = vpack.c.b16 %v3033, %v3033
        %vm3035 = vsmask.f32 5376
        %v3037 = vshrl.u32 %v2691, 16
        %v3039 = vrot.slane %v3037, 2
        %v3040 = vshll.u32 %v2691, 16
        %v3042 = vrot.slane %v3040, 3
        %v3043 = vor.u32 %v3039, %v3042
        %v3045 = vshrl.u32 %v2692, 16
        %v3047 = vrot.slane %v3045, 2
        %v3048 = vshll.u32 %v2692, 16
        %v3050 = vrot.slane %v3048, 3
        %v3051 = vor.u32 %v3047, %v3050
        %v3052 = vsel %vm3035, %v3043, %v3051
        %v3054 = vshrl.u32 %v2693, 16
        %v3056 = vrot.slane %v3054, 2
        %v3057 = vshll.u32 %v2693, 16
        %v3059 = vrot.slane %v3057, 3
        %v3060 = vor.u32 %v3056, %v3059
        %v3061 = vsel %vm3035, %v3051, %v3060
        %v3063 = vshrl.u32 %v2694, 16
        %v3065 = vrot.slane %v3063, 2
        %v3066 = vshll.u32 %v2694, 16
        %v3068 = vrot.slane %v3066, 3
        %v3069 = vor.u32 %v3065, %v3068
        %v3070 = vsel %vm3035, %v3060, %v3069
        %v3072 = vshrl.u32 %v2695, 16
        %v3074 = vrot.slane %v3072, 2
        %v3075 = vshll.u32 %v2695, 16
        %v3077 = vrot.slane %v3075, 3
        %v3078 = vor.u32 %v3074, %v3077
        %v3079 = vsel %vm3035, %v3069, %v3078
        %v3081 = vshrl.u32 %v2696, 16
        %v3083 = vrot.slane %v3081, 2
        %v3084 = vshll.u32 %v2696, 16
        %v3086 = vrot.slane %v3084, 3
        %v3087 = vor.u32 %v3083, %v3086
        %v3088 = vsel %vm3035, %v3078, %v3087
        %v3090 = vshrl.u32 %v2697, 16
        %v3092 = vrot.slane %v3090, 2
        %v3093 = vshll.u32 %v2697, 16
        %v3095 = vrot.slane %v3093, 3
        %v3096 = vor.u32 %v3092, %v3095
        %v3097 = vsel %vm3035, %v3087, %v3096
        %v3099 = vshrl.u32 %v2698, 16
        %v3101 = vrot.slane %v3099, 2
        %v3102 = vshll.u32 %v2698, 16
        %v3104 = vrot.slane %v3102, 3
        %v3105 = vor.u32 %v3101, %v3104
        %v3106 = vsel %vm3035, %v3096, %v3105
        %v3108 = vshrl.u32 %v2699, 16
        %v3110 = vrot.slane %v3108, 2
        %v3111 = vshll.u32 %v2699, 16
        %v3113 = vrot.slane %v3111, 3
        %v3114 = vor.u32 %v3110, %v3113
        %v3115 = vsel %vm3035, %v3105, %v3114
        %v3117 = vshrl.u32 %v2700, 16
        %v3119 = vrot.slane %v3117, 2
        %v3120 = vshll.u32 %v2700, 16
        %v3122 = vrot.slane %v3120, 3
        %v3123 = vor.u32 %v3119, %v3122
        %v3124 = vsel %vm3035, %v3114, %v3123
        %v3126 = vshrl.u32 %v2701, 16
        %v3128 = vrot.slane %v3126, 2
        %v3129 = vshll.u32 %v2701, 16
        %v3131 = vrot.slane %v3129, 3
        %v3132 = vor.u32 %v3128, %v3131
        %v3133 = vsel %vm3035, %v3123, %v3132
        %v3135 = vshrl.u32 %v2702, 16
        %v3137 = vrot.slane %v3135, 2
        %v3138 = vshll.u32 %v2702, 16
        %v3140 = vrot.slane %v3138, 3
        %v3141 = vor.u32 %v3137, %v3140
        %v3142 = vsel %vm3035, %v3132, %v3141
        %v3144 = vshrl.u32 %v2703, 16
        %v3146 = vrot.slane %v3144, 2
        %v3147 = vshll.u32 %v2703, 16
        %v3149 = vrot.slane %v3147, 3
        %v3150 = vor.u32 %v3146, %v3149
        %v3151 = vsel %vm3035, %v3141, %v3150
        %v3153 = vshrl.u32 %v2704, 16
        %v3155 = vrot.slane %v3153, 2
        %v3156 = vshll.u32 %v2704, 16
        %v3158 = vrot.slane %v3156, 3
        %v3159 = vor.u32 %v3155, %v3158
        %v3160 = vsel %vm3035, %v3150, %v3159
        %v3162 = vshrl.u32 %v2705, 16
        %v3164 = vrot.slane %v3162, 2
        %v3165 = vshll.u32 %v2705, 16
        %v3167 = vrot.slane %v3165, 3
        %v3168 = vor.u32 %v3164, %v3167
        %v3169 = vsel %vm3035, %v3159, %v3168
        %v3171 = vshrl.u32 %v2706, 16
        %v3173 = vrot.slane %v3171, 2
        %v3174 = vshll.u32 %v2706, 16
        %v3176 = vrot.slane %v3174, 3
        %v3177 = vor.u32 %v3173, %v3176
        %v3178 = vsel %vm3035, %v3168, %v3177
        %v3180 = vshrl.u32 %v2707, 16
        %v3182 = vrot.slane %v3180, 2
        %v3183 = vshll.u32 %v2707, 16
        %v3185 = vrot.slane %v3183, 3
        %v3186 = vor.u32 %v3182, %v3185
        %v3187 = vsel %vm3035, %v3177, %v3186
        %v3189 = vshrl.u32 %v2708, 16
        %v3191 = vrot.slane %v3189, 2
        %v3192 = vshll.u32 %v2708, 16
        %v3194 = vrot.slane %v3192, 3
        %v3195 = vor.u32 %v3191, %v3194
        %v3196 = vsel %vm3035, %v3186, %v3195
        %v3198 = vshrl.u32 %v3034, 16
        %v3200 = vrot.slane %v3198, 2
        %v3201 = vshll.u32 %v3034, 16
        %v3203 = vrot.slane %v3201, 3
        %v3204 = vor.u32 %v3200, %v3203
        %v3205 = vsel %vm3035, %v3195, %v3204
        %v3210 = vunpack.c.l.b16 %v3028
        %v3211 = vunpack.c.l.b16 %v3029
        %v3212 = vunpack.c.l.b16 %v3030
        %v3213 = vunpack.c.l.b16 %v3031
        %v3214 = vpack.c.b16 %v3211, %v3210
        %v3215 = vpack.c.b16 %v3213, %v3212
        %v3219 = vsel %vm556, %v3052, 0
        %v3222 = vsel %vm556, %v3061, 0
        %v3225 = vsel %vm556, %v3070, 0
        %v3228 = vsel %vm556, %v3079, 0
        %v3231 = vsel %vm556, %v3088, 0
        %v3234 = vsel %vm556, %v3097, 0
        %v3237 = vsel %vm556, %v3106, 0
        %v3240 = vsel %vm556, %v3115, 0
        %v3243 = vsel %vm556, %v3124, 0
        %v3246 = vsel %vm556, %v3133, 0
        %v3249 = vsel %vm556, %v3142, 0
        %v3252 = vsel %vm556, %v3151, 0
        %v3255 = vsel %vm556, %v3160, 0
        %v3258 = vsel %vm556, %v3169, 0
        %v3261 = vsel %vm556, %v3178, 0
        %v3264 = vsel %vm556, %v3187, 0
        %v3267 = vsel %vm556, %v3196, 0
        %v3270 = vsel %vm556, %v3205, 0
        %3272 = vmatprep.subr.bf16.mxu0 0
        %3273 = vmatpush1.bf16.msra.mxu0 %v3214
        %3274 = vmatprep.subr.bf16.mxu0 0
        %3275 = vmatpush1.bf16.msra.mxu0 %v3215
        %3276 = vmatprep.subr.bf16.mxu0 0
        %3277 = vmatpush1.bf16.msra.mxu0 0
        %3278 = vmatprep.subr.bf16.mxu0 0
        %3279 = vmatpush1.bf16.msra.mxu0 0
        %3280 = vmatprep.subr.bf16.mxu0 0
        %3281 = vmatpush1.bf16.msra.mxu0 0
        %3282 = vmatprep.subr.bf16.mxu0 0
        %3283 = vmatpush1.bf16.msra.mxu0 0
        %3284 = vmatprep.subr.bf16.mxu0 0
        %3285 = vmatpush1.bf16.msra.mxu0 0
        %3286 = vmatprep.subr.bf16.mxu0 0
        %3287 = vmatpush1.bf16.msra.mxu0 0
        %3288 = vmatprep.subr.bf16.mxu0 0
        %3289 = vmatpush1.bf16.msra.mxu0 0
        %3290 = vmatprep.subr.bf16.mxu0 0
        %3291 = vmatpush1.bf16.msra.mxu0 0
        %3292 = vmatprep.subr.bf16.mxu0 0
        %3293 = vmatpush1.bf16.msra.mxu0 0
        %3294 = vmatprep.subr.bf16.mxu0 0
        %3295 = vmatpush1.bf16.msra.mxu0 0
        %3296 = vmatprep.subr.bf16.mxu0 0
        %3297 = vmatpush1.bf16.msra.mxu0 0
        %3298 = vmatprep.subr.bf16.mxu0 0
        %3299 = vmatpush1.bf16.msra.mxu0 0
        %3300 = vmatprep.subr.bf16.mxu0 0
        %3301 = vmatpush1.bf16.msra.mxu0 0
        %3302 = vmatprep.subr.bf16.mxu0 0
        %3303 = vmatpush1.bf16.msra.mxu0 0
        %3304 = vmatprep.mubr.bf16.mxu0 0
        %3305 = vmatmul.mubr.bf16.gmra.mrb[0].mxu0 %v3219
        %v3306 = vpop.f32.mrb[0].mxu0
        %v3307 = vadd.f32 0.0, %v3306
        %v3308 = vpop.f32.mrb[0].mxu0
        %v3309 = vpop.f32.mrb[0].mxu0
        %v3310 = vadd.f32 0.0, %v3309
        %v3311 = vpop.f32.mrb[0].mxu0
        %3312 = vmatprep.mubr.bf16.mxu0 0
        %3313 = vmatmul.mubr.bf16.gmra.mrb[0].mxu0 %v3222
        %v3314 = vpop.f32.mrb[0].mxu0
        %v3315 = vadd.f32 0.0, %v3314
        %v3316 = vpop.f32.mrb[0].mxu0
        %v3317 = vpop.f32.mrb[0].mxu0
        %v3318 = vadd.f32 0.0, %v3317
        %v3319 = vpop.f32.mrb[0].mxu0
        %3320 = vmatprep.mubr.bf16.mxu0 0
        %3321 = vmatmul.mubr.bf16.gmra.mrb[0].mxu0 %v3225
        %v3322 = vpop.f32.mrb[0].mxu0
        %v3323 = vadd.f32 0.0, %v3322
        %v3324 = vpop.f32.mrb[0].mxu0
        %v3325 = vpop.f32.mrb[0].mxu0
        %v3326 = vadd.f32 0.0, %v3325
        %v3327 = vpop.f32.mrb[0].mxu0
        %3328 = vmatprep.mubr.bf16.mxu0 0
        %3329 = vmatmul.mubr.bf16.gmra.mrb[0].mxu0 %v3228
        %v3330 = vpop.f32.mrb[0].mxu0
        %v3331 = vadd.f32 0.0, %v3330
        %v3332 = vpop.f32.mrb[0].mxu0
        %v3333 = vpop.f32.mrb[0].mxu0
        %v3334 = vadd.f32 0.0, %v3333
        %v3335 = vpop.f32.mrb[0].mxu0
        %3336 = vmatprep.mubr.bf16.mxu0 0
        %3337 = vmatmul.mubr.bf16.gmra.mrb[0].mxu0 %v3231
        %v3338 = vpop.f32.mrb[0].mxu0
        %v3339 = vadd.f32 0.0, %v3338
        %v3340 = vpop.f32.mrb[0].mxu0
        %v3341 = vpop.f32.mrb[0].mxu0
        %v3342 = vadd.f32 0.0, %v3341
        %v3343 = vpop.f32.mrb[0].mxu0
        %3344 = vmatprep.mubr.bf16.mxu0 0
        %3345 = vmatmul.mubr.bf16.gmra.mrb[0].mxu0 %v3234
        %v3346 = vpop.f32.mrb[0].mxu0
        %v3347 = vadd.f32 0.0, %v3346
        %v3348 = vpop.f32.mrb[0].mxu0
        %v3349 = vpop.f32.mrb[0].mxu0
        %v3350 = vadd.f32 0.0, %v3349
        %v3351 = vpop.f32.mrb[0].mxu0
        %3352 = vmatprep.mubr.bf16.mxu0 0
        %3353 = vmatmul.mubr.bf16.gmra.mrb[0].mxu0 %v3237
        %v3354 = vpop.f32.mrb[0].mxu0
        %v3355 = vadd.f32 0.0, %v3354
        %v3356 = vpop.f32.mrb[0].mxu0
        %v3357 = vpop.f32.mrb[0].mxu0
        %v3358 = vadd.f32 0.0, %v3357
        %v3359 = vpop.f32.mrb[0].mxu0
        %3360 = vmatprep.mubr.bf16.mxu0 0
        %3361 = vmatmul.mubr.bf16.gmra.mrb[0].mxu0 %v3240
        %v3362 = vpop.f32.mrb[0].mxu0
        %v3363 = vadd.f32 0.0, %v3362
        %v3364 = vpop.f32.mrb[0].mxu0
        %v3365 = vpop.f32.mrb[0].mxu0
        %v3366 = vadd.f32 0.0, %v3365
        %v3367 = vpop.f32.mrb[0].mxu0
        %3368 = vmatprep.mubr.bf16.mxu0 0
        %3369 = vmatmul.mubr.bf16.gmra.mrb[0].mxu0 %v3243
        %v3370 = vpop.f32.mrb[0].mxu0
        %v3371 = vadd.f32 0.0, %v3370
        %v3372 = vpop.f32.mrb[0].mxu0
        %v3373 = vpop.f32.mrb[0].mxu0
        %v3374 = vadd.f32 0.0, %v3373
        %v3375 = vpop.f32.mrb[0].mxu0
        %3376 = vmatprep.mubr.bf16.mxu0 0
        %3377 = vmatmul.mubr.bf16.gmra.mrb[0].mxu0 %v3246
        %v3378 = vpop.f32.mrb[0].mxu0
        %v3379 = vadd.f32 0.0, %v3378
        %v3380 = vpop.f32.mrb[0].mxu0
        %v3381 = vpop.f32.mrb[0].mxu0
        %v3382 = vadd.f32 0.0, %v3381
        %v3383 = vpop.f32.mrb[0].mxu0
        %3384 = vmatprep.mubr.bf16.mxu0 0
        %3385 = vmatmul.mubr.bf16.gmra.mrb[0].mxu0 %v3249
        %v3386 = vpop.f32.mrb[0].mxu0
        %v3387 = vadd.f32 0.0, %v3386
        %v3388 = vpop.f32.mrb[0].mxu0
        %v3389 = vpop.f32.mrb[0].mxu0
        %v3390 = vadd.f32 0.0, %v3389
        %v3391 = vpop.f32.mrb[0].mxu0
        %3392 = vmatprep.mubr.bf16.mxu0 0
        %3393 = vmatmul.mubr.bf16.gmra.mrb[0].mxu0 %v3252
        %v3394 = vpop.f32.mrb[0].mxu0
        %v3395 = vadd.f32 0.0, %v3394
        %v3396 = vpop.f32.mrb[0].mxu0
        %v3397 = vpop.f32.mrb[0].mxu0
        %v3398 = vadd.f32 0.0, %v3397
        %v3399 = vpop.f32.mrb[0].mxu0
        %3400 = vmatprep.mubr.bf16.mxu0 0
        %3401 = vmatmul.mubr.bf16.gmra.mrb[0].mxu0 %v3255
        %v3402 = vpop.f32.mrb[0].mxu0
        %v3403 = vadd.f32 0.0, %v3402
        %v3404 = vpop.f32.mrb[0].mxu0
        %v3405 = vpop.f32.mrb[0].mxu0
        %v3406 = vadd.f32 0.0, %v3405
        %v3407 = vpop.f32.mrb[0].mxu0
        %3408 = vmatprep.mubr.bf16.mxu0 0
        %3409 = vmatmul.mubr.bf16.gmra.mrb[0].mxu0 %v3258
        %v3410 = vpop.f32.mrb[0].mxu0
        %v3411 = vadd.f32 0.0, %v3410
        %v3412 = vpop.f32.mrb[0].mxu0
        %v3413 = vpop.f32.mrb[0].mxu0
        %v3414 = vadd.f32 0.0, %v3413
        %v3415 = vpop.f32.mrb[0].mxu0
        %3416 = vmatprep.mubr.bf16.mxu0 0
        %3417 = vmatmul.mubr.bf16.gmra.mrb[0].mxu0 %v3261
        %v3418 = vpop.f32.mrb[0].mxu0
        %v3419 = vadd.f32 0.0, %v3418
        %v3420 = vpop.f32.mrb[0].mxu0
        %v3421 = vpop.f32.mrb[0].mxu0
        %v3422 = vadd.f32 0.0, %v3421
        %v3423 = vpop.f32.mrb[0].mxu0
        %3424 = vmatprep.mubr.bf16.mxu0 0
        %3425 = vmatmul.mubr.bf16.gmra.mrb[0].mxu0 %v3264
        %v3426 = vpop.f32.mrb[0].mxu0
        %v3427 = vadd.f32 0.0, %v3426
        %v3428 = vpop.f32.mrb[0].mxu0
        %v3429 = vpop.f32.mrb[0].mxu0
        %v3430 = vadd.f32 0.0, %v3429
        %v3431 = vpop.f32.mrb[0].mxu0
        %3432 = vmatprep.mubr.bf16.mxu0 0
        %3433 = vmatmul.mubr.bf16.gmra.mrb[0].mxu0 %v3267
        %v3434 = vpop.f32.mrb[0].mxu0
        %v3435 = vadd.f32 0.0, %v3434
        %v3436 = vpop.f32.mrb[0].mxu0
        %v3437 = vpop.f32.mrb[0].mxu0
        %v3438 = vadd.f32 0.0, %v3437
        %v3439 = vpop.f32.mrb[0].mxu0
        %3440 = vmatprep.mubr.bf16.mxu0 0
        %3441 = vmatmul.mubr.bf16.gmra.mrb[0].mxu0 %v3270
        %v3442 = vpop.f32.mrb[0].mxu0
        %v3443 = vadd.f32 0.0, %v3442
        %v3444 = vpop.f32.mrb[0].mxu0
        %v3445 = vpop.f32.mrb[0].mxu0
        %v3446 = vadd.f32 0.0, %v3445
        %v3447 = vpop.f32.mrb[0].mxu0
        %3448 = vdwg.mxu0
        %v3449 = vadd.f32 %v2990, %v3307
        %v3450 = vadd.f32 %v2991, %v3310
        %v3451 = vadd.f32 %v2992, %v3315
        %v3452 = vadd.f32 %v2993, %v3318
        %v3453 = vadd.f32 %v2994, %v3323
        %v3454 = vadd.f32 %v2995, %v3326
        %v3455 = vadd.f32 %v2996, %v3331
        %v3456 = vadd.f32 %v2997, %v3334
        %v3457 = vadd.f32 %v2998, %v3339
        %v3458 = vadd.f32 %v2999, %v3342
        %v3459 = vadd.f32 %v3000, %v3347
        %v3460 = vadd.f32 %v3001, %v3350
        %v3461 = vadd.f32 %v3002, %v3355
        %v3462 = vadd.f32 %v3003, %v3358
        %v3463 = vadd.f32 %v3004, %v3363
        %v3464 = vadd.f32 %v3005, %v3366
        %v3465 = vadd.f32 %v3006, %v3371
        %v3466 = vadd.f32 %v3007, %v3374
        %v3467 = vadd.f32 %v3008, %v3379
        %v3468 = vadd.f32 %v3009, %v3382
        %v3469 = vadd.f32 %v3010, %v3387
        %v3470 = vadd.f32 %v3011, %v3390
        %v3471 = vadd.f32 %v3012, %v3395
        %v3472 = vadd.f32 %v3013, %v3398
        %v3473 = vadd.f32 %v3014, %v3403
        %v3474 = vadd.f32 %v3015, %v3406
        %v3475 = vadd.f32 %v3016, %v3411
        %v3476 = vadd.f32 %v3017, %v3414
        %v3477 = vadd.f32 %v3018, %v3419
        %v3478 = vadd.f32 %v3019, %v3422
        %v3479 = vadd.f32 %v3020, %v3427
        %v3480 = vadd.f32 %v3021, %v3430
        %v3481 = vadd.f32 %v3022, %v3435
        %v3482 = vadd.f32 %v3023, %v3438
        %v3483 = vadd.f32 %v3024, %v3443
        %v3484 = vadd.f32 %v3025, %v3446
        %v3485 = vld [vmem:[%s244 + $0x10] sm:$0x8]
        %s3486 = scalar_lea.vmem %s248, 128
        %v3487 = vld [vmem:[%s3486] sm:$0xf]
        %v3488 = vld [vmem:[%s3486 + $0x4] sm:$0xf]
        %v3489 = vld [vmem:[%s3486 + $0x8] sm:$0xf]
        %v3490 = vld [vmem:[%s3486 + $0xc] sm:$0xf]
        %v3492 = vunpack.c.l.b16 %v3485
        %v3493 = vpack.c.b16 %v2655, %v3492
        %vm3494 = vcmask 1044480
        %v3495 = vrot.slane %v3493, 3
        %v3496 = vrot.slane %v2692, 3
        %v3497 = vsel %vm3494, %v3495, %v3496
        %v3498 = vrot.slane %v2693, 3
        %v3499 = vsel %vm3494, %v3496, %v3498
        %v3500 = vrot.slane %v2694, 3
        %v3501 = vsel %vm3494, %v3498, %v3500
        %v3502 = vrot.slane %v2695, 3
        %v3503 = vsel %vm3494, %v3500, %v3502
        %v3504 = vrot.slane %v2696, 3
        %v3505 = vsel %vm3494, %v3502, %v3504
        %v3506 = vrot.slane %v2697, 3
        %v3507 = vsel %vm3494, %v3504, %v3506
        %v3508 = vrot.slane %v2698, 3
        %v3509 = vsel %vm3494, %v3506, %v3508
        %v3510 = vrot.slane %v2699, 3
        %v3511 = vsel %vm3494, %v3508, %v3510
        %v3512 = vrot.slane %v2700, 3
        %v3513 = vsel %vm3494, %v3510, %v3512
        %v3514 = vrot.slane %v2701, 3
        %v3515 = vsel %vm3494, %v3512, %v3514
        %v3516 = vrot.slane %v2702, 3
        %v3517 = vsel %vm3494, %v3514, %v3516
        %v3518 = vrot.slane %v2703, 3
        %v3519 = vsel %vm3494, %v3516, %v3518
        %v3520 = vrot.slane %v2704, 3
        %v3521 = vsel %vm3494, %v3518, %v3520
        %v3522 = vrot.slane %v2705, 3
        %v3523 = vsel %vm3494, %v3520, %v3522
        %v3524 = vrot.slane %v2706, 3
        %v3525 = vsel %vm3494, %v3522, %v3524
        %v3526 = vrot.slane %v2707, 3
        %v3527 = vsel %vm3494, %v3524, %v3526
        %v3528 = vrot.slane %v2708, 3
        %v3529 = vsel %vm3494, %v3526, %v3528
        %v3530 = vrot.slane %v3034, 3
        %v3531 = vsel %vm3494, %v3528, %v3530
        %v3536 = vunpack.c.l.b16 %v3487
        %v3537 = vunpack.c.l.b16 %v3488
        %v3538 = vunpack.c.l.b16 %v3489
        %v3539 = vunpack.c.l.b16 %v3490
        %v3540 = vpack.c.b16 %v3537, %v3536
        %v3541 = vpack.c.b16 %v3539, %v3538
        %v3545 = vsel %vm556, %v3497, 0
        %v3548 = vsel %vm556, %v3499, 0
        %v3551 = vsel %vm556, %v3501, 0
        %v3554 = vsel %vm556, %v3503, 0
        %v3557 = vsel %vm556, %v3505, 0
        %v3560 = vsel %vm556, %v3507, 0
        %v3563 = vsel %vm556, %v3509, 0
        %v3566 = vsel %vm556, %v3511, 0
        %v3569 = vsel %vm556, %v3513, 0
        %v3572 = vsel %vm556, %v3515, 0
        %v3575 = vsel %vm556, %v3517, 0
        %v3578 = vsel %vm556, %v3519, 0
        %v3581 = vsel %vm556, %v3521, 0
        %v3584 = vsel %vm556, %v3523, 0
        %v3587 = vsel %vm556, %v3525, 0
        %v3590 = vsel %vm556, %v3527, 0
        %v3593 = vsel %vm556, %v3529, 0
        %v3596 = vsel %vm556, %v3531, 0
        %3598 = vmatprep.subr.bf16.mxu0 0
        %3599 = vmatpush1.bf16.msra.mxu0 %v3540
        %3600 = vmatprep.subr.bf16.mxu0 0
        %3601 = vmatpush1.bf16.msra.mxu0 %v3541
        %3602 = vmatprep.subr.bf16.mxu0 0
        %3603 = vmatpush1.bf16.msra.mxu0 0
        %3604 = vmatprep.subr.bf16.mxu0 0
        %3605 = vmatpush1.bf16.msra.mxu0 0
        %3606 = vmatprep.subr.bf16.mxu0 0
        %3607 = vmatpush1.bf16.msra.mxu0 0
        %3608 = vmatprep.subr.bf16.mxu0 0
        %3609 = vmatpush1.bf16.msra.mxu0 0
        %3610 = vmatprep.subr.bf16.mxu0 0
        %3611 = vmatpush1.bf16.msra.mxu0 0
        %3612 = vmatprep.subr.bf16.mxu0 0
        %3613 = vmatpush1.bf16.msra.mxu0 0
        %3614 = vmatprep.subr.bf16.mxu0 0
        %3615 = vmatpush1.bf16.msra.mxu0 0
        %3616 = vmatprep.subr.bf16.mxu0 0
        %3617 = vmatpush1.bf16.msra.mxu0 0
        %3618 = vmatprep.subr.bf16.mxu0 0
        %3619 = vmatpush1.bf16.msra.mxu0 0
        %3620 = vmatprep.subr.bf16.mxu0 0
        %3621 = vmatpush1.bf16.msra.mxu0 0
        %3622 = vmatprep.subr.bf16.mxu0 0
        %3623 = vmatpush1.bf16.msra.mxu0 0
        %3624 = vmatprep.subr.bf16.mxu0 0
        %3625 = vmatpush1.bf16.msra.mxu0 0
        %3626 = vmatprep.subr.bf16.mxu0 0
        %3627 = vmatpush1.bf16.msra.mxu0 0
        %3628 = vmatprep.subr.bf16.mxu0 0
        %3629 = vmatpush1.bf16.msra.mxu0 0
        %3630 = vmatprep.mubr.bf16.mxu0 0
        %3631 = vmatmul.mubr.bf16.gmra.mrb[0].mxu0 %v3545
        %v3632 = vpop.f32.mrb[0].mxu0
        %v3633 = vadd.f32 0.0, %v3632
        %v3634 = vpop.f32.mrb[0].mxu0
        %v3635 = vpop.f32.mrb[0].mxu0
        %v3636 = vadd.f32 0.0, %v3635
        %v3637 = vpop.f32.mrb[0].mxu0
        %3638 = vmatprep.mubr.bf16.mxu0 0
        %3639 = vmatmul.mubr.bf16.gmra.mrb[0].mxu0 %v3548
        %v3640 = vpop.f32.mrb[0].mxu0
        %v3641 = vadd.f32 0.0, %v3640
        %v3642 = vpop.f32.mrb[0].mxu0
        %v3643 = vpop.f32.mrb[0].mxu0
        %v3644 = vadd.f32 0.0, %v3643
        %v3645 = vpop.f32.mrb[0].mxu0
        %3646 = vmatprep.mubr.bf16.mxu0 0
        %3647 = vmatmul.mubr.bf16.gmra.mrb[0].mxu0 %v3551
        %v3648 = vpop.f32.mrb[0].mxu0
        %v3649 = vadd.f32 0.0, %v3648
        %v3650 = vpop.f32.mrb[0].mxu0
        %v3651 = vpop.f32.mrb[0].mxu0
        %v3652 = vadd.f32 0.0, %v3651
        %v3653 = vpop.f32.mrb[0].mxu0
        %3654 = vmatprep.mubr.bf16.mxu0 0
        %3655 = vmatmul.mubr.bf16.gmra.mrb[0].mxu0 %v3554
        %v3656 = vpop.f32.mrb[0].mxu0
        %v3657 = vadd.f32 0.0, %v3656
        %v3658 = vpop.f32.mrb[0].mxu0
        %v3659 = vpop.f32.mrb[0].mxu0
        %v3660 = vadd.f32 0.0, %v3659
        %v3661 = vpop.f32.mrb[0].mxu0
        %3662 = vmatprep.mubr.bf16.mxu0 0
        %3663 = vmatmul.mubr.bf16.gmra.mrb[0].mxu0 %v3557
        %v3664 = vpop.f32.mrb[0].mxu0
        %v3665 = vadd.f32 0.0, %v3664
        %v3666 = vpop.f32.mrb[0].mxu0
        %v3667 = vpop.f32.mrb[0].mxu0
        %v3668 = vadd.f32 0.0, %v3667
        %v3669 = vpop.f32.mrb[0].mxu0
        %3670 = vmatprep.mubr.bf16.mxu0 0
        %3671 = vmatmul.mubr.bf16.gmra.mrb[0].mxu0 %v3560
        %v3672 = vpop.f32.mrb[0].mxu0
        %v3673 = vadd.f32 0.0, %v3672
        %v3674 = vpop.f32.mrb[0].mxu0
        %v3675 = vpop.f32.mrb[0].mxu0
        %v3676 = vadd.f32 0.0, %v3675
        %v3677 = vpop.f32.mrb[0].mxu0
        %3678 = vmatprep.mubr.bf16.mxu0 0
        %3679 = vmatmul.mubr.bf16.gmra.mrb[0].mxu0 %v3563
        %v3680 = vpop.f32.mrb[0].mxu0
        %v3681 = vadd.f32 0.0, %v3680
        %v3682 = vpop.f32.mrb[0].mxu0
        %v3683 = vpop.f32.mrb[0].mxu0
        %v3684 = vadd.f32 0.0, %v3683
        %v3685 = vpop.f32.mrb[0].mxu0
        %3686 = vmatprep.mubr.bf16.mxu0 0
        %3687 = vmatmul.mubr.bf16.gmra.mrb[0].mxu0 %v3566
        %v3688 = vpop.f32.mrb[0].mxu0
        %v3689 = vadd.f32 0.0, %v3688
        %v3690 = vpop.f32.mrb[0].mxu0
        %v3691 = vpop.f32.mrb[0].mxu0
        %v3692 = vadd.f32 0.0, %v3691
        %v3693 = vpop.f32.mrb[0].mxu0
        %3694 = vmatprep.mubr.bf16.mxu0 0
        %3695 = vmatmul.mubr.bf16.gmra.mrb[0].mxu0 %v3569
        %v3696 = vpop.f32.mrb[0].mxu0
        %v3697 = vadd.f32 0.0, %v3696
        %v3698 = vpop.f32.mrb[0].mxu0
        %v3699 = vpop.f32.mrb[0].mxu0
        %v3700 = vadd.f32 0.0, %v3699
        %v3701 = vpop.f32.mrb[0].mxu0
        %3702 = vmatprep.mubr.bf16.mxu0 0
        %3703 = vmatmul.mubr.bf16.gmra.mrb[0].mxu0 %v3572
        %v3704 = vpop.f32.mrb[0].mxu0
        %v3705 = vadd.f32 0.0, %v3704
        %v3706 = vpop.f32.mrb[0].mxu0
        %v3707 = vpop.f32.mrb[0].mxu0
        %v3708 = vadd.f32 0.0, %v3707
        %v3709 = vpop.f32.mrb[0].mxu0
        %3710 = vmatprep.mubr.bf16.mxu0 0
        %3711 = vmatmul.mubr.bf16.gmra.mrb[0].mxu0 %v3575
        %v3712 = vpop.f32.mrb[0].mxu0
        %v3713 = vadd.f32 0.0, %v3712
        %v3714 = vpop.f32.mrb[0].mxu0
        %v3715 = vpop.f32.mrb[0].mxu0
        %v3716 = vadd.f32 0.0, %v3715
        %v3717 = vpop.f32.mrb[0].mxu0
        %3718 = vmatprep.mubr.bf16.mxu0 0
        %3719 = vmatmul.mubr.bf16.gmra.mrb[0].mxu0 %v3578
        %v3720 = vpop.f32.mrb[0].mxu0
        %v3721 = vadd.f32 0.0, %v3720
        %v3722 = vpop.f32.mrb[0].mxu0
        %v3723 = vpop.f32.mrb[0].mxu0
        %v3724 = vadd.f32 0.0, %v3723
        %v3725 = vpop.f32.mrb[0].mxu0
        %3726 = vmatprep.mubr.bf16.mxu0 0
        %3727 = vmatmul.mubr.bf16.gmra.mrb[0].mxu0 %v3581
        %v3728 = vpop.f32.mrb[0].mxu0
        %v3729 = vadd.f32 0.0, %v3728
        %v3730 = vpop.f32.mrb[0].mxu0
        %v3731 = vpop.f32.mrb[0].mxu0
        %v3732 = vadd.f32 0.0, %v3731
        %v3733 = vpop.f32.mrb[0].mxu0
        %3734 = vmatprep.mubr.bf16.mxu0 0
        %3735 = vmatmul.mubr.bf16.gmra.mrb[0].mxu0 %v3584
        %v3736 = vpop.f32.mrb[0].mxu0
        %v3737 = vadd.f32 0.0, %v3736
        %v3738 = vpop.f32.mrb[0].mxu0
        %v3739 = vpop.f32.mrb[0].mxu0
        %v3740 = vadd.f32 0.0, %v3739
        %v3741 = vpop.f32.mrb[0].mxu0
        %3742 = vmatprep.mubr.bf16.mxu0 0
        %3743 = vmatmul.mubr.bf16.gmra.mrb[0].mxu0 %v3587
        %v3744 = vpop.f32.mrb[0].mxu0
        %v3745 = vadd.f32 0.0, %v3744
        %v3746 = vpop.f32.mrb[0].mxu0
        %v3747 = vpop.f32.mrb[0].mxu0
        %v3748 = vadd.f32 0.0, %v3747
        %v3749 = vpop.f32.mrb[0].mxu0
        %3750 = vmatprep.mubr.bf16.mxu0 0
        %3751 = vmatmul.mubr.bf16.gmra.mrb[0].mxu0 %v3590
        %v3752 = vpop.f32.mrb[0].mxu0
        %v3753 = vadd.f32 0.0, %v3752
        %v3754 = vpop.f32.mrb[0].mxu0
        %v3755 = vpop.f32.mrb[0].mxu0
        %v3756 = vadd.f32 0.0, %v3755
        %v3757 = vpop.f32.mrb[0].mxu0
        %3758 = vmatprep.mubr.bf16.mxu0 0
        %3759 = vmatmul.mubr.bf16.gmra.mrb[0].mxu0 %v3593
        %v3760 = vpop.f32.mrb[0].mxu0
        %v3761 = vadd.f32 0.0, %v3760
        %v3762 = vpop.f32.mrb[0].mxu0
        %v3763 = vpop.f32.mrb[0].mxu0
        %v3764 = vadd.f32 0.0, %v3763
        %v3765 = vpop.f32.mrb[0].mxu0
        %3766 = vmatprep.mubr.bf16.mxu0 0
        %3767 = vmatmul.mubr.bf16.gmra.mrb[0].mxu0 %v3596
        %v3768 = vpop.f32.mrb[0].mxu0
        %v3769 = vadd.f32 0.0, %v3768
        %v3770 = vpop.f32.mrb[0].mxu0
        %v3771 = vpop.f32.mrb[0].mxu0
        %v3772 = vadd.f32 0.0, %v3771
        %v3773 = vpop.f32.mrb[0].mxu0
        %3774 = vdwg.mxu0
        %v3775 = vadd.f32 %v3449, %v3633
        %v3776 = vadd.f32 %v3450, %v3636
        %v3777 = vadd.f32 %v3451, %v3641
        %v3778 = vadd.f32 %v3452, %v3644
        %v3779 = vadd.f32 %v3453, %v3649
        %v3780 = vadd.f32 %v3454, %v3652
        %v3781 = vadd.f32 %v3455, %v3657
        %v3782 = vadd.f32 %v3456, %v3660
        %v3783 = vadd.f32 %v3457, %v3665
        %v3784 = vadd.f32 %v3458, %v3668
        %v3785 = vadd.f32 %v3459, %v3673
        %v3786 = vadd.f32 %v3460, %v3676
        %v3787 = vadd.f32 %v3461, %v3681
        %v3788 = vadd.f32 %v3462, %v3684
        %v3789 = vadd.f32 %v3463, %v3689
        %v3790 = vadd.f32 %v3464, %v3692
        %v3791 = vadd.f32 %v3465, %v3697
        %v3792 = vadd.f32 %v3466, %v3700
        %v3793 = vadd.f32 %v3467, %v3705
        %v3794 = vadd.f32 %v3468, %v3708
        %v3795 = vadd.f32 %v3469, %v3713
        %v3796 = vadd.f32 %v3470, %v3716
        %v3797 = vadd.f32 %v3471, %v3721
        %v3798 = vadd.f32 %v3472, %v3724
        %v3799 = vadd.f32 %v3473, %v3729
        %v3800 = vadd.f32 %v3474, %v3732
        %v3801 = vadd.f32 %v3475, %v3737
        %v3802 = vadd.f32 %v3476, %v3740
        %v3803 = vadd.f32 %v3477, %v3745
        %v3804 = vadd.f32 %v3478, %v3748
        %v3805 = vadd.f32 %v3479, %v3753
        %v3806 = vadd.f32 %v3480, %v3756
        %v3807 = vadd.f32 %v3481, %v3761
        %v3808 = vadd.f32 %v3482, %v3764
        %v3809 = vadd.f32 %v3483, %v3769
        %v3810 = vadd.f32 %v3484, %v3772
        %v3811 = vld [vmem:[%s251] sm:$0x1]
        %v3813 = vlaneseq
        %v3814 = vshrl.u32 %v3813, 7
        %v3815 = vsub.s32 0, %v3814
        %v3816 = vrot.slane %v3811, %v3815
        %v3818 = vmul.f32 %v3775, %v3816
        %v3819 = vmul.f32 %v3776, %v3816
        %v3820 = vmul.f32 %v3777, %v3816
        %v3821 = vmul.f32 %v3778, %v3816
        %v3822 = vmul.f32 %v3779, %v3816
        %v3823 = vmul.f32 %v3780, %v3816
        %v3824 = vmul.f32 %v3781, %v3816
        %v3825 = vmul.f32 %v3782, %v3816
        %v3826 = vmul.f32 %v3783, %v3816
        %v3827 = vmul.f32 %v3784, %v3816
        %v3828 = vmul.f32 %v3785, %v3816
        %v3829 = vmul.f32 %v3786, %v3816
        %v3830 = vmul.f32 %v3787, %v3816
        %v3831 = vmul.f32 %v3788, %v3816
        %v3832 = vmul.f32 %v3789, %v3816
        %v3833 = vmul.f32 %v3790, %v3816
        %v3834 = vmul.f32 %v3791, %v3816
        %v3835 = vmul.f32 %v3792, %v3816
        %v3836 = vmul.f32 %v3793, %v3816
        %v3837 = vmul.f32 %v3794, %v3816
        %v3838 = vmul.f32 %v3795, %v3816
        %v3839 = vmul.f32 %v3796, %v3816
        %v3840 = vmul.f32 %v3797, %v3816
        %v3841 = vmul.f32 %v3798, %v3816
        %v3842 = vmul.f32 %v3799, %v3816
        %v3843 = vmul.f32 %v3800, %v3816
        %v3844 = vmul.f32 %v3801, %v3816
        %v3845 = vmul.f32 %v3802, %v3816
        %v3846 = vmul.f32 %v3803, %v3816
        %v3847 = vmul.f32 %v3804, %v3816
        %v3848 = vmul.f32 %v3805, %v3816
        %v3849 = vmul.f32 %v3806, %v3816
        %v3850 = vmul.f32 %v3807, %v3816
        %v3851 = vmul.f32 %v3808, %v3816
        %v3852 = vmul.f32 %v3809, %v3816
        %v3853 = vmul.f32 %v3810, %v3816
        %v3854 = vld [vmem:[%s254] sm:$0x1]
        %v3856 = vlaneseq
        %v3857 = vshrl.u32 %v3856, 7
        %v3858 = vsub.s32 0, %v3857
        %v3859 = vrot.slane %v3854, %v3858
        %v3861 = vadd.f32 %v3818, %v3859
        %v3862 = vadd.f32 %v3819, %v3859
        %v3863 = vadd.f32 %v3820, %v3859
        %v3864 = vadd.f32 %v3821, %v3859
        %v3865 = vadd.f32 %v3822, %v3859
        %v3866 = vadd.f32 %v3823, %v3859
        %v3867 = vadd.f32 %v3824, %v3859
        %v3868 = vadd.f32 %v3825, %v3859
        %v3869 = vadd.f32 %v3826, %v3859
        %v3870 = vadd.f32 %v3827, %v3859
        %v3871 = vadd.f32 %v3828, %v3859
        %v3872 = vadd.f32 %v3829, %v3859
        %v3873 = vadd.f32 %v3830, %v3859
        %v3874 = vadd.f32 %v3831, %v3859
        %v3875 = vadd.f32 %v3832, %v3859
        %v3876 = vadd.f32 %v3833, %v3859
        %v3877 = vadd.f32 %v3834, %v3859
        %v3878 = vadd.f32 %v3835, %v3859
        %v3879 = vadd.f32 %v3836, %v3859
        %v3880 = vadd.f32 %v3837, %v3859
        %v3881 = vadd.f32 %v3838, %v3859
        %v3882 = vadd.f32 %v3839, %v3859
        %v3883 = vadd.f32 %v3840, %v3859
        %v3884 = vadd.f32 %v3841, %v3859
        %v3885 = vadd.f32 %v3842, %v3859
        %v3886 = vadd.f32 %v3843, %v3859
        %v3887 = vadd.f32 %v3844, %v3859
        %v3888 = vadd.f32 %v3845, %v3859
        %v3889 = vadd.f32 %v3846, %v3859
        %v3890 = vadd.f32 %v3847, %v3859
        %v3891 = vadd.f32 %v3848, %v3859
        %v3892 = vadd.f32 %v3849, %v3859
        %v3893 = vadd.f32 %v3850, %v3859
        %v3894 = vadd.f32 %v3851, %v3859
        %v3895 = vadd.f32 %v3852, %v3859
        %v3896 = vadd.f32 %v3853, %v3859
        %vm3897 = vcmp.gt.f32.partialorder %v3861, 0.0
        %vm3898 = vcmp.gt.f32.partialorder %v3862, 0.0
        %vm3899 = vcmp.gt.f32.partialorder %v3863, 0.0
        %vm3900 = vcmp.gt.f32.partialorder %v3864, 0.0
        %vm3901 = vcmp.gt.f32.partialorder %v3865, 0.0
        %vm3902 = vcmp.gt.f32.partialorder %v3866, 0.0
        %vm3903 = vcmp.gt.f32.partialorder %v3867, 0.0
        %vm3904 = vcmp.gt.f32.partialorder %v3868, 0.0
        %vm3905 = vcmp.gt.f32.partialorder %v3869, 0.0
        %vm3906 = vcmp.gt.f32.partialorder %v3870, 0.0
        %vm3907 = vcmp.gt.f32.partialorder %v3871, 0.0
        %vm3908 = vcmp.gt.f32.partialorder %v3872, 0.0
        %vm3909 = vcmp.gt.f32.partialorder %v3873, 0.0
        %vm3910 = vcmp.gt.f32.partialorder %v3874, 0.0
        %vm3911 = vcmp.gt.f32.partialorder %v3875, 0.0
        %vm3912 = vcmp.gt.f32.partialorder %v3876, 0.0
        %vm3913 = vcmp.gt.f32.partialorder %v3877, 0.0
        %vm3914 = vcmp.gt.f32.partialorder %v3878, 0.0
        %vm3915 = vcmp.gt.f32.partialorder %v3879, 0.0
        %vm3916 = vcmp.gt.f32.partialorder %v3880, 0.0
        %vm3917 = vcmp.gt.f32.partialorder %v3881, 0.0
        %vm3918 = vcmp.gt.f32.partialorder %v3882, 0.0
        %vm3919 = vcmp.gt.f32.partialorder %v3883, 0.0
        %vm3920 = vcmp.gt.f32.partialorder %v3884, 0.0
        %vm3921 = vcmp.gt.f32.partialorder %v3885, 0.0
        %vm3922 = vcmp.gt.f32.partialorder %v3886, 0.0
        %vm3923 = vcmp.gt.f32.partialorder %v3887, 0.0
        %vm3924 = vcmp.gt.f32.partialorder %v3888, 0.0
        %vm3925 = vcmp.gt.f32.partialorder %v3889, 0.0
        %vm3926 = vcmp.gt.f32.partialorder %v3890, 0.0
        %vm3927 = vcmp.gt.f32.partialorder %v3891, 0.0
        %vm3928 = vcmp.gt.f32.partialorder %v3892, 0.0
        %vm3929 = vcmp.gt.f32.partialorder %v3893, 0.0
        %vm3930 = vcmp.gt.f32.partialorder %v3894, 0.0
        %vm3931 = vcmp.gt.f32.partialorder %v3895, 0.0
        %vm3932 = vcmp.gt.f32.partialorder %v3896, 0.0
        %v3933 = vmul.f32 %v3861, 0.01
        %v3934 = vmul.f32 %v3862, 0.01
        %v3935 = vmul.f32 %v3863, 0.01
        %v3936 = vmul.f32 %v3864, 0.01
        %v3937 = vmul.f32 %v3865, 0.01
        %v3938 = vmul.f32 %v3866, 0.01
        %v3939 = vmul.f32 %v3867, 0.01
        %v3940 = vmul.f32 %v3868, 0.01
        %v3941 = vmul.f32 %v3869, 0.01
        %v3942 = vmul.f32 %v3870, 0.01
        %v3943 = vmul.f32 %v3871, 0.01
        %v3944 = vmul.f32 %v3872, 0.01
        %v3945 = vmul.f32 %v3873, 0.01
        %v3946 = vmul.f32 %v3874, 0.01
        %v3947 = vmul.f32 %v3875, 0.01
        %v3948 = vmul.f32 %v3876, 0.01
        %v3949 = vmul.f32 %v3877, 0.01
        %v3950 = vmul.f32 %v3878, 0.01
        %v3951 = vmul.f32 %v3879, 0.01
        %v3952 = vmul.f32 %v3880, 0.01
        %v3953 = vmul.f32 %v3881, 0.01
        %v3954 = vmul.f32 %v3882, 0.01
        %v3955 = vmul.f32 %v3883, 0.01
        %v3956 = vmul.f32 %v3884, 0.01
        %v3957 = vmul.f32 %v3885, 0.01
        %v3958 = vmul.f32 %v3886, 0.01
        %v3959 = vmul.f32 %v3887, 0.01
        %v3960 = vmul.f32 %v3888, 0.01
        %v3961 = vmul.f32 %v3889, 0.01
        %v3962 = vmul.f32 %v3890, 0.01
        %v3963 = vmul.f32 %v3891, 0.01
        %v3964 = vmul.f32 %v3892, 0.01
        %v3965 = vmul.f32 %v3893, 0.01
        %v3966 = vmul.f32 %v3894, 0.01
        %v3967 = vmul.f32 %v3895, 0.01
        %v3968 = vmul.f32 %v3896, 0.01
        %v3969 = vsel %vm3897, %v3861, %v3933
        %v3970 = vsel %vm3898, %v3862, %v3934
        %v3971 = vsel %vm3899, %v3863, %v3935
        %v3972 = vsel %vm3900, %v3864, %v3936
        %v3973 = vsel %vm3901, %v3865, %v3937
        %v3974 = vsel %vm3902, %v3866, %v3938
        %v3975 = vsel %vm3903, %v3867, %v3939
        %v3976 = vsel %vm3904, %v3868, %v3940
        %v3977 = vsel %vm3905, %v3869, %v3941
        %v3978 = vsel %vm3906, %v3870, %v3942
        %v3979 = vsel %vm3907, %v3871, %v3943
        %v3980 = vsel %vm3908, %v3872, %v3944
        %v3981 = vsel %vm3909, %v3873, %v3945
        %v3982 = vsel %vm3910, %v3874, %v3946
        %v3983 = vsel %vm3911, %v3875, %v3947
        %v3984 = vsel %vm3912, %v3876, %v3948
        %v3985 = vsel %vm3913, %v3877, %v3949
        %v3986 = vsel %vm3914, %v3878, %v3950
        %v3987 = vsel %vm3915, %v3879, %v3951
        %v3988 = vsel %vm3916, %v3880, %v3952
        %v3989 = vsel %vm3917, %v3881, %v3953
        %v3990 = vsel %vm3918, %v3882, %v3954
        %v3991 = vsel %vm3919, %v3883, %v3955
        %v3992 = vsel %vm3920, %v3884, %v3956
        %v3993 = vsel %vm3921, %v3885, %v3957
        %v3994 = vsel %vm3922, %v3886, %v3958
        %v3995 = vsel %vm3923, %v3887, %v3959
        %v3996 = vsel %vm3924, %v3888, %v3960
        %v3997 = vsel %vm3925, %v3889, %v3961
        %v3998 = vsel %vm3926, %v3890, %v3962
        %v3999 = vsel %vm3927, %v3891, %v3963
        %v4000 = vsel %vm3928, %v3892, %v3964
        %v4001 = vsel %vm3929, %v3893, %v3965
        %v4002 = vsel %vm3930, %v3894, %v3966
        %v4003 = vsel %vm3931, %v3895, %v3967
        %v4004 = vsel %vm3932, %v3896, %v3968
        %4005 = vst [vmem:[%s239] sm:$0xff] %v3969
        %4006 = vst [vmem:[%s239 + $0x8] sm:$0xff] %v3970
        %4007 = vst [vmem:[%s239 + $0x10] sm:$0xff] %v3971
        %4008 = vst [vmem:[%s239 + $0x18] sm:$0xff] %v3972
        %4009 = vst [vmem:[%s239 + $0x20] sm:$0xff] %v3973
        %4010 = vst [vmem:[%s239 + $0x28] sm:$0xff] %v3974
        %4011 = vst [vmem:[%s239 + $0x30] sm:$0xff] %v3975
        %4012 = vst [vmem:[%s239 + $0x38] sm:$0xff] %v3976
        %4013 = vst [vmem:[%s239 + $0x40] sm:$0xff] %v3977
        %4014 = vst [vmem:[%s239 + $0x48] sm:$0xff] %v3978
        %4015 = vst [vmem:[%s239 + $0x50] sm:$0xff] %v3979
        %4016 = vst [vmem:[%s239 + $0x58] sm:$0xff] %v3980
        %4017 = vst [vmem:[%s239 + $0x60] sm:$0xff] %v3981
        %4018 = vst [vmem:[%s239 + $0x68] sm:$0xff] %v3982
        %4019 = vst [vmem:[%s239 + $0x70] sm:$0xff] %v3983
        %4020 = vst [vmem:[%s239 + $0x78] sm:$0xff] %v3984
        %4021 = vst [vmem:[%s239 + $0x80] sm:$0xff] %v3985
        %4022 = vst [vmem:[%s239 + $0x88] sm:$0xff] %v3986
        %4023 = vst [vmem:[%s239 + $0x90] sm:$0xff] %v3987
        %4024 = vst [vmem:[%s239 + $0x98] sm:$0xff] %v3988
        %4025 = vst [vmem:[%s239 + $0xa0] sm:$0xff] %v3989
        %4026 = vst [vmem:[%s239 + $0xa8] sm:$0xff] %v3990
        %4027 = vst [vmem:[%s239 + $0xb0] sm:$0xff] %v3991
        %4028 = vst [vmem:[%s239 + $0xb8] sm:$0xff] %v3992
        %4029 = vst [vmem:[%s239 + $0xc0] sm:$0xff] %v3993
        %4030 = vst [vmem:[%s239 + $0xc8] sm:$0xff] %v3994
        %4031 = vst [vmem:[%s239 + $0xd0] sm:$0xff] %v3995
        %4032 = vst [vmem:[%s239 + $0xd8] sm:$0xff] %v3996
        %4033 = vst [vmem:[%s239 + $0xe0] sm:$0xff] %v3997
        %4034 = vst [vmem:[%s239 + $0xe8] sm:$0xff] %v3998
        %4035 = vst [vmem:[%s239 + $0xf0] sm:$0xff] %v3999
        %4036 = vst [vmem:[%s239 + $0xf8] sm:$0xff] %v4000
        %4037 = vst [vmem:[%s239 + $0x100] sm:$0xff] %v4001
        %4038 = vst [vmem:[%s239 + $0x108] sm:$0xff] %v4002
        %4039 = vst [vmem:[%s239 + $0x110] sm:$0xff] %v4003
        %4040 = vst [vmem:[%s239 + $0x118] sm:$0xff] %v4004
        %s4041 = sand.u32 %s144, 1
        %s4042 = scalar_lea.sflag [#allocation3], %s4041
        %s4043 = sand.u32 %s144, 1
        %s4044 = smul.addr %s4043, 288
        %s4045 = scalar_lea.vmem [#allocation2], %s4044
        // Predicated region
        $region37: #{tpu_custom_call.1} parent=35 // pred_check
          %p4046 = pneg %p154
        $region38: #{tpu_custom_call.1} parent=35 // pred_check_branch
          %4048 = sbr.rel (%p4046) target = $region40
        $region39: #{tpu_custom_call.1} parent=35 // pred_region
          %s4050 = ssub.s32 4608, 4608
          %4051 = vsyncadd %s4042, %s4050
          %s4052 = smul.addr %s22, 36
          %s4053 = sadd.s32 %s23, %s4052
          %s4054 = smul.addr %s4053, 128
          %s4055 = scalar_lea.hbm %s4, %s4054
          %s4056 = sshll.u32 %s4045, 4
          %s4057 = int_to_ptr.vmem [resolvable:$true] %s4056
          %4062 = dma.vmem_to_hbm [thread:$0]  %s4057, 4608, %s4055, %s4042, 128, 128, 8
        $region40: #{tpu_custom_call.1} parent=35 // pred_fallthru
          _
      $region36: #{tpu_custom_call.1} parent=5 // pred_fallthru
        _
      %p4063 = scmp.le.s32.totalorder 2, %s13
      // Predicated region
      $region41: #{tpu_custom_call.1} parent=5 // pred_check
        %p4064 = pneg %p4063
      $region42: #{tpu_custom_call.1} parent=5 // pred_check_branch
        %4066 = sbr.rel (%p4064) target = $region44
      $region43: #{tpu_custom_call.1} parent=5 // pred_region
        %s4067 = ssub.s32 %s13, 2
        // Predicated region
        $region45: #{tpu_custom_call.1} parent=43 // pred_check
          %p4068 = pneg %p160
        $region46: #{tpu_custom_call.1} parent=43 // pred_check_branch
          %4070 = sbr.rel (%p4068) target = $region48
        $region47: #{tpu_custom_call.1} parent=43 // pred_region
          %s4071 = sand.u32 %s145, 1
          %s4072 = scalar_lea.sflag [#allocation3], %s4071
          %s4073 = sand.u32 %s145, 1
          %s4074 = smul.addr %s4073, 288
          %s4075 = scalar_lea.vmem [#allocation2], %s4074
          %4076 = dma.done %s4072, 4608
        $region48: #{tpu_custom_call.1} parent=43 // pred_fallthru
          _
      $region44: #{tpu_custom_call.1} parent=5 // pred_fallthru
        _
    $region6: #{tpu_custom_call.1} parent=1 // loop_footer
      %s17 = sadd.s32 1, %s13
    $region7: #{tpu_custom_call.1} parent=1 // loop_footer_branch
      %12 = sbr.rel target = $region3
    $region8: #{tpu_custom_call.1} parent=1 // loop_exit
      _
    %4077 = vsyncpa [#allocation3], 1
    %s4078 = scalar_lea.sflag [#allocation3], 1
    %4079 = vsyncpa %s4078, 1

</llo_original>
